<compile_context>
chip_gen: v7x
topology: tpu7x:2x2x1
jax: 0.10.0
libtpu: 0.0.40
codegen_flags: <defaults>
</compile_context>

<pallas_src>
import functools

import jax
import jax.numpy as jnp
from jax import lax
from jax.experimental import pallas as pl
from jax.experimental.pallas import tpu as pltpu


LANE = 128  # padded channel width (v5e/v6e/v7x: keep at 128, not 256)


def _round_up(v, m):
    return ((v + m - 1) // m) * m


# ------------------------------ Fused kernel --------------------------------


def _fused_stage_kernel(x_ref, w_in_ref, b_in_ref, wd_ref, bd_ref,
                        w1_ref, b1_ref, w_out_ref, b_out_ref, o_ref, h_ref,
                        *, dilations, t_valid):
    """One batch element: (Cp, Tp) activation resident in VMEM scratch h_ref.

    x_ref:    (1, Cp, Tp) bf16        w_in_ref:  (Cp, Cp) bf16   b_in_ref: (Cp, 1) f32
    wd_ref:   (L, 3Cp, Cp) bf16       bd_ref:    (L, Cp, 1) f32
    w1_ref:   (L, Cp, Cp) bf16        b1_ref:    (L, Cp, 1) f32
    w_out_ref:(Cp, Cp) bf16           b_out_ref: (Cp, 1) f32
    o_ref:    (1, Cp, Tp) f32         h_ref:     (Cp, Tp) f32 VMEM scratch
    """
    cp, tp = h_ref.shape
    x = x_ref[0]                      # (Cp, Tp) bf16
    cdt = x.dtype

    # Input 1x1 conv (dim -> F), f32 accumulation.
    h = jnp.dot(w_in_ref[...], x, preferred_element_type=jnp.float32)
    h_ref[...] = h + b_in_ref[...]

    # Time-index iota, hoisted out of the layer loop (lane axis = time).
    t_idx = lax.broadcasted_iota(jnp.int32, (cp, tp), 1)

    # Dilated residual layers (static unrolled loop; dilations are compile-time).
    for l, d in enumerate(dilations):
        hb = h_ref[...].astype(cdt)
        # One MXU push against the Cout-stacked (3Cp, Cp) weight.
        y = jnp.dot(wd_ref[l], hb, preferred_element_type=jnp.float32)  # (3Cp, Tp)
        y_prev = y[0 * cp:1 * cp, :]
        y_mid = y[1 * cp:2 * cp, :]
        y_next = y[2 * cp:3 * cp, :]

        # out[t] += y_prev[t-d] (zero for t<d) + y_next[t+d] (zero for t+d>=T).
        # Rolls go to the XLU; masks to the VPU select slot. Masks also make
        # d >= t_valid degrade gracefully to all-zero contributions.
        rolled_prev = pltpu.roll(y_prev, shift=d % tp, axis=1)
        rolled_next = pltpu.roll(y_next, shift=(-d) % tp, axis=1)

        acc = y_mid + bd_ref[l]
        acc = acc + jnp.where(t_idx >= d, rolled_prev, 0.0)
        acc = acc + jnp.where(t_idx < (t_valid - d), rolled_next, 0.0)
        a = jnp.maximum(acc, 0.0)                                   # ReLU (f32)

        out = jnp.dot(w1_ref[l], a.astype(cdt),
                      preferred_element_type=jnp.float32) + b1_ref[l]
        # Dropout: identity (eval mode). Residual accumulation stays f32.
        h_ref[...] = h_ref[...] + out

    # Output 1x1 conv (F -> classes), emitted directly in (classes, T) layout.
    logits = jnp.dot(w_out_ref[...], h_ref[...].astype(cdt),
                     preferred_element_type=jnp.float32) + b_out_ref[...]
    o_ref[0] = logits.astype(o_ref.dtype)


# --------------------------- Parameter handling -----------------------------


def init_params(key, num_layers, num_f_maps, dim, num_classes):
    """Deterministic parameters in PyTorch Conv1d layout (Cout, Cin, K)."""
    def uniform(key, shape, fan_in):
        bound = 1.0 / jnp.sqrt(jnp.float32(fan_in))
        return jax.random.uniform(key, shape, jnp.float32, -bound, bound)

    keys = jax.random.split(key, 4 + 4 * num_layers)
    params = {
        "in_w": uniform(keys[0], (num_f_maps, dim, 1), dim),
        "in_b": uniform(keys[1], (num_f_maps,), dim),
        "out_w": uniform(keys[2], (num_classes, num_f_maps, 1), num_f_maps),
        "out_b": uniform(keys[3], (num_classes,), num_f_maps),
        "layers": [],
    }
    for i in range(num_layers):
        k = keys[4 + 4 * i: 8 + 4 * i]
        params["layers"].append({
            "wd": uniform(k[0], (num_f_maps, num_f_maps, 3), 3 * num_f_maps),
            "bd": uniform(k[1], (num_f_maps,), 3 * num_f_maps),
            "w1": uniform(k[2], (num_f_maps, num_f_maps, 1), num_f_maps),
            "b1": uniform(k[3], (num_f_maps,), num_f_maps),
        })
    return params


def prepare_params(params, *, lane=LANE, compute_dtype=jnp.bfloat16):
    """One-time weight prep: pad channels to `lane`, stack per layer, cast bf16."""
    f_maps, dim = params["in_w"].shape[0], params["in_w"].shape[1]
    num_classes = params["out_w"].shape[0]
    assert max(f_maps, dim, num_classes) <= lane, "pad width too small"

    def pad_w(w):                      # (r, c) -> (lane, lane), compute dtype
        r, c = w.shape
        return jnp.zeros((lane, lane), compute_dtype).at[:r, :c].set(
            w.astype(compute_dtype))

    def pad_b(b):                      # (r,) -> (lane, 1), f32 (broadcast over T)
        return jnp.zeros((lane, 1), jnp.float32).at[:b.shape[0], 0].set(
            b.astype(jnp.float32))

    wd_l, bd_l, w1_l, b1_l = [], [], [], []
    for lp in params["layers"]:
        wd = lp["wd"]                  # (F, F, 3): taps k=0(prev),1(center),2(next)
        wd_l.append(jnp.concatenate([pad_w(wd[:, :, k]) for k in range(3)], axis=0))
        bd_l.append(pad_b(lp["bd"]))
        w1_l.append(pad_w(lp["w1"][:, :, 0]))
        b1_l.append(pad_b(lp["b1"]))

    return {
        "w_in": pad_w(params["in_w"][:, :, 0]), "b_in": pad_b(params["in_b"]),
        "wd": jnp.stack(wd_l), "bd": jnp.stack(bd_l),
        "w1": jnp.stack(w1_l), "b1": jnp.stack(b1_l),
        "w_out": pad_w(params["out_w"][:, :, 0]), "b_out": pad_b(params["out_b"]),
    }


# ------------------------------ Forward wrapper ------------------------------


def _vmem_budget_bytes(cp, tp, n_layers):
    f32, bf16 = 4, 2
    act = cp * tp * f32                                   # resident activation
    io = 2 * cp * tp * (bf16 + f32)                       # double-buffered in/out
    w = 2 * (2 + 4 * n_layers) * cp * cp * bf16 + (2 + 2 * n_layers) * cp * f32
    tmp = 8 * cp * tp * f32                               # intermediates headroom
    est = 2 * (act + io + w + tmp)
    return int(min(96 * 2 ** 20, max(32 * 2 ** 20, est)))


def single_stage_forward(x_nct, prepped, *, dilations, num_classes,
                         lane=LANE, compute_dtype=jnp.bfloat16):
    """Fused Pallas forward. x_nct: (N, dim, T) -> (N, num_classes, T)."""
    n, dim, t = x_nct.shape
    cp = lane
    tp = _round_up(max(t, 128), 128)        # lane-dense time axis
    n_layers = len(dilations)

    # Pad input once: channels -> cp (zeros), time -> tp (zeros), cast bf16.
    x = jnp.zeros((n, cp, tp), compute_dtype).at[:, :dim, :t].set(
        x_nct.astype(compute_dtype))

    kern = functools.partial(_fused_stage_kernel,
                             dilations=tuple(dilations), t_valid=t)

    out_padded = pl.pallas_call(
        kern,
        out_shape=jax.ShapeDtypeStruct((n, cp, tp), jnp.float32),
        grid=(n,),
        in_specs=[
            pl.BlockSpec((1, cp, tp), lambda i: (i, 0, 0)),        # x
            pl.BlockSpec((cp, cp), lambda i: (0, 0)),              # w_in
            pl.BlockSpec((cp, 1), lambda i: (0, 0)),               # b_in
            pl.BlockSpec((n_layers, 3 * cp, cp), lambda i: (0, 0, 0)),  # wd (stacked)
            pl.BlockSpec((n_layers, cp, 1), lambda i: (0, 0, 0)),  # bd
            pl.BlockSpec((n_layers, cp, cp), lambda i: (0, 0, 0)),  # w1
            pl.BlockSpec((n_layers, cp, 1), lambda i: (0, 0, 0)),  # b1
            pl.BlockSpec((cp, cp), lambda i: (0, 0)),              # w_out
            pl.BlockSpec((cp, 1), lambda i: (0, 0)),               # b_out
        ],
        out_specs=pl.BlockSpec((1, cp, tp), lambda i: (i, 0, 0)),
        scratch_shapes=[pltpu.VMEM((cp, tp), jnp.float32)],        # resident activation
        compiler_params=pltpu.CompilerParams(
            dimension_semantics=("parallel",),
            vmem_limit_bytes=_vmem_budget_bytes(cp, tp, n_layers),
        ),
    )(x, prepped["w_in"], prepped["b_in"], prepped["wd"], prepped["bd"],
      prepped["w1"], prepped["b1"], prepped["w_out"], prepped["b_out"])

    # Output comes out already in (N, classes, T) layout; drop the padding.
    return out_padded[:, :num_classes, :t]


# ----------------------- Pure-JAX reference (NCW layout) ---------------------


def reference_forward(x_nct, params):
    def conv1d(x, w, b, dilation=1, padding=0):
        y = lax.conv_general_dilated(
            x, w, window_strides=(1,), padding=[(padding, padding)],
            rhs_dilation=(dilation,),
            dimension_numbers=("NCH", "OIH", "NCH"),
            precision=lax.Precision.HIGHEST)
        return y + b[None, :, None]

    h = conv1d(x_nct, params["in_w"], params["in_b"])
    for i, lp in enumerate(params["layers"]):
        d = 2 ** i
        out = jax.nn.relu(conv1d(h, lp["wd"], lp["bd"], dilation=d, padding=d))
        out = conv1d(out, lp["w1"], lp["b1"])
        h = h + out                                   # dropout = identity (eval)
    return conv1d(h, params["out_w"], params["out_b"])


# ----------------------------------- main ------------------------------------


if __name__ == "__main__":
    num_layers, num_f_maps, dim, num_classes = 4, 32, 16, 8
    N, T = 2, 100

    key = jax.random.PRNGKey(0)
    kx, kp = jax.random.split(key)
    x = jax.random.normal(kx, (N, dim, T), jnp.float32)      # PyTorch (N, dim, T)
    params = init_params(kp, num_layers, num_f_maps, dim, num_classes)

    prepped = prepare_params(params)                         # hoisted one-time prep
    dilations = tuple(2 ** i for i in range(num_layers))
    fwd = jax.jit(functools.partial(single_stage_forward,
                                    dilations=dilations, num_classes=num_classes))

    out = jax.block_until_ready(fwd(x, prepped))
    ref = jax.block_until_ready(reference_forward(x, params))

    assert out.shape == (N, num_classes, T), out.shape
    # bf16 matmul streams (f32 accumulation / residual) vs f32 reference.
    max_err = float(jnp.max(jnp.abs(out - ref)))
    assert jnp.allclose(out, ref, atol=3e-2, rtol=3e-2), max_err

    print("KERNEL_OK")
</pallas_src>

<mosaic_0001>
module attributes {stable_mosaic.version = 11 : i64} {
  func.func @_fused_stage_kernel(%arg0: i32, %arg1: memref<1x128x128xbf16, #tpu.memory_space<vmem>>, %arg2: memref<128x128xbf16, #tpu.memory_space<vmem>>, %arg3: memref<128x1xf32, #tpu.memory_space<vmem>>, %arg4: memref<4x384x128xbf16, #tpu.memory_space<vmem>>, %arg5: memref<4x128x1xf32, #tpu.memory_space<vmem>>, %arg6: memref<4x128x128xbf16, #tpu.memory_space<vmem>>, %arg7: memref<4x128x1xf32, #tpu.memory_space<vmem>>, %arg8: memref<128x128xbf16, #tpu.memory_space<vmem>>, %arg9: memref<128x1xf32, #tpu.memory_space<vmem>>, %arg10: memref<1x128x128xf32, #tpu.memory_space<vmem>>, %arg11: memref<128x128xf32, #tpu.memory_space<vmem>>) attributes {dimension_semantics = [#tpu.dimension_semantics<parallel>], iteration_bounds = array<i64: 2>, scalar_prefetch = 0 : i64, scratch_operands = 1 : i64, tpu.core_type = #tpu.core_type<tc>, window_params = [{transform_indices = @transform_0, window_bounds = array<i64: 1, 128, 128>}, {pipeline_mode = #tpu.pipeline_mode<synchronous>, transform_indices = @transform_1, window_bounds = array<i64: 128, 128>}, {pipeline_mode = #tpu.pipeline_mode<synchronous>, transform_indices = @transform_2, window_bounds = array<i64: 128, 1>}, {pipeline_mode = #tpu.pipeline_mode<synchronous>, transform_indices = @transform_3, window_bounds = array<i64: 4, 384, 128>}, {pipeline_mode = #tpu.pipeline_mode<synchronous>, transform_indices = @transform_4, window_bounds = array<i64: 4, 128, 1>}, {pipeline_mode = #tpu.pipeline_mode<synchronous>, transform_indices = @transform_5, window_bounds = array<i64: 4, 128, 128>}, {pipeline_mode = #tpu.pipeline_mode<synchronous>, transform_indices = @transform_6, window_bounds = array<i64: 4, 128, 1>}, {pipeline_mode = #tpu.pipeline_mode<synchronous>, transform_indices = @transform_7, window_bounds = array<i64: 128, 128>}, {pipeline_mode = #tpu.pipeline_mode<synchronous>, transform_indices = @transform_8, window_bounds = array<i64: 128, 1>}, {transform_indices = @transform_9, window_bounds = array<i64: 1, 128, 128>}]} {
    %c0 = arith.constant 0 : index
    %c0_0 = arith.constant 0 : index
    %c0_1 = arith.constant 0 : index
    %0 = vector.load %arg1[%c0, %c0_0, %c0_1] : memref<1x128x128xbf16, #tpu.memory_space<vmem>>, vector<1x128x128xbf16>
    %1 = vector.shape_cast %0 : vector<1x128x128xbf16> to vector<128x128xbf16>
    %c0_2 = arith.constant 0 : index
    %c0_3 = arith.constant 0 : index
    %2 = vector.load %arg2[%c0_2, %c0_3] : memref<128x128xbf16, #tpu.memory_space<vmem>>, vector<128x128xbf16>
    %cst = arith.constant dense<0.000000e+00> : vector<128x128xf32>
    %3 = tpu.matmul %2, %1, %cst {dimension_numbers = #tpu.dot_dimension_numbers<[1], [0], [0], [1], [0, 0, 1, 1], [], []>} : vector<128x128xbf16>, vector<128x128xbf16>, vector<128x128xf32> -> vector<128x128xf32>
    %c0_4 = arith.constant 0 : index
    %c0_5 = arith.constant 0 : index
    %4 = vector.load %arg3[%c0_4, %c0_5] : memref<128x1xf32, #tpu.memory_space<vmem>>, vector<128x1xf32>
    %5 = vector.broadcast %4 : vector<128x1xf32> to vector<128x128xf32>
    %6 = arith.addf %3, %5 : vector<128x128xf32>
    %c0_6 = arith.constant 0 : index
    %c0_7 = arith.constant 0 : index
    %7 = vector.load %arg11[%c0_6, %c0_7] : memref<128x128xf32, #tpu.memory_space<vmem>>, vector<128x128xf32>
    tpu.vector_store %arg11[%c0_6, %c0_7], %6 {strides = array<i32>} : memref<128x128xf32, #tpu.memory_space<vmem>>, vector<128x128xf32>,
    %8 = tpu.iota {dimensions = array<i32: 1>} : vector<128x128xi32>
    %c0_8 = arith.constant 0 : index
    %c0_9 = arith.constant 0 : index
    %9 = vector.load %arg11[%c0_8, %c0_9] : memref<128x128xf32, #tpu.memory_space<vmem>>, vector<128x128xf32>
    %10 = arith.truncf %9 : vector<128x128xf32> to vector<128x128xbf16>
    %c0_10 = arith.constant 0 : index
    %c0_11 = arith.constant 0 : index
    %c0_12 = arith.constant 0 : index
    %11 = vector.load %arg4[%c0_10, %c0_11, %c0_12] : memref<4x384x128xbf16, #tpu.memory_space<vmem>>, vector<1x384x128xbf16>
    %12 = vector.shape_cast %11 : vector<1x384x128xbf16> to vector<384x128xbf16>
    %cst_13 = arith.constant dense<0.000000e+00> : vector<384x128xf32>
    %13 = tpu.matmul %12, %10, %cst_13 {dimension_numbers = #tpu.dot_dimension_numbers<[1], [0], [0], [1], [0, 0, 1, 1], [], []>} : vector<384x128xbf16>, vector<128x128xbf16>, vector<384x128xf32> -> vector<384x128xf32>
    %14 = vector.extract_strided_slice %13 {offsets = [0, 0], sizes = [128, 128], strides = [1, 1]} : vector<384x128xf32> to vector<128x128xf32>
    %15 = vector.extract_strided_slice %13 {offsets = [128, 0], sizes = [128, 128], strides = [1, 1]} : vector<384x128xf32> to vector<128x128xf32>
    %16 = vector.extract_strided_slice %13 {offsets = [256, 0], sizes = [128, 128], strides = [1, 1]} : vector<384x128xf32> to vector<128x128xf32>
    %c1_i32 = arith.constant 1 : i32
    %17 = tpu.dynamic_rotate %14 by %c1_i32 dim 1 : vector<128x128xf32>, i32 -> vector<128x128xf32>
    %c127_i32 = arith.constant 127 : i32
    %18 = tpu.dynamic_rotate %16 by %c127_i32 dim 1 : vector<128x128xf32>, i32 -> vector<128x128xf32>
    %c0_14 = arith.constant 0 : index
    %c0_15 = arith.constant 0 : index
    %c0_16 = arith.constant 0 : index
    %19 = vector.load %arg5[%c0_14, %c0_15, %c0_16] : memref<4x128x1xf32, #tpu.memory_space<vmem>>, vector<1x128x1xf32>
    %20 = vector.shape_cast %19 : vector<1x128x1xf32> to vector<128x1xf32>
    %21 = vector.broadcast %20 : vector<128x1xf32> to vector<128x128xf32>
    %22 = arith.addf %15, %21 : vector<128x128xf32>
    %c1_i32_17 = arith.constant 1 : i32
    %23 = vector.broadcast %c1_i32_17 : i32 to vector<128x128xi32>
    %24 = arith.cmpi sge, %8, %23 : vector<128x128xi32>
    %cst_18 = arith.constant 0.000000e+00 : f32
    %25 = vector.broadcast %cst_18 : f32 to vector<128x128xf32>
    %26 = arith.select %24, %17, %25 : vector<128x128xi1>, vector<128x128xf32>
    %27 = arith.addf %22, %26 : vector<128x128xf32>
    %c99_i32 = arith.constant 99 : i32
    %28 = vector.broadcast %c99_i32 : i32 to vector<128x128xi32>
    %29 = arith.cmpi slt, %8, %28 : vector<128x128xi32>
    %cst_19 = arith.constant 0.000000e+00 : f32
    %30 = vector.broadcast %cst_19 : f32 to vector<128x128xf32>
    %31 = arith.select %29, %18, %30 : vector<128x128xi1>, vector<128x128xf32>
    %32 = arith.addf %27, %31 : vector<128x128xf32>
    %cst_20 = arith.constant 0.000000e+00 : f32
    %33 = vector.broadcast %cst_20 : f32 to vector<128x128xf32>
    %34 = arith.maximumf %32, %33 : vector<128x128xf32>
    %c0_21 = arith.constant 0 : index
    %c0_22 = arith.constant 0 : index
    %c0_23 = arith.constant 0 : index
    %35 = vector.load %arg6[%c0_21, %c0_22, %c0_23] : memref<4x128x128xbf16, #tpu.memory_space<vmem>>, vector<1x128x128xbf16>
    %36 = vector.shape_cast %35 : vector<1x128x128xbf16> to vector<128x128xbf16>
    %37 = arith.truncf %34 : vector<128x128xf32> to vector<128x128xbf16>
    %cst_24 = arith.constant dense<0.000000e+00> : vector<128x128xf32>
    %38 = tpu.matmul %36, %37, %cst_24 {dimension_numbers = #tpu.dot_dimension_numbers<[1], [0], [0], [1], [0, 0, 1, 1], [], []>} : vector<128x128xbf16>, vector<128x128xbf16>, vector<128x128xf32> -> vector<128x128xf32>
    %c0_25 = arith.constant 0 : index
    %c0_26 = arith.constant 0 : index
    %c0_27 = arith.constant 0 : index
    %39 = vector.load %arg7[%c0_25, %c0_26, %c0_27] : memref<4x128x1xf32, #tpu.memory_space<vmem>>, vector<1x128x1xf32>
    %40 = vector.shape_cast %39 : vector<1x128x1xf32> to vector<128x1xf32>
    %41 = vector.broadcast %40 : vector<128x1xf32> to vector<128x128xf32>
    %42 = arith.addf %38, %41 : vector<128x128xf32>
    %c0_28 = arith.constant 0 : index
    %c0_29 = arith.constant 0 : index
    %43 = vector.load %arg11[%c0_28, %c0_29] : memref<128x128xf32, #tpu.memory_space<vmem>>, vector<128x128xf32>
    %44 = arith.addf %43, %42 : vector<128x128xf32>
    %c0_30 = arith.constant 0 : index
    %c0_31 = arith.constant 0 : index
    %45 = vector.load %arg11[%c0_30, %c0_31] : memref<128x128xf32, #tpu.memory_space<vmem>>, vector<128x128xf32>
    tpu.vector_store %arg11[%c0_30, %c0_31], %44 {strides = array<i32>} : memref<128x128xf32, #tpu.memory_space<vmem>>, vector<128x128xf32>,
    %c0_32 = arith.constant 0 : index
    %c0_33 = arith.constant 0 : index
    %46 = vector.load %arg11[%c0_32, %c0_33] : memref<128x128xf32, #tpu.memory_space<vmem>>, vector<128x128xf32>
    %47 = arith.truncf %46 : vector<128x128xf32> to vector<128x128xbf16>
    %c1 = arith.constant 1 : index
    %c0_34 = arith.constant 0 : index
    %c0_35 = arith.constant 0 : index
    %48 = vector.load %arg4[%c1, %c0_34, %c0_35] : memref<4x384x128xbf16, #tpu.memory_space<vmem>>, vector<1x384x128xbf16>
    %49 = vector.shape_cast %48 : vector<1x384x128xbf16> to vector<384x128xbf16>
    %cst_36 = arith.constant dense<0.000000e+00> : vector<384x128xf32>
    %50 = tpu.matmul %49, %47, %cst_36 {dimension_numbers = #tpu.dot_dimension_numbers<[1], [0], [0], [1], [0, 0, 1, 1], [], []>} : vector<384x128xbf16>, vector<128x128xbf16>, vector<384x128xf32> -> vector<384x128xf32>
    %51 = vector.extract_strided_slice %50 {offsets = [0, 0], sizes = [128, 128], strides = [1, 1]} : vector<384x128xf32> to vector<128x128xf32>
    %52 = vector.extract_strided_slice %50 {offsets = [128, 0], sizes = [128, 128], strides = [1, 1]} : vector<384x128xf32> to vector<128x128xf32>
    %53 = vector.extract_strided_slice %50 {offsets = [256, 0], sizes = [128, 128], strides = [1, 1]} : vector<384x128xf32> to vector<128x128xf32>
    %c2_i32 = arith.constant 2 : i32
    %54 = tpu.dynamic_rotate %51 by %c2_i32 dim 1 : vector<128x128xf32>, i32 -> vector<128x128xf32>
    %c126_i32 = arith.constant 126 : i32
    %55 = tpu.dynamic_rotate %53 by %c126_i32 dim 1 : vector<128x128xf32>, i32 -> vector<128x128xf32>
    %c1_37 = arith.constant 1 : index
    %c0_38 = arith.constant 0 : index
    %c0_39 = arith.constant 0 : index
    %56 = vector.load %arg5[%c1_37, %c0_38, %c0_39] : memref<4x128x1xf32, #tpu.memory_space<vmem>>, vector<1x128x1xf32>
    %57 = vector.shape_cast %56 : vector<1x128x1xf32> to vector<128x1xf32>
    %58 = vector.broadcast %57 : vector<128x1xf32> to vector<128x128xf32>
    %59 = arith.addf %52, %58 : vector<128x128xf32>
    %c2_i32_40 = arith.constant 2 : i32
    %60 = vector.broadcast %c2_i32_40 : i32 to vector<128x128xi32>
    %61 = arith.cmpi sge, %8, %60 : vector<128x128xi32>
    %cst_41 = arith.constant 0.000000e+00 : f32
    %62 = vector.broadcast %cst_41 : f32 to vector<128x128xf32>
    %63 = arith.select %61, %54, %62 : vector<128x128xi1>, vector<128x128xf32>
    %64 = arith.addf %59, %63 : vector<128x128xf32>
    %c98_i32 = arith.constant 98 : i32
    %65 = vector.broadcast %c98_i32 : i32 to vector<128x128xi32>
    %66 = arith.cmpi slt, %8, %65 : vector<128x128xi32>
    %cst_42 = arith.constant 0.000000e+00 : f32
    %67 = vector.broadcast %cst_42 : f32 to vector<128x128xf32>
    %68 = arith.select %66, %55, %67 : vector<128x128xi1>, vector<128x128xf32>
    %69 = arith.addf %64, %68 : vector<128x128xf32>
    %cst_43 = arith.constant 0.000000e+00 : f32
    %70 = vector.broadcast %cst_43 : f32 to vector<128x128xf32>
    %71 = arith.maximumf %69, %70 : vector<128x128xf32>
    %c1_44 = arith.constant 1 : index
    %c0_45 = arith.constant 0 : index
    %c0_46 = arith.constant 0 : index
    %72 = vector.load %arg6[%c1_44, %c0_45, %c0_46] : memref<4x128x128xbf16, #tpu.memory_space<vmem>>, vector<1x128x128xbf16>
    %73 = vector.shape_cast %72 : vector<1x128x128xbf16> to vector<128x128xbf16>
    %74 = arith.truncf %71 : vector<128x128xf32> to vector<128x128xbf16>
    %cst_47 = arith.constant dense<0.000000e+00> : vector<128x128xf32>
    %75 = tpu.matmul %73, %74, %cst_47 {dimension_numbers = #tpu.dot_dimension_numbers<[1], [0], [0], [1], [0, 0, 1, 1], [], []>} : vector<128x128xbf16>, vector<128x128xbf16>, vector<128x128xf32> -> vector<128x128xf32>
    %c1_48 = arith.constant 1 : index
    %c0_49 = arith.constant 0 : index
    %c0_50 = arith.constant 0 : index
    %76 = vector.load %arg7[%c1_48, %c0_49, %c0_50] : memref<4x128x1xf32, #tpu.memory_space<vmem>>, vector<1x128x1xf32>
    %77 = vector.shape_cast %76 : vector<1x128x1xf32> to vector<128x1xf32>
    %78 = vector.broadcast %77 : vector<128x1xf32> to vector<128x128xf32>
    %79 = arith.addf %75, %78 : vector<128x128xf32>
    %c0_51 = arith.constant 0 : index
    %c0_52 = arith.constant 0 : index
    %80 = vector.load %arg11[%c0_51, %c0_52] : memref<128x128xf32, #tpu.memory_space<vmem>>, vector<128x128xf32>
    %81 = arith.addf %80, %79 : vector<128x128xf32>
    %c0_53 = arith.constant 0 : index
    %c0_54 = arith.constant 0 : index
    %82 = vector.load %arg11[%c0_53, %c0_54] : memref<128x128xf32, #tpu.memory_space<vmem>>, vector<128x128xf32>
    tpu.vector_store %arg11[%c0_53, %c0_54], %81 {strides = array<i32>} : memref<128x128xf32, #tpu.memory_space<vmem>>, vector<128x128xf32>,
    %c0_55 = arith.constant 0 : index
    %c0_56 = arith.constant 0 : index
    %83 = vector.load %arg11[%c0_55, %c0_56] : memref<128x128xf32, #tpu.memory_space<vmem>>, vector<128x128xf32>
    %84 = arith.truncf %83 : vector<128x128xf32> to vector<128x128xbf16>
    %c2 = arith.constant 2 : index
    %c0_57 = arith.constant 0 : index
    %c0_58 = arith.constant 0 : index
    %85 = vector.load %arg4[%c2, %c0_57, %c0_58] : memref<4x384x128xbf16, #tpu.memory_space<vmem>>, vector<1x384x128xbf16>
    %86 = vector.shape_cast %85 : vector<1x384x128xbf16> to vector<384x128xbf16>
    %cst_59 = arith.constant dense<0.000000e+00> : vector<384x128xf32>
    %87 = tpu.matmul %86, %84, %cst_59 {dimension_numbers = #tpu.dot_dimension_numbers<[1], [0], [0], [1], [0, 0, 1, 1], [], []>} : vector<384x128xbf16>, vector<128x128xbf16>, vector<384x128xf32> -> vector<384x128xf32>
    %88 = vector.extract_strided_slice %87 {offsets = [0, 0], sizes = [128, 128], strides = [1, 1]} : vector<384x128xf32> to vector<128x128xf32>
    %89 = vector.extract_strided_slice %87 {offsets = [128, 0], sizes = [128, 128], strides = [1, 1]} : vector<384x128xf32> to vector<128x128xf32>
    %90 = vector.extract_strided_slice %87 {offsets = [256, 0], sizes = [128, 128], strides = [1, 1]} : vector<384x128xf32> to vector<128x128xf32>
    %c4_i32 = arith.constant 4 : i32
    %91 = tpu.dynamic_rotate %88 by %c4_i32 dim 1 : vector<128x128xf32>, i32 -> vector<128x128xf32>
    %c124_i32 = arith.constant 124 : i32
    %92 = tpu.dynamic_rotate %90 by %c124_i32 dim 1 : vector<128x128xf32>, i32 -> vector<128x128xf32>
    %c2_60 = arith.constant 2 : index
    %c0_61 = arith.constant 0 : index
    %c0_62 = arith.constant 0 : index
    %93 = vector.load %arg5[%c2_60, %c0_61, %c0_62] : memref<4x128x1xf32, #tpu.memory_space<vmem>>, vector<1x128x1xf32>
    %94 = vector.shape_cast %93 : vector<1x128x1xf32> to vector<128x1xf32>
    %95 = vector.broadcast %94 : vector<128x1xf32> to vector<128x128xf32>
    %96 = arith.addf %89, %95 : vector<128x128xf32>
    %c4_i32_63 = arith.constant 4 : i32
    %97 = vector.broadcast %c4_i32_63 : i32 to vector<128x128xi32>
    %98 = arith.cmpi sge, %8, %97 : vector<128x128xi32>
    %cst_64 = arith.constant 0.000000e+00 : f32
    %99 = vector.broadcast %cst_64 : f32 to vector<128x128xf32>
    %100 = arith.select %98, %91, %99 : vector<128x128xi1>, vector<128x128xf32>
    %101 = arith.addf %96, %100 : vector<128x128xf32>
    %c96_i32 = arith.constant 96 : i32
    %102 = vector.broadcast %c96_i32 : i32 to vector<128x128xi32>
    %103 = arith.cmpi slt, %8, %102 : vector<128x128xi32>
    %cst_65 = arith.constant 0.000000e+00 : f32
    %104 = vector.broadcast %cst_65 : f32 to vector<128x128xf32>
    %105 = arith.select %103, %92, %104 : vector<128x128xi1>, vector<128x128xf32>
    %106 = arith.addf %101, %105 : vector<128x128xf32>
    %cst_66 = arith.constant 0.000000e+00 : f32
    %107 = vector.broadcast %cst_66 : f32 to vector<128x128xf32>
    %108 = arith.maximumf %106, %107 : vector<128x128xf32>
    %c2_67 = arith.constant 2 : index
    %c0_68 = arith.constant 0 : index
    %c0_69 = arith.constant 0 : index
    %109 = vector.load %arg6[%c2_67, %c0_68, %c0_69] : memref<4x128x128xbf16, #tpu.memory_space<vmem>>, vector<1x128x128xbf16>
    %110 = vector.shape_cast %109 : vector<1x128x128xbf16> to vector<128x128xbf16>
    %111 = arith.truncf %108 : vector<128x128xf32> to vector<128x128xbf16>
    %cst_70 = arith.constant dense<0.000000e+00> : vector<128x128xf32>
    %112 = tpu.matmul %110, %111, %cst_70 {dimension_numbers = #tpu.dot_dimension_numbers<[1], [0], [0], [1], [0, 0, 1, 1], [], []>} : vector<128x128xbf16>, vector<128x128xbf16>, vector<128x128xf32> -> vector<128x128xf32>
    %c2_71 = arith.constant 2 : index
    %c0_72 = arith.constant 0 : index
    %c0_73 = arith.constant 0 : index
    %113 = vector.load %arg7[%c2_71, %c0_72, %c0_73] : memref<4x128x1xf32, #tpu.memory_space<vmem>>, vector<1x128x1xf32>
    %114 = vector.shape_cast %113 : vector<1x128x1xf32> to vector<128x1xf32>
    %115 = vector.broadcast %114 : vector<128x1xf32> to vector<128x128xf32>
    %116 = arith.addf %112, %115 : vector<128x128xf32>
    %c0_74 = arith.constant 0 : index
    %c0_75 = arith.constant 0 : index
    %117 = vector.load %arg11[%c0_74, %c0_75] : memref<128x128xf32, #tpu.memory_space<vmem>>, vector<128x128xf32>
    %118 = arith.addf %117, %116 : vector<128x128xf32>
    %c0_76 = arith.constant 0 : index
    %c0_77 = arith.constant 0 : index
    %119 = vector.load %arg11[%c0_76, %c0_77] : memref<128x128xf32, #tpu.memory_space<vmem>>, vector<128x128xf32>
    tpu.vector_store %arg11[%c0_76, %c0_77], %118 {strides = array<i32>} : memref<128x128xf32, #tpu.memory_space<vmem>>, vector<128x128xf32>,
    %c0_78 = arith.constant 0 : index
    %c0_79 = arith.constant 0 : index
    %120 = vector.load %arg11[%c0_78, %c0_79] : memref<128x128xf32, #tpu.memory_space<vmem>>, vector<128x128xf32>
    %121 = arith.truncf %120 : vector<128x128xf32> to vector<128x128xbf16>
    %c3 = arith.constant 3 : index
    %c0_80 = arith.constant 0 : index
    %c0_81 = arith.constant 0 : index
    %122 = vector.load %arg4[%c3, %c0_80, %c0_81] : memref<4x384x128xbf16, #tpu.memory_space<vmem>>, vector<1x384x128xbf16>
    %123 = vector.shape_cast %122 : vector<1x384x128xbf16> to vector<384x128xbf16>
    %cst_82 = arith.constant dense<0.000000e+00> : vector<384x128xf32>
    %124 = tpu.matmul %123, %121, %cst_82 {dimension_numbers = #tpu.dot_dimension_numbers<[1], [0], [0], [1], [0, 0, 1, 1], [], []>} : vector<384x128xbf16>, vector<128x128xbf16>, vector<384x128xf32> -> vector<384x128xf32>
    %125 = vector.extract_strided_slice %124 {offsets = [0, 0], sizes = [128, 128], strides = [1, 1]} : vector<384x128xf32> to vector<128x128xf32>
    %126 = vector.extract_strided_slice %124 {offsets = [128, 0], sizes = [128, 128], strides = [1, 1]} : vector<384x128xf32> to vector<128x128xf32>
    %127 = vector.extract_strided_slice %124 {offsets = [256, 0], sizes = [128, 128], strides = [1, 1]} : vector<384x128xf32> to vector<128x128xf32>
    %c8_i32 = arith.constant 8 : i32
    %128 = tpu.dynamic_rotate %125 by %c8_i32 dim 1 : vector<128x128xf32>, i32 -> vector<128x128xf32>
    %c120_i32 = arith.constant 120 : i32
    %129 = tpu.dynamic_rotate %127 by %c120_i32 dim 1 : vector<128x128xf32>, i32 -> vector<128x128xf32>
    %c3_83 = arith.constant 3 : index
    %c0_84 = arith.constant 0 : index
    %c0_85 = arith.constant 0 : index
    %130 = vector.load %arg5[%c3_83, %c0_84, %c0_85] : memref<4x128x1xf32, #tpu.memory_space<vmem>>, vector<1x128x1xf32>
    %131 = vector.shape_cast %130 : vector<1x128x1xf32> to vector<128x1xf32>
    %132 = vector.broadcast %131 : vector<128x1xf32> to vector<128x128xf32>
    %133 = arith.addf %126, %132 : vector<128x128xf32>
    %c8_i32_86 = arith.constant 8 : i32
    %134 = vector.broadcast %c8_i32_86 : i32 to vector<128x128xi32>
    %135 = arith.cmpi sge, %8, %134 : vector<128x128xi32>
    %cst_87 = arith.constant 0.000000e+00 : f32
    %136 = vector.broadcast %cst_87 : f32 to vector<128x128xf32>
    %137 = arith.select %135, %128, %136 : vector<128x128xi1>, vector<128x128xf32>
    %138 = arith.addf %133, %137 : vector<128x128xf32>
    %c92_i32 = arith.constant 92 : i32
    %139 = vector.broadcast %c92_i32 : i32 to vector<128x128xi32>
    %140 = arith.cmpi slt, %8, %139 : vector<128x128xi32>
    %cst_88 = arith.constant 0.000000e+00 : f32
    %141 = vector.broadcast %cst_88 : f32 to vector<128x128xf32>
    %142 = arith.select %140, %129, %141 : vector<128x128xi1>, vector<128x128xf32>
    %143 = arith.addf %138, %142 : vector<128x128xf32>
    %cst_89 = arith.constant 0.000000e+00 : f32
    %144 = vector.broadcast %cst_89 : f32 to vector<128x128xf32>
    %145 = arith.maximumf %143, %144 : vector<128x128xf32>
    %c3_90 = arith.constant 3 : index
    %c0_91 = arith.constant 0 : index
    %c0_92 = arith.constant 0 : index
    %146 = vector.load %arg6[%c3_90, %c0_91, %c0_92] : memref<4x128x128xbf16, #tpu.memory_space<vmem>>, vector<1x128x128xbf16>
    %147 = vector.shape_cast %146 : vector<1x128x128xbf16> to vector<128x128xbf16>
    %148 = arith.truncf %145 : vector<128x128xf32> to vector<128x128xbf16>
    %cst_93 = arith.constant dense<0.000000e+00> : vector<128x128xf32>
    %149 = tpu.matmul %147, %148, %cst_93 {dimension_numbers = #tpu.dot_dimension_numbers<[1], [0], [0], [1], [0, 0, 1, 1], [], []>} : vector<128x128xbf16>, vector<128x128xbf16>, vector<128x128xf32> -> vector<128x128xf32>
    %c3_94 = arith.constant 3 : index
    %c0_95 = arith.constant 0 : index
    %c0_96 = arith.constant 0 : index
    %150 = vector.load %arg7[%c3_94, %c0_95, %c0_96] : memref<4x128x1xf32, #tpu.memory_space<vmem>>, vector<1x128x1xf32>
    %151 = vector.shape_cast %150 : vector<1x128x1xf32> to vector<128x1xf32>
    %152 = vector.broadcast %151 : vector<128x1xf32> to vector<128x128xf32>
    %153 = arith.addf %149, %152 : vector<128x128xf32>
    %c0_97 = arith.constant 0 : index
    %c0_98 = arith.constant 0 : index
    %154 = vector.load %arg11[%c0_97, %c0_98] : memref<128x128xf32, #tpu.memory_space<vmem>>, vector<128x128xf32>
    %155 = arith.addf %154, %153 : vector<128x128xf32>
    %c0_99 = arith.constant 0 : index
    %c0_100 = arith.constant 0 : index
    %156 = vector.load %arg11[%c0_99, %c0_100] : memref<128x128xf32, #tpu.memory_space<vmem>>, vector<128x128xf32>
    tpu.vector_store %arg11[%c0_99, %c0_100], %155 {strides = array<i32>} : memref<128x128xf32, #tpu.memory_space<vmem>>, vector<128x128xf32>,
    %c0_101 = arith.constant 0 : index
    %c0_102 = arith.constant 0 : index
    %157 = vector.load %arg8[%c0_101, %c0_102] : memref<128x128xbf16, #tpu.memory_space<vmem>>, vector<128x128xbf16>
    %c0_103 = arith.constant 0 : index
    %c0_104 = arith.constant 0 : index
    %158 = vector.load %arg11[%c0_103, %c0_104] : memref<128x128xf32, #tpu.memory_space<vmem>>, vector<128x128xf32>
    %159 = arith.truncf %158 : vector<128x128xf32> to vector<128x128xbf16>
    %cst_105 = arith.constant dense<0.000000e+00> : vector<128x128xf32>
    %160 = tpu.matmul %157, %159, %cst_105 {dimension_numbers = #tpu.dot_dimension_numbers<[1], [0], [0], [1], [0, 0, 1, 1], [], []>} : vector<128x128xbf16>, vector<128x128xbf16>, vector<128x128xf32> -> vector<128x128xf32>
    %c0_106 = arith.constant 0 : index
    %c0_107 = arith.constant 0 : index
    %161 = vector.load %arg9[%c0_106, %c0_107] : memref<128x1xf32, #tpu.memory_space<vmem>>, vector<128x1xf32>
    %162 = vector.broadcast %161 : vector<128x1xf32> to vector<128x128xf32>
    %163 = arith.addf %160, %162 : vector<128x128xf32>
    %c0_108 = arith.constant 0 : index
    %c0_109 = arith.constant 0 : index
    %c0_110 = arith.constant 0 : index
    %164 = vector.load %arg10[%c0_108, %c0_109, %c0_110] : memref<1x128x128xf32, #tpu.memory_space<vmem>>, vector<1x128x128xf32>
    %165 = vector.shape_cast %164 : vector<1x128x128xf32> to vector<128x128xf32>
    %166 = vector.shape_cast %163 : vector<128x128xf32> to vector<1x128x128xf32>
    tpu.vector_store %arg10[%c0_108, %c0_109, %c0_110], %166 {strides = array<i32>} : memref<1x128x128xf32, #tpu.memory_space<vmem>>, vector<1x128x128xf32>,
    return
  }
  func.func @transform_0(%arg0: i32) -> (i32, i32, i32) {
    %c0_i32 = arith.constant 0 : i32
    %c0_i32_0 = arith.constant 0 : i32
    %c0_i32_1 = arith.constant 0 : i32
    return %arg0, %c0_i32, %c0_i32_0 : i32, i32, i32
  }
  func.func @transform_1(%arg0: i32) -> (i32, i32) {
    %c0_i32 = arith.constant 0 : i32
    %c0_i32_0 = arith.constant 0 : i32
    %c0_i32_1 = arith.constant 0 : i32
    return %c0_i32, %c0_i32_0 : i32, i32
  }
  func.func @transform_2(%arg0: i32) -> (i32, i32) {
    %c0_i32 = arith.constant 0 : i32
    %c0_i32_0 = arith.constant 0 : i32
    %c0_i32_1 = arith.constant 0 : i32
    return %c0_i32, %c0_i32_0 : i32, i32
  }
  func.func @transform_3(%arg0: i32) -> (i32, i32, i32) {
    %c0_i32 = arith.constant 0 : i32
    %c0_i32_0 = arith.constant 0 : i32
    %c0_i32_1 = arith.constant 0 : i32
    %c0_i32_2 = arith.constant 0 : i32
    return %c0_i32, %c0_i32_0, %c0_i32_1 : i32, i32, i32
  }
  func.func @transform_4(%arg0: i32) -> (i32, i32, i32) {
    %c0_i32 = arith.constant 0 : i32
    %c0_i32_0 = arith.constant 0 : i32
    %c0_i32_1 = arith.constant 0 : i32
    %c0_i32_2 = arith.constant 0 : i32
    return %c0_i32, %c0_i32_0, %c0_i32_1 : i32, i32, i32
  }
  func.func @transform_5(%arg0: i32) -> (i32, i32, i32) {
    %c0_i32 = arith.constant 0 : i32
    %c0_i32_0 = arith.constant 0 : i32
    %c0_i32_1 = arith.constant 0 : i32
    %c0_i32_2 = arith.constant 0 : i32
    return %c0_i32, %c0_i32_0, %c0_i32_1 : i32, i32, i32
  }
  func.func @transform_6(%arg0: i32) -> (i32, i32, i32) {
    %c0_i32 = arith.constant 0 : i32
    %c0_i32_0 = arith.constant 0 : i32
    %c0_i32_1 = arith.constant 0 : i32
    %c0_i32_2 = arith.constant 0 : i32
    return %c0_i32, %c0_i32_0, %c0_i32_1 : i32, i32, i32
  }
  func.func @transform_7(%arg0: i32) -> (i32, i32) {
    %c0_i32 = arith.constant 0 : i32
    %c0_i32_0 = arith.constant 0 : i32
    %c0_i32_1 = arith.constant 0 : i32
    return %c0_i32, %c0_i32_0 : i32, i32
  }
  func.func @transform_8(%arg0: i32) -> (i32, i32) {
    %c0_i32 = arith.constant 0 : i32
    %c0_i32_0 = arith.constant 0 : i32
    %c0_i32_1 = arith.constant 0 : i32
    return %c0_i32, %c0_i32_0 : i32, i32
  }
  func.func @transform_9(%arg0: i32) -> (i32, i32, i32) {
    %c0_i32 = arith.constant 0 : i32
    %c0_i32_0 = arith.constant 0 : i32
    %c0_i32_1 = arith.constant 0 : i32
    return %arg0, %c0_i32, %c0_i32_0 : i32, i32, i32
  }
}

</mosaic_0001>

<llo_original>
// kernel: single_stage_forward.1
$region0: #{single_stage_forward.1}
  #allocation0 [shape = 'u32[]', space=smem, size = 0x4, offset = 0x4, fixed_abs, tag = 'smem constant byte address 0x4 - core index']
  #allocation1 [shape = 'u32[144,128]{1,0:T(1,128)}', space=vmem, size = 0x12000, scoped, tag = 'internal scratch']
  #allocation2 [shape = 'f32[128,128]{1,0:T(8,128)}', space=vmem, size = 0x10000, scoped, tag = 'scratch operand']
  %s0 = inlined_call_operand.vmem [shape: bf16[2,128,128], index: 0, kind: input, shape index: {}]
  %s1 = inlined_call_operand.vmem [shape: bf16[128,128], index: 1, kind: input, shape index: {}]
  %s2 = inlined_call_operand.vmem [shape: f32[128,1], index: 2, kind: input, shape index: {}]
  %s3 = inlined_call_operand.vmem [shape: bf16[4,384,128], index: 3, kind: input, shape index: {}]
  %s4 = inlined_call_operand.vmem [shape: f32[4,128,1], index: 4, kind: input, shape index: {}]
  %s5 = inlined_call_operand.vmem [shape: bf16[4,128,128], index: 5, kind: input, shape index: {}]
  %s6 = inlined_call_operand.vmem [shape: f32[4,128,1], index: 6, kind: input, shape index: {}]
  %s7 = inlined_call_operand.vmem [shape: bf16[128,128], index: 7, kind: input, shape index: {}]
  %s8 = inlined_call_operand.vmem [shape: f32[128,1], index: 8, kind: input, shape index: {}]
  %s9 = inlined_call_operand.vmem [shape: f32[2,128,128], index: 9, kind: output, shape index: {}]
  %s10 = sld [smem:[#allocation0]]
  $region69: #{single_stage_forward.1} parent=0
    _
  %s12 = ssub.s32 1, %s10
  %s13 = scalar_select 0, %s12, %s10
  loop: start=0, step=1, limit=4
  $region2: #{single_stage_forward.1} parent=0 // loop_pre_header
    _
  $region3: #{single_stage_forward.1} parent=0 // loop_header
    %s15 = sphi 0, %s19
    %p16 = scmp.ge.s32.totalorder %s15, 4
    %s25 = sphi 0, %s27
    %s28 = sphi 0, %s25
    %s29 = sphi 0, %s28
    %s45 = sphi 0, %s29
    %s49 = sphi 0, %s49
    %s51 = sphi 0, %s49
    %s52 = sphi 0, %s51
    %s66 = sphi 0, %s52
    %s70 = sphi 0, %s70
    %s72 = sphi 0, %s70
    %s73 = sphi 0, %s72
    %s87 = sphi 0, %s73
    %s91 = sphi 0, %s91
    %s93 = sphi 0, %s91
    %s94 = sphi 0, %s93
    %s108 = sphi 0, %s94
    %s112 = sphi 0, %s112
    %s114 = sphi 0, %s112
    %s115 = sphi 0, %s114
    %s129 = sphi 0, %s115
    %s133 = sphi 0, %s133
    %s135 = sphi 0, %s133
    %s136 = sphi 0, %s135
    %s150 = sphi 0, %s136
    %s154 = sphi 0, %s154
    %s156 = sphi 0, %s154
    %s157 = sphi 0, %s156
    %s171 = sphi 0, %s157
    %s175 = sphi 0, %s175
    %s177 = sphi 0, %s175
    %s178 = sphi 0, %s177
    %s192 = sphi 0, %s178
    %s196 = sphi 0, %s196
    %s198 = sphi 0, %s196
    %s199 = sphi 0, %s198
    %s213 = sphi 0, %s199
    %s219 = sphi 0, %s221
    %s222 = sphi 0, %s219
    %s223 = sphi 0, %s222
    %s239 = sphi 0, %s223
  $region4: #{single_stage_forward.1} parent=0 // loop_header_branch
    %18 = sbr.rel (%p16) target = $region8
  $region5: #{single_stage_forward.1} parent=0 // loop_body
    %s20 = ssub.s32 %s15, 1
    %s21 = ssub.s32 %s15, 2
    %s22 = sadd.s32 %s15, 1
    %s23 = ssub.s32 %s15, %s22
    %p24 = scmp.eq.s32.totalorder %s23, 0
    %s26 = sadd.s32 %s25, 1
    %s27 = scalar_select %p24, %s25, %s26
    %p30 = pneg %p24
    %p31 = scmp.eq.s32.totalorder %s15, 1
    %p32 = por %p30, %p31
    %p33 = scmp.ne.s32.totalorder %s25, %s28
    %p34 = scmp.eq.s32.totalorder %s15, 0
    %p35 = por %p33, %p34
    %p36 = scmp.ne.s32.totalorder %s25, %s28
    %p37 = scmp.eq.s32.totalorder %s20, 1
    %p38 = por %p36, %p37
    %p39 = scmp.ne.s32.totalorder %s28, %s29
    %p40 = scmp.eq.s32.totalorder %s20, 0
    %p41 = por %p39, %p40
    %p42 = scmp.ne.s32.totalorder %s28, %s29
    %p43 = scmp.eq.s32.totalorder %s21, 1
    %p44 = por %p42, %p43
    %p46 = scmp.ne.s32.totalorder %s29, %s45
    %p47 = scmp.eq.s32.totalorder %s21, 0
    %p48 = por %p46, %p47
    %s50 = sadd.s32 %s49, 1
    %p53 = scmp.eq.s32.totalorder %s15, 1
    %p54 = scmp.ne.s32.totalorder %s49, %s51
    %p55 = scmp.eq.s32.totalorder %s15, 0
    %p56 = por %p54, %p55
    %p57 = scmp.ne.s32.totalorder %s49, %s51
    %p58 = scmp.eq.s32.totalorder %s20, 1
    %p59 = por %p57, %p58
    %p60 = scmp.ne.s32.totalorder %s51, %s52
    %p61 = scmp.eq.s32.totalorder %s20, 0
    %p62 = por %p60, %p61
    %p63 = scmp.ne.s32.totalorder %s51, %s52
    %p64 = scmp.eq.s32.totalorder %s21, 1
    %p65 = por %p63, %p64
    %p67 = scmp.ne.s32.totalorder %s52, %s66
    %p68 = scmp.eq.s32.totalorder %s21, 0
    %p69 = por %p67, %p68
    %s71 = sadd.s32 %s70, 1
    %p74 = scmp.eq.s32.totalorder %s15, 1
    %p75 = scmp.ne.s32.totalorder %s70, %s72
    %p76 = scmp.eq.s32.totalorder %s15, 0
    %p77 = por %p75, %p76
    %p78 = scmp.ne.s32.totalorder %s70, %s72
    %p79 = scmp.eq.s32.totalorder %s20, 1
    %p80 = por %p78, %p79
    %p81 = scmp.ne.s32.totalorder %s72, %s73
    %p82 = scmp.eq.s32.totalorder %s20, 0
    %p83 = por %p81, %p82
    %p84 = scmp.ne.s32.totalorder %s72, %s73
    %p85 = scmp.eq.s32.totalorder %s21, 1
    %p86 = por %p84, %p85
    %p88 = scmp.ne.s32.totalorder %s73, %s87
    %p89 = scmp.eq.s32.totalorder %s21, 0
    %p90 = por %p88, %p89
    %s92 = sadd.s32 %s91, 1
    %p95 = scmp.eq.s32.totalorder %s15, 1
    %p96 = scmp.ne.s32.totalorder %s91, %s93
    %p97 = scmp.eq.s32.totalorder %s15, 0
    %p98 = por %p96, %p97
    %p99 = scmp.ne.s32.totalorder %s91, %s93
    %p100 = scmp.eq.s32.totalorder %s20, 1
    %p101 = por %p99, %p100
    %p102 = scmp.ne.s32.totalorder %s93, %s94
    %p103 = scmp.eq.s32.totalorder %s20, 0
    %p104 = por %p102, %p103
    %p105 = scmp.ne.s32.totalorder %s93, %s94
    %p106 = scmp.eq.s32.totalorder %s21, 1
    %p107 = por %p105, %p106
    %p109 = scmp.ne.s32.totalorder %s94, %s108
    %p110 = scmp.eq.s32.totalorder %s21, 0
    %p111 = por %p109, %p110
    %s113 = sadd.s32 %s112, 1
    %p116 = scmp.eq.s32.totalorder %s15, 1
    %p117 = scmp.ne.s32.totalorder %s112, %s114
    %p118 = scmp.eq.s32.totalorder %s15, 0
    %p119 = por %p117, %p118
    %p120 = scmp.ne.s32.totalorder %s112, %s114
    %p121 = scmp.eq.s32.totalorder %s20, 1
    %p122 = por %p120, %p121
    %p123 = scmp.ne.s32.totalorder %s114, %s115
    %p124 = scmp.eq.s32.totalorder %s20, 0
    %p125 = por %p123, %p124
    %p126 = scmp.ne.s32.totalorder %s114, %s115
    %p127 = scmp.eq.s32.totalorder %s21, 1
    %p128 = por %p126, %p127
    %p130 = scmp.ne.s32.totalorder %s115, %s129
    %p131 = scmp.eq.s32.totalorder %s21, 0
    %p132 = por %p130, %p131
    %s134 = sadd.s32 %s133, 1
    %p137 = scmp.eq.s32.totalorder %s15, 1
    %p138 = scmp.ne.s32.totalorder %s133, %s135
    %p139 = scmp.eq.s32.totalorder %s15, 0
    %p140 = por %p138, %p139
    %p141 = scmp.ne.s32.totalorder %s133, %s135
    %p142 = scmp.eq.s32.totalorder %s20, 1
    %p143 = por %p141, %p142
    %p144 = scmp.ne.s32.totalorder %s135, %s136
    %p145 = scmp.eq.s32.totalorder %s20, 0
    %p146 = por %p144, %p145
    %p147 = scmp.ne.s32.totalorder %s135, %s136
    %p148 = scmp.eq.s32.totalorder %s21, 1
    %p149 = por %p147, %p148
    %p151 = scmp.ne.s32.totalorder %s136, %s150
    %p152 = scmp.eq.s32.totalorder %s21, 0
    %p153 = por %p151, %p152
    %s155 = sadd.s32 %s154, 1
    %p158 = scmp.eq.s32.totalorder %s15, 1
    %p159 = scmp.ne.s32.totalorder %s154, %s156
    %p160 = scmp.eq.s32.totalorder %s15, 0
    %p161 = por %p159, %p160
    %p162 = scmp.ne.s32.totalorder %s154, %s156
    %p163 = scmp.eq.s32.totalorder %s20, 1
    %p164 = por %p162, %p163
    %p165 = scmp.ne.s32.totalorder %s156, %s157
    %p166 = scmp.eq.s32.totalorder %s20, 0
    %p167 = por %p165, %p166
    %p168 = scmp.ne.s32.totalorder %s156, %s157
    %p169 = scmp.eq.s32.totalorder %s21, 1
    %p170 = por %p168, %p169
    %p172 = scmp.ne.s32.totalorder %s157, %s171
    %p173 = scmp.eq.s32.totalorder %s21, 0
    %p174 = por %p172, %p173
    %s176 = sadd.s32 %s175, 1
    %p179 = scmp.eq.s32.totalorder %s15, 1
    %p180 = scmp.ne.s32.totalorder %s175, %s177
    %p181 = scmp.eq.s32.totalorder %s15, 0
    %p182 = por %p180, %p181
    %p183 = scmp.ne.s32.totalorder %s175, %s177
    %p184 = scmp.eq.s32.totalorder %s20, 1
    %p185 = por %p183, %p184
    %p186 = scmp.ne.s32.totalorder %s177, %s178
    %p187 = scmp.eq.s32.totalorder %s20, 0
    %p188 = por %p186, %p187
    %p189 = scmp.ne.s32.totalorder %s177, %s178
    %p190 = scmp.eq.s32.totalorder %s21, 1
    %p191 = por %p189, %p190
    %p193 = scmp.ne.s32.totalorder %s178, %s192
    %p194 = scmp.eq.s32.totalorder %s21, 0
    %p195 = por %p193, %p194
    %s197 = sadd.s32 %s196, 1
    %p200 = scmp.eq.s32.totalorder %s15, 1
    %p201 = scmp.ne.s32.totalorder %s196, %s198
    %p202 = scmp.eq.s32.totalorder %s15, 0
    %p203 = por %p201, %p202
    %p204 = scmp.ne.s32.totalorder %s196, %s198
    %p205 = scmp.eq.s32.totalorder %s20, 1
    %p206 = por %p204, %p205
    %p207 = scmp.ne.s32.totalorder %s198, %s199
    %p208 = scmp.eq.s32.totalorder %s20, 0
    %p209 = por %p207, %p208
    %p210 = scmp.ne.s32.totalorder %s198, %s199
    %p211 = scmp.eq.s32.totalorder %s21, 1
    %p212 = por %p210, %p211
    %p214 = scmp.ne.s32.totalorder %s199, %s213
    %p215 = scmp.eq.s32.totalorder %s21, 0
    %p216 = por %p214, %p215
    %s217 = ssub.s32 %s15, %s22
    %p218 = scmp.eq.s32.totalorder %s217, 0
    %s220 = sadd.s32 %s219, 1
    %s221 = scalar_select %p218, %s219, %s220
    %p224 = pneg %p218
    %p225 = scmp.eq.s32.totalorder %s15, 1
    %p226 = por %p224, %p225
    %p227 = scmp.ne.s32.totalorder %s219, %s222
    %p228 = scmp.eq.s32.totalorder %s15, 0
    %p229 = por %p227, %p228
    %p230 = scmp.ne.s32.totalorder %s219, %s222
    %p231 = scmp.eq.s32.totalorder %s20, 1
    %p232 = por %p230, %p231
    %p233 = scmp.ne.s32.totalorder %s222, %s223
    %p234 = scmp.eq.s32.totalorder %s20, 0
    %p235 = por %p233, %p234
    %p236 = scmp.ne.s32.totalorder %s222, %s223
    %p237 = scmp.eq.s32.totalorder %s21, 1
    %p238 = por %p236, %p237
    %p240 = scmp.ne.s32.totalorder %s223, %s239
    %p241 = scmp.eq.s32.totalorder %s21, 0
    %p242 = por %p240, %p241
    %p243 = scmp.le.s32.totalorder 1, %s15
    %p244 = scmp.lt.s32.totalorder %s15, 3
    %p245 = pnand %p243, %p244
    %p246 = pneg %p245
    // Predicated region
    $region9: #{single_stage_forward.1} parent=5 // pred_check
      _
    $region10: #{single_stage_forward.1} parent=5 // pred_check_branch
      %248 = sbr.rel (%p245) target = $region12
    $region11: #{single_stage_forward.1} parent=5 // pred_region
      %s249 = ssub.s32 %s15, 1
      // Predicated region
      $region13: #{single_stage_forward.1} parent=11 // pred_check
        %p250 = pneg %p62
      $region14: #{single_stage_forward.1} parent=11 // pred_check_branch
        %252 = sbr.rel (%p250) target = $region16
      $region15: #{single_stage_forward.1} parent=11 // pred_region
        _
      $region16: #{single_stage_forward.1} parent=11 // pred_fallthru
        _
      // Predicated region
      $region17: #{single_stage_forward.1} parent=11 // pred_check
        %p253 = pneg %p83
      $region18: #{single_stage_forward.1} parent=11 // pred_check_branch
        %255 = sbr.rel (%p253) target = $region20
      $region19: #{single_stage_forward.1} parent=11 // pred_region
        _
      $region20: #{single_stage_forward.1} parent=11 // pred_fallthru
        _
      // Predicated region
      $region21: #{single_stage_forward.1} parent=11 // pred_check
        %p256 = pneg %p104
      $region22: #{single_stage_forward.1} parent=11 // pred_check_branch
        %258 = sbr.rel (%p256) target = $region24
      $region23: #{single_stage_forward.1} parent=11 // pred_region
        _
      $region24: #{single_stage_forward.1} parent=11 // pred_fallthru
        _
      // Predicated region
      $region25: #{single_stage_forward.1} parent=11 // pred_check
        %p259 = pneg %p125
      $region26: #{single_stage_forward.1} parent=11 // pred_check_branch
        %261 = sbr.rel (%p259) target = $region28
      $region27: #{single_stage_forward.1} parent=11 // pred_region
        _
      $region28: #{single_stage_forward.1} parent=11 // pred_fallthru
        _
      // Predicated region
      $region29: #{single_stage_forward.1} parent=11 // pred_check
        %p262 = pneg %p146
      $region30: #{single_stage_forward.1} parent=11 // pred_check_branch
        %264 = sbr.rel (%p262) target = $region32
      $region31: #{single_stage_forward.1} parent=11 // pred_region
        _
      $region32: #{single_stage_forward.1} parent=11 // pred_fallthru
        _
      // Predicated region
      $region33: #{single_stage_forward.1} parent=11 // pred_check
        %p265 = pneg %p167
      $region34: #{single_stage_forward.1} parent=11 // pred_check_branch
        %267 = sbr.rel (%p265) target = $region36
      $region35: #{single_stage_forward.1} parent=11 // pred_region
        _
      $region36: #{single_stage_forward.1} parent=11 // pred_fallthru
        _
      // Predicated region
      $region37: #{single_stage_forward.1} parent=11 // pred_check
        %p268 = pneg %p188
      $region38: #{single_stage_forward.1} parent=11 // pred_check_branch
        %270 = sbr.rel (%p268) target = $region40
      $region39: #{single_stage_forward.1} parent=11 // pred_region
        _
      $region40: #{single_stage_forward.1} parent=11 // pred_fallthru
        _
      // Predicated region
      $region41: #{single_stage_forward.1} parent=11 // pred_check
        %p271 = pneg %p209
      $region42: #{single_stage_forward.1} parent=11 // pred_check_branch
        %273 = sbr.rel (%p271) target = $region44
      $region43: #{single_stage_forward.1} parent=11 // pred_region
        _
      $region44: #{single_stage_forward.1} parent=11 // pred_fallthru
        _
    $region12: #{single_stage_forward.1} parent=5 // pred_fallthru
      _
    %p274 = scmp.lt.s32.totalorder %s15, 2
    // Predicated region
    $region45: #{single_stage_forward.1} parent=5 // pred_check
      %p275 = pneg %p274
    $region46: #{single_stage_forward.1} parent=5 // pred_check_branch
      %277 = sbr.rel (%p275) target = $region48
    $region47: #{single_stage_forward.1} parent=5 // pred_region
      // Predicated region
      $region49: #{single_stage_forward.1} parent=47 // pred_check
        %p278 = pneg %p35
      $region50: #{single_stage_forward.1} parent=47 // pred_check_branch
        %280 = sbr.rel (%p278) target = $region52
      $region51: #{single_stage_forward.1} parent=47 // pred_region
        %p281 = scmp.lt.s32.totalorder %s15, 1
        %s282 = scalar_select %p281, %s15, 1
        %s283 = smul.addr %s282, 16
        %s284 = smul.addr %s283, 4
        %s285 = scalar_lea.vmem %s0, %s284
      $region52: #{single_stage_forward.1} parent=47 // pred_fallthru
        _
    $region48: #{single_stage_forward.1} parent=5 // pred_fallthru
      _
    %p286 = scmp.le.s32.totalorder 1, %s15
    %p287 = scmp.lt.s32.totalorder %s15, 3
    %p288 = pnand %p286, %p287
    %p289 = pneg %p288
    // Predicated region
    $region53: #{single_stage_forward.1} parent=5 // pred_check
      _
    $region54: #{single_stage_forward.1} parent=5 // pred_check_branch
      %291 = sbr.rel (%p288) target = $region56
    $region55: #{single_stage_forward.1} parent=5 // pred_region
      %s292 = ssub.s32 %s15, 1
      %p293 = scmp.lt.s32.totalorder %s20, 1
      %s294 = scalar_select %p293, %s20, 1
      %s295 = smul.addr %s294, 16
      %s296 = smul.addr %s295, 4
      %s297 = scalar_lea.vmem %s0, %s296
      %p298 = pneg %p41
      %p299 = pneg %p38
      %p300 = pneg %p62
      %p301 = pneg %p59
      %p302 = pneg %p83
      %p303 = pneg %p80
      %p304 = pneg %p104
      %p305 = pneg %p101
      %p306 = pneg %p125
      %p307 = pneg %p122
      %p308 = pneg %p146
      %p309 = pneg %p143
      %p310 = pneg %p167
      %p311 = pneg %p164
      %p312 = pneg %p188
      %p313 = pneg %p185
      %p314 = pneg %p209
      %p315 = pneg %p206
      %p316 = pneg %p235
      %p317 = pneg %p232
      %p318 = scmp.lt.s32.totalorder %s20, 1
      %s319 = scalar_select %p318, %s20, 1
      %s320 = smul.addr %s319, 16
      %s321 = smul.addr %s320, 8
      %s322 = scalar_lea.vmem %s9, %s321
      %p323 = scmp.lt.s32.totalorder %s20, 1
      %s324 = scalar_select %p323, %s20, 1
      %s325 = smul.addr %s324, 16
      %s326 = smul.addr %s325, 4
      %s327 = scalar_lea.vmem %s0, %s326
      %p328 = scmp.lt.s32.totalorder %s20, 1
      %s329 = scalar_select %p328, %s20, 1
      %s330 = smul.addr %s329, 16
      %s331 = smul.addr %s330, 8
      %s332 = scalar_lea.vmem %s9, %s331
      %v334 = vld [vmem:[%s327] sm:$0xf]
      %v335 = vld [vmem:[%s327 + $0x4] sm:$0xf]
      %v336 = vld [vmem:[%s327 + $0x8] sm:$0xf]
      %v337 = vld [vmem:[%s327 + $0xc] sm:$0xf]
      %v338 = vld [vmem:[%s327 + $0x10] sm:$0xf]
      %v339 = vld [vmem:[%s327 + $0x14] sm:$0xf]
      %v340 = vld [vmem:[%s327 + $0x18] sm:$0xf]
      %v341 = vld [vmem:[%s327 + $0x1c] sm:$0xf]
      %v342 = vld [vmem:[%s327 + $0x20] sm:$0xf]
      %v343 = vld [vmem:[%s327 + $0x24] sm:$0xf]
      %v344 = vld [vmem:[%s327 + $0x28] sm:$0xf]
      %v345 = vld [vmem:[%s327 + $0x2c] sm:$0xf]
      %v346 = vld [vmem:[%s327 + $0x30] sm:$0xf]
      %v347 = vld [vmem:[%s327 + $0x34] sm:$0xf]
      %v348 = vld [vmem:[%s327 + $0x38] sm:$0xf]
      %v349 = vld [vmem:[%s327 + $0x3c] sm:$0xf]
      %v350 = vld [vmem:[%s1] sm:$0xf]
      %v351 = vld [vmem:[%s1 + $0x4] sm:$0xf]
      %v352 = vld [vmem:[%s1 + $0x8] sm:$0xf]
      %v353 = vld [vmem:[%s1 + $0xc] sm:$0xf]
      %v354 = vld [vmem:[%s1 + $0x10] sm:$0xf]
      %v355 = vld [vmem:[%s1 + $0x14] sm:$0xf]
      %v356 = vld [vmem:[%s1 + $0x18] sm:$0xf]
      %v357 = vld [vmem:[%s1 + $0x1c] sm:$0xf]
      %v358 = vld [vmem:[%s1 + $0x20] sm:$0xf]
      %v359 = vld [vmem:[%s1 + $0x24] sm:$0xf]
      %v360 = vld [vmem:[%s1 + $0x28] sm:$0xf]
      %v361 = vld [vmem:[%s1 + $0x2c] sm:$0xf]
      %v362 = vld [vmem:[%s1 + $0x30] sm:$0xf]
      %v363 = vld [vmem:[%s1 + $0x34] sm:$0xf]
      %v364 = vld [vmem:[%s1 + $0x38] sm:$0xf]
      %v365 = vld [vmem:[%s1 + $0x3c] sm:$0xf]
      %v366 = vld [vmem:[%s2] sm:$0xff]
      %v367 = vld [vmem:[%s2 + $0x8] sm:$0xff]
      %v368 = vld [vmem:[%s2 + $0x10] sm:$0xff]
      %v369 = vld [vmem:[%s2 + $0x18] sm:$0xff]
      %v370 = vld [vmem:[%s2 + $0x20] sm:$0xff]
      %v371 = vld [vmem:[%s2 + $0x28] sm:$0xff]
      %v372 = vld [vmem:[%s2 + $0x30] sm:$0xff]
      %v373 = vld [vmem:[%s2 + $0x38] sm:$0xff]
      %v374 = vld [vmem:[%s2 + $0x40] sm:$0xff]
      %v375 = vld [vmem:[%s2 + $0x48] sm:$0xff]
      %v376 = vld [vmem:[%s2 + $0x50] sm:$0xff]
      %v377 = vld [vmem:[%s2 + $0x58] sm:$0xff]
      %v378 = vld [vmem:[%s2 + $0x60] sm:$0xff]
      %v379 = vld [vmem:[%s2 + $0x68] sm:$0xff]
      %v380 = vld [vmem:[%s2 + $0x70] sm:$0xff]
      %v381 = vld [vmem:[%s2 + $0x78] sm:$0xff]
      %383 = vset.pattern.permute.xlu0 0
      %384 = vperm.xlu0 %383, %v366
      %v385 = vpop.permute.xlu0 %384
      %388 = vset.pattern.permute.xlu0 0
      %389 = vperm.xlu0 %388, %v367
      %v390 = vpop.permute.xlu0 %389
      %393 = vset.pattern.permute.xlu0 0
      %394 = vperm.xlu0 %393, %v368
      %v395 = vpop.permute.xlu0 %394
      %398 = vset.pattern.permute.xlu0 0
      %399 = vperm.xlu0 %398, %v369
      %v400 = vpop.permute.xlu0 %399
      %403 = vset.pattern.permute.xlu0 0
      %404 = vperm.xlu0 %403, %v370
      %v405 = vpop.permute.xlu0 %404
      %408 = vset.pattern.permute.xlu0 0
      %409 = vperm.xlu0 %408, %v371
      %v410 = vpop.permute.xlu0 %409
      %413 = vset.pattern.permute.xlu0 0
      %414 = vperm.xlu0 %413, %v372
      %v415 = vpop.permute.xlu0 %414
      %418 = vset.pattern.permute.xlu0 0
      %419 = vperm.xlu0 %418, %v373
      %v420 = vpop.permute.xlu0 %419
      %423 = vset.pattern.permute.xlu0 0
      %424 = vperm.xlu0 %423, %v374
      %v425 = vpop.permute.xlu0 %424
      %428 = vset.pattern.permute.xlu0 0
      %429 = vperm.xlu0 %428, %v375
      %v430 = vpop.permute.xlu0 %429
      %433 = vset.pattern.permute.xlu0 0
      %434 = vperm.xlu0 %433, %v376
      %v435 = vpop.permute.xlu0 %434
      %438 = vset.pattern.permute.xlu0 0
      %439 = vperm.xlu0 %438, %v377
      %v440 = vpop.permute.xlu0 %439
      %443 = vset.pattern.permute.xlu0 0
      %444 = vperm.xlu0 %443, %v378
      %v445 = vpop.permute.xlu0 %444
      %448 = vset.pattern.permute.xlu0 0
      %449 = vperm.xlu0 %448, %v379
      %v450 = vpop.permute.xlu0 %449
      %453 = vset.pattern.permute.xlu0 0
      %454 = vperm.xlu0 %453, %v380
      %v455 = vpop.permute.xlu0 %454
      %458 = vset.pattern.permute.xlu0 0
      %459 = vperm.xlu0 %458, %v381
      %v460 = vpop.permute.xlu0 %459
      %v478 = vunpack.c.l.b16 %v350
      %v479 = vunpack.c.l.b16 %v351
      %v480 = vunpack.c.l.b16 %v352
      %v481 = vunpack.c.l.b16 %v353
      %v482 = vunpack.c.l.b16 %v354
      %v483 = vunpack.c.l.b16 %v355
      %v484 = vunpack.c.l.b16 %v356
      %v485 = vunpack.c.l.b16 %v357
      %v486 = vunpack.c.l.b16 %v358
      %v487 = vunpack.c.l.b16 %v359
      %v488 = vunpack.c.l.b16 %v360
      %v489 = vunpack.c.l.b16 %v361
      %v490 = vunpack.c.l.b16 %v362
      %v491 = vunpack.c.l.b16 %v363
      %v492 = vunpack.c.l.b16 %v364
      %v493 = vunpack.c.l.b16 %v365
      %v494 = vpack.c.b16 %v479, %v478
      %v495 = vpack.c.b16 %v481, %v480
      %v496 = vpack.c.b16 %v483, %v482
      %v497 = vpack.c.b16 %v485, %v484
      %v498 = vpack.c.b16 %v487, %v486
      %v499 = vpack.c.b16 %v489, %v488
      %v500 = vpack.c.b16 %v491, %v490
      %v501 = vpack.c.b16 %v493, %v492
      %v526 = vunpack.c.l.b16 %v334
      %v527 = vunpack.c.l.b16 %v335
      %v528 = vunpack.c.l.b16 %v336
      %v529 = vunpack.c.l.b16 %v337
      %v530 = vunpack.c.l.b16 %v338
      %v531 = vunpack.c.l.b16 %v339
      %v532 = vunpack.c.l.b16 %v340
      %v533 = vunpack.c.l.b16 %v341
      %v534 = vunpack.c.l.b16 %v342
      %v535 = vunpack.c.l.b16 %v343
      %v536 = vunpack.c.l.b16 %v344
      %v537 = vunpack.c.l.b16 %v345
      %v538 = vunpack.c.l.b16 %v346
      %v539 = vunpack.c.l.b16 %v347
      %v540 = vunpack.c.l.b16 %v348
      %v541 = vunpack.c.l.b16 %v349
      %v542 = vpack.c.b16 %v527, %v526
      %v543 = vpack.c.b16 %v529, %v528
      %v544 = vpack.c.b16 %v531, %v530
      %v545 = vpack.c.b16 %v533, %v532
      %v546 = vpack.c.b16 %v535, %v534
      %v547 = vpack.c.b16 %v537, %v536
      %v548 = vpack.c.b16 %v539, %v538
      %v549 = vpack.c.b16 %v541, %v540
      %558 = vmatprep.subr.bf16.mxu0 0
      %559 = vmatpush1.bf16.msra.mxu0 %v542
      %560 = vmatprep.subr.bf16.mxu0 0
      %561 = vmatpush1.bf16.msra.mxu0 %v543
      %562 = vmatprep.subr.bf16.mxu0 0
      %563 = vmatpush1.bf16.msra.mxu0 %v544
      %564 = vmatprep.subr.bf16.mxu0 0
      %565 = vmatpush1.bf16.msra.mxu0 %v545
      %566 = vmatprep.subr.bf16.mxu0 0
      %567 = vmatpush1.bf16.msra.mxu0 %v546
      %568 = vmatprep.subr.bf16.mxu0 0
      %569 = vmatpush1.bf16.msra.mxu0 %v547
      %570 = vmatprep.subr.bf16.mxu0 0
      %571 = vmatpush1.bf16.msra.mxu0 %v548
      %572 = vmatprep.subr.bf16.mxu0 0
      %573 = vmatpush1.bf16.msra.mxu0 %v549
      %574 = vmatprep.subr.bf16.mxu0 0
      %575 = vmatpush1.bf16.msra.mxu0 0
      %576 = vmatprep.subr.bf16.mxu0 0
      %577 = vmatpush1.bf16.msra.mxu0 0
      %578 = vmatprep.subr.bf16.mxu0 0
      %579 = vmatpush1.bf16.msra.mxu0 0
      %580 = vmatprep.subr.bf16.mxu0 0
      %581 = vmatpush1.bf16.msra.mxu0 0
      %582 = vmatprep.subr.bf16.mxu0 0
      %583 = vmatpush1.bf16.msra.mxu0 0
      %584 = vmatprep.subr.bf16.mxu0 0
      %585 = vmatpush1.bf16.msra.mxu0 0
      %586 = vmatprep.subr.bf16.mxu0 0
      %587 = vmatpush1.bf16.msra.mxu0 0
      %588 = vmatprep.subr.bf16.mxu0 0
      %589 = vmatpush1.bf16.msra.mxu0 0
      %590 = vmatprep.mubr.bf16.mxu0 0
      %591 = vmatmul.mubr.bf16.gmra.mrb[0].mxu0 %v494
      %v592 = vpop.f32.mrb[0].mxu0
      %v593 = vadd.f32 %v385, %v592
      %v594 = vpop.f32.mrb[0].mxu0
      %v595 = vpop.f32.mrb[0].mxu0
      %v596 = vadd.f32 %v390, %v595
      %v597 = vpop.f32.mrb[0].mxu0
      %598 = vmatprep.mubr.bf16.mxu0 0
      %599 = vmatmul.mubr.bf16.gmra.mrb[0].mxu0 %v495
      %v600 = vpop.f32.mrb[0].mxu0
      %v601 = vadd.f32 %v395, %v600
      %v602 = vpop.f32.mrb[0].mxu0
      %v603 = vpop.f32.mrb[0].mxu0
      %v604 = vadd.f32 %v400, %v603
      %v605 = vpop.f32.mrb[0].mxu0
      %606 = vmatprep.mubr.bf16.mxu0 0
      %607 = vmatmul.mubr.bf16.gmra.mrb[0].mxu0 %v496
      %v608 = vpop.f32.mrb[0].mxu0
      %v609 = vadd.f32 %v405, %v608
      %v610 = vpop.f32.mrb[0].mxu0
      %v611 = vpop.f32.mrb[0].mxu0
      %v612 = vadd.f32 %v410, %v611
      %v613 = vpop.f32.mrb[0].mxu0
      %614 = vmatprep.mubr.bf16.mxu0 0
      %615 = vmatmul.mubr.bf16.gmra.mrb[0].mxu0 %v497
      %v616 = vpop.f32.mrb[0].mxu0
      %v617 = vadd.f32 %v415, %v616
      %v618 = vpop.f32.mrb[0].mxu0
      %v619 = vpop.f32.mrb[0].mxu0
      %v620 = vadd.f32 %v420, %v619
      %v621 = vpop.f32.mrb[0].mxu0
      %622 = vmatprep.mubr.bf16.mxu0 0
      %623 = vmatmul.mubr.bf16.gmra.mrb[0].mxu0 %v498
      %v624 = vpop.f32.mrb[0].mxu0
      %v625 = vadd.f32 %v425, %v624
      %v626 = vpop.f32.mrb[0].mxu0
      %v627 = vpop.f32.mrb[0].mxu0
      %v628 = vadd.f32 %v430, %v627
      %v629 = vpop.f32.mrb[0].mxu0
      %630 = vmatprep.mubr.bf16.mxu0 0
      %631 = vmatmul.mubr.bf16.gmra.mrb[0].mxu0 %v499
      %v632 = vpop.f32.mrb[0].mxu0
      %v633 = vadd.f32 %v435, %v632
      %v634 = vpop.f32.mrb[0].mxu0
      %v635 = vpop.f32.mrb[0].mxu0
      %v636 = vadd.f32 %v440, %v635
      %v637 = vpop.f32.mrb[0].mxu0
      %638 = vmatprep.mubr.bf16.mxu0 0
      %639 = vmatmul.mubr.bf16.gmra.mrb[0].mxu0 %v500
      %v640 = vpop.f32.mrb[0].mxu0
      %v641 = vadd.f32 %v445, %v640
      %v642 = vpop.f32.mrb[0].mxu0
      %v643 = vpop.f32.mrb[0].mxu0
      %v644 = vadd.f32 %v450, %v643
      %v645 = vpop.f32.mrb[0].mxu0
      %646 = vmatprep.mubr.bf16.mxu0 0
      %647 = vmatmul.mubr.bf16.gmra.mrb[0].mxu0 %v501
      %v648 = vpop.f32.mrb[0].mxu0
      %v649 = vadd.f32 %v455, %v648
      %v650 = vpop.f32.mrb[0].mxu0
      %v651 = vpop.f32.mrb[0].mxu0
      %v652 = vadd.f32 %v460, %v651
      %v653 = vpop.f32.mrb[0].mxu0
      %654 = vdwg.mxu0
      %655 = vst [vmem:[#allocation2] sm:$0xff] %v593
      %656 = vst [vmem:[#allocation2 + $0x8] sm:$0xff] %v596
      %657 = vst [vmem:[#allocation2 + $0x10] sm:$0xff] %v601
      %658 = vst [vmem:[#allocation2 + $0x18] sm:$0xff] %v604
      %659 = vst [vmem:[#allocation2 + $0x20] sm:$0xff] %v609
      %660 = vst [vmem:[#allocation2 + $0x28] sm:$0xff] %v612
      %661 = vst [vmem:[#allocation2 + $0x30] sm:$0xff] %v617
      %662 = vst [vmem:[#allocation2 + $0x38] sm:$0xff] %v620
      %663 = vst [vmem:[#allocation2 + $0x40] sm:$0xff] %v625
      %664 = vst [vmem:[#allocation2 + $0x48] sm:$0xff] %v628
      %665 = vst [vmem:[#allocation2 + $0x50] sm:$0xff] %v633
      %666 = vst [vmem:[#allocation2 + $0x58] sm:$0xff] %v636
      %667 = vst [vmem:[#allocation2 + $0x60] sm:$0xff] %v641
      %668 = vst [vmem:[#allocation2 + $0x68] sm:$0xff] %v644
      %669 = vst [vmem:[#allocation2 + $0x70] sm:$0xff] %v649
      %670 = vst [vmem:[#allocation2 + $0x78] sm:$0xff] %v652
      %v671 = vlaneseq
      %v672 = vand.u32 %v671, 127
      %v673 = vld [vmem:[#allocation2] sm:$0xff]
      %v674 = vld [vmem:[#allocation2 + $0x8] sm:$0xff]
      %v675 = vld [vmem:[#allocation2 + $0x10] sm:$0xff]
      %v676 = vld [vmem:[#allocation2 + $0x18] sm:$0xff]
      %v677 = vld [vmem:[#allocation2 + $0x20] sm:$0xff]
      %v678 = vld [vmem:[#allocation2 + $0x28] sm:$0xff]
      %v679 = vld [vmem:[#allocation2 + $0x30] sm:$0xff]
      %v680 = vld [vmem:[#allocation2 + $0x38] sm:$0xff]
      %v681 = vld [vmem:[#allocation2 + $0x40] sm:$0xff]
      %v682 = vld [vmem:[#allocation2 + $0x48] sm:$0xff]
      %v683 = vld [vmem:[#allocation2 + $0x50] sm:$0xff]
      %v684 = vld [vmem:[#allocation2 + $0x58] sm:$0xff]
      %v685 = vld [vmem:[#allocation2 + $0x60] sm:$0xff]
      %v686 = vld [vmem:[#allocation2 + $0x68] sm:$0xff]
      %v687 = vld [vmem:[#allocation2 + $0x70] sm:$0xff]
      %v688 = vld [vmem:[#allocation2 + $0x78] sm:$0xff]
      %v689 = vpack.c.bf16 %v674, %v673
      %v690 = vpack.c.bf16 %v676, %v675
      %v691 = vpack.c.bf16 %v678, %v677
      %v692 = vpack.c.bf16 %v680, %v679
      %v693 = vpack.c.bf16 %v682, %v681
      %v694 = vpack.c.bf16 %v684, %v683
      %v695 = vpack.c.bf16 %v686, %v685
      %v696 = vpack.c.bf16 %v688, %v687
      %v697 = vld [vmem:[%s3] sm:$0xf]
      %v698 = vld [vmem:[%s3 + $0x4] sm:$0xf]
      %v699 = vld [vmem:[%s3 + $0x8] sm:$0xf]
      %v700 = vld [vmem:[%s3 + $0xc] sm:$0xf]
      %v701 = vld [vmem:[%s3 + $0x10] sm:$0xf]
      %v702 = vld [vmem:[%s3 + $0x14] sm:$0xf]
      %v703 = vld [vmem:[%s3 + $0x18] sm:$0xf]
      %v704 = vld [vmem:[%s3 + $0x1c] sm:$0xf]
      %v705 = vld [vmem:[%s3 + $0x20] sm:$0xf]
      %v706 = vld [vmem:[%s3 + $0x24] sm:$0xf]
      %v707 = vld [vmem:[%s3 + $0x28] sm:$0xf]
      %v708 = vld [vmem:[%s3 + $0x2c] sm:$0xf]
      %v709 = vld [vmem:[%s3 + $0x30] sm:$0xf]
      %v710 = vld [vmem:[%s3 + $0x34] sm:$0xf]
      %v711 = vld [vmem:[%s3 + $0x38] sm:$0xf]
      %v712 = vld [vmem:[%s3 + $0x3c] sm:$0xf]
      %v713 = vld [vmem:[%s3 + $0x40] sm:$0xf]
      %v714 = vld [vmem:[%s3 + $0x44] sm:$0xf]
      %v715 = vld [vmem:[%s3 + $0x48] sm:$0xf]
      %v716 = vld [vmem:[%s3 + $0x4c] sm:$0xf]
      %v717 = vld [vmem:[%s3 + $0x50] sm:$0xf]
      %v718 = vld [vmem:[%s3 + $0x54] sm:$0xf]
      %v719 = vld [vmem:[%s3 + $0x58] sm:$0xf]
      %v720 = vld [vmem:[%s3 + $0x5c] sm:$0xf]
      %v721 = vld [vmem:[%s3 + $0x60] sm:$0xf]
      %v722 = vld [vmem:[%s3 + $0x64] sm:$0xf]
      %v723 = vld [vmem:[%s3 + $0x68] sm:$0xf]
      %v724 = vld [vmem:[%s3 + $0x6c] sm:$0xf]
      %v725 = vld [vmem:[%s3 + $0x70] sm:$0xf]
      %v726 = vld [vmem:[%s3 + $0x74] sm:$0xf]
      %v727 = vld [vmem:[%s3 + $0x78] sm:$0xf]
      %v728 = vld [vmem:[%s3 + $0x7c] sm:$0xf]
      %v729 = vld [vmem:[%s3 + $0x80] sm:$0xf]
      %v730 = vld [vmem:[%s3 + $0x84] sm:$0xf]
      %v731 = vld [vmem:[%s3 + $0x88] sm:$0xf]
      %v732 = vld [vmem:[%s3 + $0x8c] sm:$0xf]
      %v733 = vld [vmem:[%s3 + $0x90] sm:$0xf]
      %v734 = vld [vmem:[%s3 + $0x94] sm:$0xf]
      %v735 = vld [vmem:[%s3 + $0x98] sm:$0xf]
      %v736 = vld [vmem:[%s3 + $0x9c] sm:$0xf]
      %v737 = vld [vmem:[%s3 + $0xa0] sm:$0xf]
      %v738 = vld [vmem:[%s3 + $0xa4] sm:$0xf]
      %v739 = vld [vmem:[%s3 + $0xa8] sm:$0xf]
      %v740 = vld [vmem:[%s3 + $0xac] sm:$0xf]
      %v741 = vld [vmem:[%s3 + $0xb0] sm:$0xf]
      %v742 = vld [vmem:[%s3 + $0xb4] sm:$0xf]
      %v743 = vld [vmem:[%s3 + $0xb8] sm:$0xf]
      %v744 = vld [vmem:[%s3 + $0xbc] sm:$0xf]
      %v793 = vunpack.c.l.b16 %v697
      %v794 = vunpack.c.l.b16 %v698
      %v795 = vunpack.c.l.b16 %v699
      %v796 = vunpack.c.l.b16 %v700
      %v797 = vunpack.c.l.b16 %v701
      %v798 = vunpack.c.l.b16 %v702
      %v799 = vunpack.c.l.b16 %v703
      %v800 = vunpack.c.l.b16 %v704
      %v801 = vunpack.c.l.b16 %v705
      %v802 = vunpack.c.l.b16 %v706
      %v803 = vunpack.c.l.b16 %v707
      %v804 = vunpack.c.l.b16 %v708
      %v805 = vunpack.c.l.b16 %v709
      %v806 = vunpack.c.l.b16 %v710
      %v807 = vunpack.c.l.b16 %v711
      %v808 = vunpack.c.l.b16 %v712
      %v809 = vunpack.c.l.b16 %v713
      %v810 = vunpack.c.l.b16 %v714
      %v811 = vunpack.c.l.b16 %v715
      %v812 = vunpack.c.l.b16 %v716
      %v813 = vunpack.c.l.b16 %v717
      %v814 = vunpack.c.l.b16 %v718
      %v815 = vunpack.c.l.b16 %v719
      %v816 = vunpack.c.l.b16 %v720
      %v817 = vunpack.c.l.b16 %v721
      %v818 = vunpack.c.l.b16 %v722
      %v819 = vunpack.c.l.b16 %v723
      %v820 = vunpack.c.l.b16 %v724
      %v821 = vunpack.c.l.b16 %v725
      %v822 = vunpack.c.l.b16 %v726
      %v823 = vunpack.c.l.b16 %v727
      %v824 = vunpack.c.l.b16 %v728
      %v825 = vunpack.c.l.b16 %v729
      %v826 = vunpack.c.l.b16 %v730
      %v827 = vunpack.c.l.b16 %v731
      %v828 = vunpack.c.l.b16 %v732
      %v829 = vunpack.c.l.b16 %v733
      %v830 = vunpack.c.l.b16 %v734
      %v831 = vunpack.c.l.b16 %v735
      %v832 = vunpack.c.l.b16 %v736
      %v833 = vunpack.c.l.b16 %v737
      %v834 = vunpack.c.l.b16 %v738
      %v835 = vunpack.c.l.b16 %v739
      %v836 = vunpack.c.l.b16 %v740
      %v837 = vunpack.c.l.b16 %v741
      %v838 = vunpack.c.l.b16 %v742
      %v839 = vunpack.c.l.b16 %v743
      %v840 = vunpack.c.l.b16 %v744
      %v841 = vpack.c.b16 %v794, %v793
      %v842 = vpack.c.b16 %v796, %v795
      %v843 = vpack.c.b16 %v798, %v797
      %v844 = vpack.c.b16 %v800, %v799
      %v845 = vpack.c.b16 %v802, %v801
      %v846 = vpack.c.b16 %v804, %v803
      %v847 = vpack.c.b16 %v806, %v805
      %v848 = vpack.c.b16 %v808, %v807
      %v849 = vpack.c.b16 %v810, %v809
      %v850 = vpack.c.b16 %v812, %v811
      %v851 = vpack.c.b16 %v814, %v813
      %v852 = vpack.c.b16 %v816, %v815
      %v853 = vpack.c.b16 %v818, %v817
      %v854 = vpack.c.b16 %v820, %v819
      %v855 = vpack.c.b16 %v822, %v821
      %v856 = vpack.c.b16 %v824, %v823
      %v857 = vpack.c.b16 %v826, %v825
      %v858 = vpack.c.b16 %v828, %v827
      %v859 = vpack.c.b16 %v830, %v829
      %v860 = vpack.c.b16 %v832, %v831
      %v861 = vpack.c.b16 %v834, %v833
      %v862 = vpack.c.b16 %v836, %v835
      %v863 = vpack.c.b16 %v838, %v837
      %v864 = vpack.c.b16 %v840, %v839
      %889 = vmatprep.subr.bf16.mxu0 0
      %890 = vmatpush1.bf16.msra.mxu0 %v689
      %891 = vmatprep.subr.bf16.mxu0 0
      %892 = vmatpush1.bf16.msra.mxu0 %v690
      %893 = vmatprep.subr.bf16.mxu0 0
      %894 = vmatpush1.bf16.msra.mxu0 %v691
      %895 = vmatprep.subr.bf16.mxu0 0
      %896 = vmatpush1.bf16.msra.mxu0 %v692
      %897 = vmatprep.subr.bf16.mxu0 0
      %898 = vmatpush1.bf16.msra.mxu0 %v693
      %899 = vmatprep.subr.bf16.mxu0 0
      %900 = vmatpush1.bf16.msra.mxu0 %v694
      %901 = vmatprep.subr.bf16.mxu0 0
      %902 = vmatpush1.bf16.msra.mxu0 %v695
      %903 = vmatprep.subr.bf16.mxu0 0
      %904 = vmatpush1.bf16.msra.mxu0 %v696
      %905 = vmatprep.subr.bf16.mxu0 0
      %906 = vmatpush1.bf16.msra.mxu0 0
      %907 = vmatprep.subr.bf16.mxu0 0
      %908 = vmatpush1.bf16.msra.mxu0 0
      %909 = vmatprep.subr.bf16.mxu0 0
      %910 = vmatpush1.bf16.msra.mxu0 0
      %911 = vmatprep.subr.bf16.mxu0 0
      %912 = vmatpush1.bf16.msra.mxu0 0
      %913 = vmatprep.subr.bf16.mxu0 0
      %914 = vmatpush1.bf16.msra.mxu0 0
      %915 = vmatprep.subr.bf16.mxu0 0
      %916 = vmatpush1.bf16.msra.mxu0 0
      %917 = vmatprep.subr.bf16.mxu0 0
      %918 = vmatpush1.bf16.msra.mxu0 0
      %919 = vmatprep.subr.bf16.mxu0 0
      %920 = vmatpush1.bf16.msra.mxu0 0
      %921 = vmatprep.mubr.bf16.mxu0 0
      %922 = vmatmul.mubr.bf16.gmra.mrb[0].mxu0 %v841
      %v923 = vpop.f32.mrb[0].mxu0
      %v924 = vadd.f32 0.0, %v923
      %v925 = vpop.f32.mrb[0].mxu0
      %v926 = vpop.f32.mrb[0].mxu0
      %v927 = vadd.f32 0.0, %v926
      %v928 = vpop.f32.mrb[0].mxu0
      %929 = vmatprep.mubr.bf16.mxu0 0
      %930 = vmatmul.mubr.bf16.gmra.mrb[0].mxu0 %v842
      %v931 = vpop.f32.mrb[0].mxu0
      %v932 = vadd.f32 0.0, %v931
      %v933 = vpop.f32.mrb[0].mxu0
      %v934 = vpop.f32.mrb[0].mxu0
      %v935 = vadd.f32 0.0, %v934
      %v936 = vpop.f32.mrb[0].mxu0
      %937 = vmatprep.mubr.bf16.mxu0 0
      %938 = vmatmul.mubr.bf16.gmra.mrb[0].mxu0 %v843
      %v939 = vpop.f32.mrb[0].mxu0
      %v940 = vadd.f32 0.0, %v939
      %v941 = vpop.f32.mrb[0].mxu0
      %v942 = vpop.f32.mrb[0].mxu0
      %v943 = vadd.f32 0.0, %v942
      %v944 = vpop.f32.mrb[0].mxu0
      %945 = vmatprep.mubr.bf16.mxu0 0
      %946 = vmatmul.mubr.bf16.gmra.mrb[0].mxu0 %v844
      %v947 = vpop.f32.mrb[0].mxu0
      %v948 = vadd.f32 0.0, %v947
      %v949 = vpop.f32.mrb[0].mxu0
      %v950 = vpop.f32.mrb[0].mxu0
      %v951 = vadd.f32 0.0, %v950
      %v952 = vpop.f32.mrb[0].mxu0
      %953 = vmatprep.mubr.bf16.mxu0 0
      %954 = vmatmul.mubr.bf16.gmra.mrb[0].mxu0 %v845
      %v955 = vpop.f32.mrb[0].mxu0
      %v956 = vadd.f32 0.0, %v955
      %v957 = vpop.f32.mrb[0].mxu0
      %v958 = vpop.f32.mrb[0].mxu0
      %v959 = vadd.f32 0.0, %v958
      %v960 = vpop.f32.mrb[0].mxu0
      %961 = vmatprep.mubr.bf16.mxu0 0
      %962 = vmatmul.mubr.bf16.gmra.mrb[0].mxu0 %v846
      %v963 = vpop.f32.mrb[0].mxu0
      %v964 = vadd.f32 0.0, %v963
      %v965 = vpop.f32.mrb[0].mxu0
      %v966 = vpop.f32.mrb[0].mxu0
      %v967 = vadd.f32 0.0, %v966
      %v968 = vpop.f32.mrb[0].mxu0
      %969 = vmatprep.mubr.bf16.mxu0 0
      %970 = vmatmul.mubr.bf16.gmra.mrb[0].mxu0 %v847
      %v971 = vpop.f32.mrb[0].mxu0
      %v972 = vadd.f32 0.0, %v971
      %v973 = vpop.f32.mrb[0].mxu0
      %v974 = vpop.f32.mrb[0].mxu0
      %v975 = vadd.f32 0.0, %v974
      %v976 = vpop.f32.mrb[0].mxu0
      %977 = vmatprep.mubr.bf16.mxu0 0
      %978 = vmatmul.mubr.bf16.gmra.mrb[0].mxu0 %v848
      %v979 = vpop.f32.mrb[0].mxu0
      %v980 = vadd.f32 0.0, %v979
      %v981 = vpop.f32.mrb[0].mxu0
      %v982 = vpop.f32.mrb[0].mxu0
      %v983 = vadd.f32 0.0, %v982
      %v984 = vpop.f32.mrb[0].mxu0
      %985 = vmatprep.mubr.bf16.mxu0 0
      %986 = vmatmul.mubr.bf16.gmra.mrb[0].mxu0 %v849
      %v987 = vpop.f32.mrb[0].mxu0
      %v988 = vadd.f32 0.0, %v987
      %v989 = vpop.f32.mrb[0].mxu0
      %v990 = vpop.f32.mrb[0].mxu0
      %v991 = vadd.f32 0.0, %v990
      %v992 = vpop.f32.mrb[0].mxu0
      %993 = vmatprep.mubr.bf16.mxu0 0
      %994 = vmatmul.mubr.bf16.gmra.mrb[0].mxu0 %v850
      %v995 = vpop.f32.mrb[0].mxu0
      %v996 = vadd.f32 0.0, %v995
      %v997 = vpop.f32.mrb[0].mxu0
      %v998 = vpop.f32.mrb[0].mxu0
      %v999 = vadd.f32 0.0, %v998
      %v1000 = vpop.f32.mrb[0].mxu0
      %1001 = vmatprep.mubr.bf16.mxu0 0
      %1002 = vmatmul.mubr.bf16.gmra.mrb[0].mxu0 %v851
      %v1003 = vpop.f32.mrb[0].mxu0
      %v1004 = vadd.f32 0.0, %v1003
      %v1005 = vpop.f32.mrb[0].mxu0
      %v1006 = vpop.f32.mrb[0].mxu0
      %v1007 = vadd.f32 0.0, %v1006
      %v1008 = vpop.f32.mrb[0].mxu0
      %1009 = vmatprep.mubr.bf16.mxu0 0
      %1010 = vmatmul.mubr.bf16.gmra.mrb[0].mxu0 %v852
      %v1011 = vpop.f32.mrb[0].mxu0
      %v1012 = vadd.f32 0.0, %v1011
      %v1013 = vpop.f32.mrb[0].mxu0
      %v1014 = vpop.f32.mrb[0].mxu0
      %v1015 = vadd.f32 0.0, %v1014
      %v1016 = vpop.f32.mrb[0].mxu0
      %1017 = vmatprep.mubr.bf16.mxu0 0
      %1018 = vmatmul.mubr.bf16.gmra.mrb[0].mxu0 %v853
      %v1019 = vpop.f32.mrb[0].mxu0
      %v1020 = vadd.f32 0.0, %v1019
      %v1021 = vpop.f32.mrb[0].mxu0
      %v1022 = vpop.f32.mrb[0].mxu0
      %v1023 = vadd.f32 0.0, %v1022
      %v1024 = vpop.f32.mrb[0].mxu0
      %1025 = vmatprep.mubr.bf16.mxu0 0
      %1026 = vmatmul.mubr.bf16.gmra.mrb[0].mxu0 %v854
      %v1027 = vpop.f32.mrb[0].mxu0
      %v1028 = vadd.f32 0.0, %v1027
      %v1029 = vpop.f32.mrb[0].mxu0
      %v1030 = vpop.f32.mrb[0].mxu0
      %v1031 = vadd.f32 0.0, %v1030
      %v1032 = vpop.f32.mrb[0].mxu0
      %1033 = vmatprep.mubr.bf16.mxu0 0
      %1034 = vmatmul.mubr.bf16.gmra.mrb[0].mxu0 %v855
      %v1035 = vpop.f32.mrb[0].mxu0
      %v1036 = vadd.f32 0.0, %v1035
      %v1037 = vpop.f32.mrb[0].mxu0
      %v1038 = vpop.f32.mrb[0].mxu0
      %v1039 = vadd.f32 0.0, %v1038
      %v1040 = vpop.f32.mrb[0].mxu0
      %1041 = vmatprep.mubr.bf16.mxu0 0
      %1042 = vmatmul.mubr.bf16.gmra.mrb[0].mxu0 %v856
      %v1043 = vpop.f32.mrb[0].mxu0
      %v1044 = vadd.f32 0.0, %v1043
      %v1045 = vpop.f32.mrb[0].mxu0
      %v1046 = vpop.f32.mrb[0].mxu0
      %v1047 = vadd.f32 0.0, %v1046
      %v1048 = vpop.f32.mrb[0].mxu0
      %1049 = vmatprep.mubr.bf16.mxu0 0
      %1050 = vmatmul.mubr.bf16.gmra.mrb[0].mxu0 %v857
      %v1051 = vpop.f32.mrb[0].mxu0
      %v1052 = vadd.f32 0.0, %v1051
      %v1053 = vpop.f32.mrb[0].mxu0
      %v1054 = vpop.f32.mrb[0].mxu0
      %v1055 = vadd.f32 0.0, %v1054
      %v1056 = vpop.f32.mrb[0].mxu0
      %1057 = vmatprep.mubr.bf16.mxu0 0
      %1058 = vmatmul.mubr.bf16.gmra.mrb[0].mxu0 %v858
      %v1059 = vpop.f32.mrb[0].mxu0
      %v1060 = vadd.f32 0.0, %v1059
      %v1061 = vpop.f32.mrb[0].mxu0
      %v1062 = vpop.f32.mrb[0].mxu0
      %v1063 = vadd.f32 0.0, %v1062
      %v1064 = vpop.f32.mrb[0].mxu0
      %1065 = vmatprep.mubr.bf16.mxu0 0
      %1066 = vmatmul.mubr.bf16.gmra.mrb[0].mxu0 %v859
      %v1067 = vpop.f32.mrb[0].mxu0
      %v1068 = vadd.f32 0.0, %v1067
      %v1069 = vpop.f32.mrb[0].mxu0
      %v1070 = vpop.f32.mrb[0].mxu0
      %v1071 = vadd.f32 0.0, %v1070
      %v1072 = vpop.f32.mrb[0].mxu0
      %1073 = vmatprep.mubr.bf16.mxu0 0
      %1074 = vmatmul.mubr.bf16.gmra.mrb[0].mxu0 %v860
      %v1075 = vpop.f32.mrb[0].mxu0
      %v1076 = vadd.f32 0.0, %v1075
      %v1077 = vpop.f32.mrb[0].mxu0
      %v1078 = vpop.f32.mrb[0].mxu0
      %v1079 = vadd.f32 0.0, %v1078
      %v1080 = vpop.f32.mrb[0].mxu0
      %1081 = vmatprep.mubr.bf16.mxu0 0
      %1082 = vmatmul.mubr.bf16.gmra.mrb[0].mxu0 %v861
      %v1083 = vpop.f32.mrb[0].mxu0
      %v1084 = vadd.f32 0.0, %v1083
      %v1085 = vpop.f32.mrb[0].mxu0
      %v1086 = vpop.f32.mrb[0].mxu0
      %v1087 = vadd.f32 0.0, %v1086
      %v1088 = vpop.f32.mrb[0].mxu0
      %1089 = vmatprep.mubr.bf16.mxu0 0
      %1090 = vmatmul.mubr.bf16.gmra.mrb[0].mxu0 %v862
      %v1091 = vpop.f32.mrb[0].mxu0
      %v1092 = vadd.f32 0.0, %v1091
      %v1093 = vpop.f32.mrb[0].mxu0
      %v1094 = vpop.f32.mrb[0].mxu0
      %v1095 = vadd.f32 0.0, %v1094
      %v1096 = vpop.f32.mrb[0].mxu0
      %1097 = vmatprep.mubr.bf16.mxu0 0
      %1098 = vmatmul.mubr.bf16.gmra.mrb[0].mxu0 %v863
      %v1099 = vpop.f32.mrb[0].mxu0
      %v1100 = vadd.f32 0.0, %v1099
      %v1101 = vpop.f32.mrb[0].mxu0
      %v1102 = vpop.f32.mrb[0].mxu0
      %v1103 = vadd.f32 0.0, %v1102
      %v1104 = vpop.f32.mrb[0].mxu0
      %1105 = vmatprep.mubr.bf16.mxu0 0
      %1106 = vmatmul.mubr.bf16.gmra.mrb[0].mxu0 %v864
      %v1107 = vpop.f32.mrb[0].mxu0
      %v1108 = vadd.f32 0.0, %v1107
      %v1109 = vpop.f32.mrb[0].mxu0
      %v1110 = vpop.f32.mrb[0].mxu0
      %v1111 = vadd.f32 0.0, %v1110
      %v1112 = vpop.f32.mrb[0].mxu0
      %1113 = vdwg.mxu0
      %1114 = vrot.lane.b32.xlu0 %v924, 1
      %v1115 = vpop.permute.xlu0 %1114
      %1116 = vrot.lane.b32.xlu0 %v927, 1
      %v1117 = vpop.permute.xlu0 %1116
      %1118 = vrot.lane.b32.xlu0 %v932, 1
      %v1119 = vpop.permute.xlu0 %1118
      %1120 = vrot.lane.b32.xlu0 %v935, 1
      %v1121 = vpop.permute.xlu0 %1120
      %1122 = vrot.lane.b32.xlu0 %v940, 1
      %v1123 = vpop.permute.xlu0 %1122
      %1124 = vrot.lane.b32.xlu0 %v943, 1
      %v1125 = vpop.permute.xlu0 %1124
      %1126 = vrot.lane.b32.xlu0 %v948, 1
      %v1127 = vpop.permute.xlu0 %1126
      %1128 = vrot.lane.b32.xlu0 %v951, 1
      %v1129 = vpop.permute.xlu0 %1128
      %1130 = vrot.lane.b32.xlu0 %v956, 1
      %v1131 = vpop.permute.xlu0 %1130
      %1132 = vrot.lane.b32.xlu0 %v959, 1
      %v1133 = vpop.permute.xlu0 %1132
      %1134 = vrot.lane.b32.xlu0 %v964, 1
      %v1135 = vpop.permute.xlu0 %1134
      %1136 = vrot.lane.b32.xlu0 %v967, 1
      %v1137 = vpop.permute.xlu0 %1136
      %1138 = vrot.lane.b32.xlu0 %v972, 1
      %v1139 = vpop.permute.xlu0 %1138
      %1140 = vrot.lane.b32.xlu0 %v975, 1
      %v1141 = vpop.permute.xlu0 %1140
      %1142 = vrot.lane.b32.xlu0 %v980, 1
      %v1143 = vpop.permute.xlu0 %1142
      %1144 = vrot.lane.b32.xlu0 %v983, 1
      %v1145 = vpop.permute.xlu0 %1144
      %1146 = vrot.lane.b32.xlu0 %v1052, 127
      %v1147 = vpop.permute.xlu0 %1146
      %1148 = vrot.lane.b32.xlu0 %v1055, 127
      %v1149 = vpop.permute.xlu0 %1148
      %1150 = vrot.lane.b32.xlu0 %v1060, 127
      %v1151 = vpop.permute.xlu0 %1150
      %1152 = vrot.lane.b32.xlu0 %v1063, 127
      %v1153 = vpop.permute.xlu0 %1152
      %1154 = vrot.lane.b32.xlu0 %v1068, 127
      %v1155 = vpop.permute.xlu0 %1154
      %1156 = vrot.lane.b32.xlu0 %v1071, 127
      %v1157 = vpop.permute.xlu0 %1156
      %1158 = vrot.lane.b32.xlu0 %v1076, 127
      %v1159 = vpop.permute.xlu0 %1158
      %1160 = vrot.lane.b32.xlu0 %v1079, 127
      %v1161 = vpop.permute.xlu0 %1160
      %1162 = vrot.lane.b32.xlu0 %v1084, 127
      %v1163 = vpop.permute.xlu0 %1162
      %1164 = vrot.lane.b32.xlu0 %v1087, 127
      %v1165 = vpop.permute.xlu0 %1164
      %1166 = vrot.lane.b32.xlu0 %v1092, 127
      %v1167 = vpop.permute.xlu0 %1166
      %1168 = vrot.lane.b32.xlu0 %v1095, 127
      %v1169 = vpop.permute.xlu0 %1168
      %1170 = vrot.lane.b32.xlu0 %v1100, 127
      %v1171 = vpop.permute.xlu0 %1170
      %1172 = vrot.lane.b32.xlu0 %v1103, 127
      %v1173 = vpop.permute.xlu0 %1172
      %1174 = vrot.lane.b32.xlu0 %v1108, 127
      %v1175 = vpop.permute.xlu0 %1174
      %1176 = vrot.lane.b32.xlu0 %v1111, 127
      %v1177 = vpop.permute.xlu0 %1176
      %v1178 = vld [vmem:[%s4] sm:$0xff]
      %v1179 = vld [vmem:[%s4 + $0x8] sm:$0xff]
      %v1180 = vld [vmem:[%s4 + $0x10] sm:$0xff]
      %v1181 = vld [vmem:[%s4 + $0x18] sm:$0xff]
      %v1182 = vld [vmem:[%s4 + $0x20] sm:$0xff]
      %v1183 = vld [vmem:[%s4 + $0x28] sm:$0xff]
      %v1184 = vld [vmem:[%s4 + $0x30] sm:$0xff]
      %v1185 = vld [vmem:[%s4 + $0x38] sm:$0xff]
      %v1186 = vld [vmem:[%s4 + $0x40] sm:$0xff]
      %v1187 = vld [vmem:[%s4 + $0x48] sm:$0xff]
      %v1188 = vld [vmem:[%s4 + $0x50] sm:$0xff]
      %v1189 = vld [vmem:[%s4 + $0x58] sm:$0xff]
      %v1190 = vld [vmem:[%s4 + $0x60] sm:$0xff]
      %v1191 = vld [vmem:[%s4 + $0x68] sm:$0xff]
      %v1192 = vld [vmem:[%s4 + $0x70] sm:$0xff]
      %v1193 = vld [vmem:[%s4 + $0x78] sm:$0xff]
      %1195 = vset.pattern.permute.xlu0 0
      %1196 = vperm.xlu0 %1195, %v1178
      %v1197 = vpop.permute.xlu0 %1196
      %1200 = vset.pattern.permute.xlu0 0
      %1201 = vperm.xlu0 %1200, %v1179
      %v1202 = vpop.permute.xlu0 %1201
      %1205 = vset.pattern.permute.xlu0 0
      %1206 = vperm.xlu0 %1205, %v1180
      %v1207 = vpop.permute.xlu0 %1206
      %1210 = vset.pattern.permute.xlu0 0
      %1211 = vperm.xlu0 %1210, %v1181
      %v1212 = vpop.permute.xlu0 %1211
      %1215 = vset.pattern.permute.xlu0 0
      %1216 = vperm.xlu0 %1215, %v1182
      %v1217 = vpop.permute.xlu0 %1216
      %1220 = vset.pattern.permute.xlu0 0
      %1221 = vperm.xlu0 %1220, %v1183
      %v1222 = vpop.permute.xlu0 %1221
      %1225 = vset.pattern.permute.xlu0 0
      %1226 = vperm.xlu0 %1225, %v1184
      %v1227 = vpop.permute.xlu0 %1226
      %1230 = vset.pattern.permute.xlu0 0
      %1231 = vperm.xlu0 %1230, %v1185
      %v1232 = vpop.permute.xlu0 %1231
      %1235 = vset.pattern.permute.xlu0 0
      %1236 = vperm.xlu0 %1235, %v1186
      %v1237 = vpop.permute.xlu0 %1236
      %1240 = vset.pattern.permute.xlu0 0
      %1241 = vperm.xlu0 %1240, %v1187
      %v1242 = vpop.permute.xlu0 %1241
      %1245 = vset.pattern.permute.xlu0 0
      %1246 = vperm.xlu0 %1245, %v1188
      %v1247 = vpop.permute.xlu0 %1246
      %1250 = vset.pattern.permute.xlu0 0
      %1251 = vperm.xlu0 %1250, %v1189
      %v1252 = vpop.permute.xlu0 %1251
      %1255 = vset.pattern.permute.xlu0 0
      %1256 = vperm.xlu0 %1255, %v1190
      %v1257 = vpop.permute.xlu0 %1256
      %1260 = vset.pattern.permute.xlu0 0
      %1261 = vperm.xlu0 %1260, %v1191
      %v1262 = vpop.permute.xlu0 %1261
      %1265 = vset.pattern.permute.xlu0 0
      %1266 = vperm.xlu0 %1265, %v1192
      %v1267 = vpop.permute.xlu0 %1266
      %1270 = vset.pattern.permute.xlu0 0
      %1271 = vperm.xlu0 %1270, %v1193
      %v1272 = vpop.permute.xlu0 %1271
      %v1274 = vadd.f32 %v988, %v1197
      %v1275 = vadd.f32 %v991, %v1202
      %v1276 = vadd.f32 %v996, %v1207
      %v1277 = vadd.f32 %v999, %v1212
      %v1278 = vadd.f32 %v1004, %v1217
      %v1279 = vadd.f32 %v1007, %v1222
      %v1280 = vadd.f32 %v1012, %v1227
      %v1281 = vadd.f32 %v1015, %v1232
      %v1282 = vadd.f32 %v1020, %v1237
      %v1283 = vadd.f32 %v1023, %v1242
      %v1284 = vadd.f32 %v1028, %v1247
      %v1285 = vadd.f32 %v1031, %v1252
      %v1286 = vadd.f32 %v1036, %v1257
      %v1287 = vadd.f32 %v1039, %v1262
      %v1288 = vadd.f32 %v1044, %v1267
      %v1289 = vadd.f32 %v1047, %v1272
      %vm1290 = vcmp.ge.s32.totalorder %v672, 1
      %v1291 = vsel %vm1290, %v1115, 0.0
      %v1292 = vsel %vm1290, %v1117, 0.0
      %v1293 = vsel %vm1290, %v1119, 0.0
      %v1294 = vsel %vm1290, %v1121, 0.0
      %v1295 = vsel %vm1290, %v1123, 0.0
      %v1296 = vsel %vm1290, %v1125, 0.0
      %v1297 = vsel %vm1290, %v1127, 0.0
      %v1298 = vsel %vm1290, %v1129, 0.0
      %v1299 = vsel %vm1290, %v1131, 0.0
      %v1300 = vsel %vm1290, %v1133, 0.0
      %v1301 = vsel %vm1290, %v1135, 0.0
      %v1302 = vsel %vm1290, %v1137, 0.0
      %v1303 = vsel %vm1290, %v1139, 0.0
      %v1304 = vsel %vm1290, %v1141, 0.0
      %v1305 = vsel %vm1290, %v1143, 0.0
      %v1306 = vsel %vm1290, %v1145, 0.0
      %v1307 = vadd.f32 %v1274, %v1291
      %v1308 = vadd.f32 %v1275, %v1292
      %v1309 = vadd.f32 %v1276, %v1293
      %v1310 = vadd.f32 %v1277, %v1294
      %v1311 = vadd.f32 %v1278, %v1295
      %v1312 = vadd.f32 %v1279, %v1296
      %v1313 = vadd.f32 %v1280, %v1297
      %v1314 = vadd.f32 %v1281, %v1298
      %v1315 = vadd.f32 %v1282, %v1299
      %v1316 = vadd.f32 %v1283, %v1300
      %v1317 = vadd.f32 %v1284, %v1301
      %v1318 = vadd.f32 %v1285, %v1302
      %v1319 = vadd.f32 %v1286, %v1303
      %v1320 = vadd.f32 %v1287, %v1304
      %v1321 = vadd.f32 %v1288, %v1305
      %v1322 = vadd.f32 %v1289, %v1306
      %vm1323 = vcmp.lt.s32.totalorder %v672, 99
      %v1324 = vsel %vm1323, %v1147, 0.0
      %v1325 = vsel %vm1323, %v1149, 0.0
      %v1326 = vsel %vm1323, %v1151, 0.0
      %v1327 = vsel %vm1323, %v1153, 0.0
      %v1328 = vsel %vm1323, %v1155, 0.0
      %v1329 = vsel %vm1323, %v1157, 0.0
      %v1330 = vsel %vm1323, %v1159, 0.0
      %v1331 = vsel %vm1323, %v1161, 0.0
      %v1332 = vsel %vm1323, %v1163, 0.0
      %v1333 = vsel %vm1323, %v1165, 0.0
      %v1334 = vsel %vm1323, %v1167, 0.0
      %v1335 = vsel %vm1323, %v1169, 0.0
      %v1336 = vsel %vm1323, %v1171, 0.0
      %v1337 = vsel %vm1323, %v1173, 0.0
      %v1338 = vsel %vm1323, %v1175, 0.0
      %v1339 = vsel %vm1323, %v1177, 0.0
      %v1340 = vadd.f32 %v1307, %v1324
      %v1341 = vadd.f32 %v1308, %v1325
      %v1342 = vadd.f32 %v1309, %v1326
      %v1343 = vadd.f32 %v1310, %v1327
      %v1344 = vadd.f32 %v1311, %v1328
      %v1345 = vadd.f32 %v1312, %v1329
      %v1346 = vadd.f32 %v1313, %v1330
      %v1347 = vadd.f32 %v1314, %v1331
      %v1348 = vadd.f32 %v1315, %v1332
      %v1349 = vadd.f32 %v1316, %v1333
      %v1350 = vadd.f32 %v1317, %v1334
      %v1351 = vadd.f32 %v1318, %v1335
      %v1352 = vadd.f32 %v1319, %v1336
      %v1353 = vadd.f32 %v1320, %v1337
      %v1354 = vadd.f32 %v1321, %v1338
      %v1355 = vadd.f32 %v1322, %v1339
      %v1356 = vmax.f32 %v1340, 0.0
      %v1357 = vmax.f32 %v1341, 0.0
      %v1358 = vmax.f32 %v1342, 0.0
      %v1359 = vmax.f32 %v1343, 0.0
      %v1360 = vmax.f32 %v1344, 0.0
      %v1361 = vmax.f32 %v1345, 0.0
      %v1362 = vmax.f32 %v1346, 0.0
      %v1363 = vmax.f32 %v1347, 0.0
      %v1364 = vmax.f32 %v1348, 0.0
      %v1365 = vmax.f32 %v1349, 0.0
      %v1366 = vmax.f32 %v1350, 0.0
      %v1367 = vmax.f32 %v1351, 0.0
      %v1368 = vmax.f32 %v1352, 0.0
      %v1369 = vmax.f32 %v1353, 0.0
      %v1370 = vmax.f32 %v1354, 0.0
      %v1371 = vmax.f32 %v1355, 0.0
      %v1372 = vld [vmem:[%s5] sm:$0xf]
      %v1373 = vld [vmem:[%s5 + $0x4] sm:$0xf]
      %v1374 = vld [vmem:[%s5 + $0x8] sm:$0xf]
      %v1375 = vld [vmem:[%s5 + $0xc] sm:$0xf]
      %v1376 = vld [vmem:[%s5 + $0x10] sm:$0xf]
      %v1377 = vld [vmem:[%s5 + $0x14] sm:$0xf]
      %v1378 = vld [vmem:[%s5 + $0x18] sm:$0xf]
      %v1379 = vld [vmem:[%s5 + $0x1c] sm:$0xf]
      %v1380 = vld [vmem:[%s5 + $0x20] sm:$0xf]
      %v1381 = vld [vmem:[%s5 + $0x24] sm:$0xf]
      %v1382 = vld [vmem:[%s5 + $0x28] sm:$0xf]
      %v1383 = vld [vmem:[%s5 + $0x2c] sm:$0xf]
      %v1384 = vld [vmem:[%s5 + $0x30] sm:$0xf]
      %v1385 = vld [vmem:[%s5 + $0x34] sm:$0xf]
      %v1386 = vld [vmem:[%s5 + $0x38] sm:$0xf]
      %v1387 = vld [vmem:[%s5 + $0x3c] sm:$0xf]
      %v1388 = vpack.c.bf16 %v1357, %v1356
      %v1389 = vpack.c.bf16 %v1359, %v1358
      %v1390 = vpack.c.bf16 %v1361, %v1360
      %v1391 = vpack.c.bf16 %v1363, %v1362
      %v1392 = vpack.c.bf16 %v1365, %v1364
      %v1393 = vpack.c.bf16 %v1367, %v1366
      %v1394 = vpack.c.bf16 %v1369, %v1368
      %v1395 = vpack.c.bf16 %v1371, %v1370
      %v1396 = vld [vmem:[%s6] sm:$0xff]
      %v1397 = vld [vmem:[%s6 + $0x8] sm:$0xff]
      %v1398 = vld [vmem:[%s6 + $0x10] sm:$0xff]
      %v1399 = vld [vmem:[%s6 + $0x18] sm:$0xff]
      %v1400 = vld [vmem:[%s6 + $0x20] sm:$0xff]
      %v1401 = vld [vmem:[%s6 + $0x28] sm:$0xff]
      %v1402 = vld [vmem:[%s6 + $0x30] sm:$0xff]
      %v1403 = vld [vmem:[%s6 + $0x38] sm:$0xff]
      %v1404 = vld [vmem:[%s6 + $0x40] sm:$0xff]
      %v1405 = vld [vmem:[%s6 + $0x48] sm:$0xff]
      %v1406 = vld [vmem:[%s6 + $0x50] sm:$0xff]
      %v1407 = vld [vmem:[%s6 + $0x58] sm:$0xff]
      %v1408 = vld [vmem:[%s6 + $0x60] sm:$0xff]
      %v1409 = vld [vmem:[%s6 + $0x68] sm:$0xff]
      %v1410 = vld [vmem:[%s6 + $0x70] sm:$0xff]
      %v1411 = vld [vmem:[%s6 + $0x78] sm:$0xff]
      %1413 = vset.pattern.permute.xlu0 0
      %1414 = vperm.xlu0 %1413, %v1396
      %v1415 = vpop.permute.xlu0 %1414
      %1418 = vset.pattern.permute.xlu0 0
      %1419 = vperm.xlu0 %1418, %v1397
      %v1420 = vpop.permute.xlu0 %1419
      %1423 = vset.pattern.permute.xlu0 0
      %1424 = vperm.xlu0 %1423, %v1398
      %v1425 = vpop.permute.xlu0 %1424
      %1428 = vset.pattern.permute.xlu0 0
      %1429 = vperm.xlu0 %1428, %v1399
      %v1430 = vpop.permute.xlu0 %1429
      %1433 = vset.pattern.permute.xlu0 0
      %1434 = vperm.xlu0 %1433, %v1400
      %v1435 = vpop.permute.xlu0 %1434
      %1438 = vset.pattern.permute.xlu0 0
      %1439 = vperm.xlu0 %1438, %v1401
      %v1440 = vpop.permute.xlu0 %1439
      %1443 = vset.pattern.permute.xlu0 0
      %1444 = vperm.xlu0 %1443, %v1402
      %v1445 = vpop.permute.xlu0 %1444
      %1448 = vset.pattern.permute.xlu0 0
      %1449 = vperm.xlu0 %1448, %v1403
      %v1450 = vpop.permute.xlu0 %1449
      %1453 = vset.pattern.permute.xlu0 0
      %1454 = vperm.xlu0 %1453, %v1404
      %v1455 = vpop.permute.xlu0 %1454
      %1458 = vset.pattern.permute.xlu0 0
      %1459 = vperm.xlu0 %1458, %v1405
      %v1460 = vpop.permute.xlu0 %1459
      %1463 = vset.pattern.permute.xlu0 0
      %1464 = vperm.xlu0 %1463, %v1406
      %v1465 = vpop.permute.xlu0 %1464
      %1468 = vset.pattern.permute.xlu0 0
      %1469 = vperm.xlu0 %1468, %v1407
      %v1470 = vpop.permute.xlu0 %1469
      %1473 = vset.pattern.permute.xlu0 0
      %1474 = vperm.xlu0 %1473, %v1408
      %v1475 = vpop.permute.xlu0 %1474
      %1478 = vset.pattern.permute.xlu0 0
      %1479 = vperm.xlu0 %1478, %v1409
      %v1480 = vpop.permute.xlu0 %1479
      %1483 = vset.pattern.permute.xlu0 0
      %1484 = vperm.xlu0 %1483, %v1410
      %v1485 = vpop.permute.xlu0 %1484
      %1488 = vset.pattern.permute.xlu0 0
      %1489 = vperm.xlu0 %1488, %v1411
      %v1490 = vpop.permute.xlu0 %1489
      %v1508 = vunpack.c.l.b16 %v1372
      %v1509 = vunpack.c.l.b16 %v1373
      %v1510 = vunpack.c.l.b16 %v1374
      %v1511 = vunpack.c.l.b16 %v1375
      %v1512 = vunpack.c.l.b16 %v1376
      %v1513 = vunpack.c.l.b16 %v1377
      %v1514 = vunpack.c.l.b16 %v1378
      %v1515 = vunpack.c.l.b16 %v1379
      %v1516 = vunpack.c.l.b16 %v1380
      %v1517 = vunpack.c.l.b16 %v1381
      %v1518 = vunpack.c.l.b16 %v1382
      %v1519 = vunpack.c.l.b16 %v1383
      %v1520 = vunpack.c.l.b16 %v1384
      %v1521 = vunpack.c.l.b16 %v1385
      %v1522 = vunpack.c.l.b16 %v1386
      %v1523 = vunpack.c.l.b16 %v1387
      %v1524 = vpack.c.b16 %v1509, %v1508
      %v1525 = vpack.c.b16 %v1511, %v1510
      %v1526 = vpack.c.b16 %v1513, %v1512
      %v1527 = vpack.c.b16 %v1515, %v1514
      %v1528 = vpack.c.b16 %v1517, %v1516
      %v1529 = vpack.c.b16 %v1519, %v1518
      %v1530 = vpack.c.b16 %v1521, %v1520
      %v1531 = vpack.c.b16 %v1523, %v1522
      %1540 = vmatprep.subr.bf16.mxu0 0
      %1541 = vmatpush1.bf16.msra.mxu0 %v1388
      %1542 = vmatprep.subr.bf16.mxu0 0
      %1543 = vmatpush1.bf16.msra.mxu0 %v1389
      %1544 = vmatprep.subr.bf16.mxu0 0
      %1545 = vmatpush1.bf16.msra.mxu0 %v1390
      %1546 = vmatprep.subr.bf16.mxu0 0
      %1547 = vmatpush1.bf16.msra.mxu0 %v1391
      %1548 = vmatprep.subr.bf16.mxu0 0
      %1549 = vmatpush1.bf16.msra.mxu0 %v1392
      %1550 = vmatprep.subr.bf16.mxu0 0
      %1551 = vmatpush1.bf16.msra.mxu0 %v1393
      %1552 = vmatprep.subr.bf16.mxu0 0
      %1553 = vmatpush1.bf16.msra.mxu0 %v1394
      %1554 = vmatprep.subr.bf16.mxu0 0
      %1555 = vmatpush1.bf16.msra.mxu0 %v1395
      %1556 = vmatprep.subr.bf16.mxu0 0
      %1557 = vmatpush1.bf16.msra.mxu0 0
      %1558 = vmatprep.subr.bf16.mxu0 0
      %1559 = vmatpush1.bf16.msra.mxu0 0
      %1560 = vmatprep.subr.bf16.mxu0 0
      %1561 = vmatpush1.bf16.msra.mxu0 0
      %1562 = vmatprep.subr.bf16.mxu0 0
      %1563 = vmatpush1.bf16.msra.mxu0 0
      %1564 = vmatprep.subr.bf16.mxu0 0
      %1565 = vmatpush1.bf16.msra.mxu0 0
      %1566 = vmatprep.subr.bf16.mxu0 0
      %1567 = vmatpush1.bf16.msra.mxu0 0
      %1568 = vmatprep.subr.bf16.mxu0 0
      %1569 = vmatpush1.bf16.msra.mxu0 0
      %1570 = vmatprep.subr.bf16.mxu0 0
      %1571 = vmatpush1.bf16.msra.mxu0 0
      %1572 = vmatprep.mubr.bf16.mxu0 0
      %1573 = vmatmul.mubr.bf16.gmra.mrb[0].mxu0 %v1524
      %v1574 = vpop.f32.mrb[0].mxu0
      %v1575 = vadd.f32 %v1415, %v1574
      %v1576 = vpop.f32.mrb[0].mxu0
      %v1577 = vpop.f32.mrb[0].mxu0
      %v1578 = vadd.f32 %v1420, %v1577
      %v1579 = vpop.f32.mrb[0].mxu0
      %1580 = vmatprep.mubr.bf16.mxu0 0
      %1581 = vmatmul.mubr.bf16.gmra.mrb[0].mxu0 %v1525
      %v1582 = vpop.f32.mrb[0].mxu0
      %v1583 = vadd.f32 %v1425, %v1582
      %v1584 = vpop.f32.mrb[0].mxu0
      %v1585 = vpop.f32.mrb[0].mxu0
      %v1586 = vadd.f32 %v1430, %v1585
      %v1587 = vpop.f32.mrb[0].mxu0
      %1588 = vmatprep.mubr.bf16.mxu0 0
      %1589 = vmatmul.mubr.bf16.gmra.mrb[0].mxu0 %v1526
      %v1590 = vpop.f32.mrb[0].mxu0
      %v1591 = vadd.f32 %v1435, %v1590
      %v1592 = vpop.f32.mrb[0].mxu0
      %v1593 = vpop.f32.mrb[0].mxu0
      %v1594 = vadd.f32 %v1440, %v1593
      %v1595 = vpop.f32.mrb[0].mxu0
      %1596 = vmatprep.mubr.bf16.mxu0 0
      %1597 = vmatmul.mubr.bf16.gmra.mrb[0].mxu0 %v1527
      %v1598 = vpop.f32.mrb[0].mxu0
      %v1599 = vadd.f32 %v1445, %v1598
      %v1600 = vpop.f32.mrb[0].mxu0
      %v1601 = vpop.f32.mrb[0].mxu0
      %v1602 = vadd.f32 %v1450, %v1601
      %v1603 = vpop.f32.mrb[0].mxu0
      %1604 = vmatprep.mubr.bf16.mxu0 0
      %1605 = vmatmul.mubr.bf16.gmra.mrb[0].mxu0 %v1528
      %v1606 = vpop.f32.mrb[0].mxu0
      %v1607 = vadd.f32 %v1455, %v1606
      %v1608 = vpop.f32.mrb[0].mxu0
      %v1609 = vpop.f32.mrb[0].mxu0
      %v1610 = vadd.f32 %v1460, %v1609
      %v1611 = vpop.f32.mrb[0].mxu0
      %1612 = vmatprep.mubr.bf16.mxu0 0
      %1613 = vmatmul.mubr.bf16.gmra.mrb[0].mxu0 %v1529
      %v1614 = vpop.f32.mrb[0].mxu0
      %v1615 = vadd.f32 %v1465, %v1614
      %v1616 = vpop.f32.mrb[0].mxu0
      %v1617 = vpop.f32.mrb[0].mxu0
      %v1618 = vadd.f32 %v1470, %v1617
      %v1619 = vpop.f32.mrb[0].mxu0
      %1620 = vmatprep.mubr.bf16.mxu0 0
      %1621 = vmatmul.mubr.bf16.gmra.mrb[0].mxu0 %v1530
      %v1622 = vpop.f32.mrb[0].mxu0
      %v1623 = vadd.f32 %v1475, %v1622
      %v1624 = vpop.f32.mrb[0].mxu0
      %v1625 = vpop.f32.mrb[0].mxu0
      %v1626 = vadd.f32 %v1480, %v1625
      %v1627 = vpop.f32.mrb[0].mxu0
      %1628 = vmatprep.mubr.bf16.mxu0 0
      %1629 = vmatmul.mubr.bf16.gmra.mrb[0].mxu0 %v1531
      %v1630 = vpop.f32.mrb[0].mxu0
      %v1631 = vadd.f32 %v1485, %v1630
      %v1632 = vpop.f32.mrb[0].mxu0
      %v1633 = vpop.f32.mrb[0].mxu0
      %v1634 = vadd.f32 %v1490, %v1633
      %v1635 = vpop.f32.mrb[0].mxu0
      %1636 = vdwg.mxu0
      %v1637 = vadd.f32 %v673, %v1575
      %v1638 = vadd.f32 %v674, %v1578
      %v1639 = vadd.f32 %v675, %v1583
      %v1640 = vadd.f32 %v676, %v1586
      %v1641 = vadd.f32 %v677, %v1591
      %v1642 = vadd.f32 %v678, %v1594
      %v1643 = vadd.f32 %v679, %v1599
      %v1644 = vadd.f32 %v680, %v1602
      %v1645 = vadd.f32 %v681, %v1607
      %v1646 = vadd.f32 %v682, %v1610
      %v1647 = vadd.f32 %v683, %v1615
      %v1648 = vadd.f32 %v684, %v1618
      %v1649 = vadd.f32 %v685, %v1623
      %v1650 = vadd.f32 %v686, %v1626
      %v1651 = vadd.f32 %v687, %v1631
      %v1652 = vadd.f32 %v688, %v1634
      %1653 = vst [vmem:[#allocation2] sm:$0xff] %v1637
      %1654 = vst [vmem:[#allocation2 + $0x8] sm:$0xff] %v1638
      %1655 = vst [vmem:[#allocation2 + $0x10] sm:$0xff] %v1639
      %1656 = vst [vmem:[#allocation2 + $0x18] sm:$0xff] %v1640
      %1657 = vst [vmem:[#allocation2 + $0x20] sm:$0xff] %v1641
      %1658 = vst [vmem:[#allocation2 + $0x28] sm:$0xff] %v1642
      %1659 = vst [vmem:[#allocation2 + $0x30] sm:$0xff] %v1643
      %1660 = vst [vmem:[#allocation2 + $0x38] sm:$0xff] %v1644
      %1661 = vst [vmem:[#allocation2 + $0x40] sm:$0xff] %v1645
      %1662 = vst [vmem:[#allocation2 + $0x48] sm:$0xff] %v1646
      %1663 = vst [vmem:[#allocation2 + $0x50] sm:$0xff] %v1647
      %1664 = vst [vmem:[#allocation2 + $0x58] sm:$0xff] %v1648
      %1665 = vst [vmem:[#allocation2 + $0x60] sm:$0xff] %v1649
      %1666 = vst [vmem:[#allocation2 + $0x68] sm:$0xff] %v1650
      %1667 = vst [vmem:[#allocation2 + $0x70] sm:$0xff] %v1651
      %1668 = vst [vmem:[#allocation2 + $0x78] sm:$0xff] %v1652
      %v1669 = vld [vmem:[#allocation2] sm:$0xff]
      %v1670 = vld [vmem:[#allocation2 + $0x8] sm:$0xff]
      %v1671 = vld [vmem:[#allocation2 + $0x10] sm:$0xff]
      %v1672 = vld [vmem:[#allocation2 + $0x18] sm:$0xff]
      %v1673 = vld [vmem:[#allocation2 + $0x20] sm:$0xff]
      %v1674 = vld [vmem:[#allocation2 + $0x28] sm:$0xff]
      %v1675 = vld [vmem:[#allocation2 + $0x30] sm:$0xff]
      %v1676 = vld [vmem:[#allocation2 + $0x38] sm:$0xff]
      %v1677 = vld [vmem:[#allocation2 + $0x40] sm:$0xff]
      %v1678 = vld [vmem:[#allocation2 + $0x48] sm:$0xff]
      %v1679 = vld [vmem:[#allocation2 + $0x50] sm:$0xff]
      %v1680 = vld [vmem:[#allocation2 + $0x58] sm:$0xff]
      %v1681 = vld [vmem:[#allocation2 + $0x60] sm:$0xff]
      %v1682 = vld [vmem:[#allocation2 + $0x68] sm:$0xff]
      %v1683 = vld [vmem:[#allocation2 + $0x70] sm:$0xff]
      %v1684 = vld [vmem:[#allocation2 + $0x78] sm:$0xff]
      %v1685 = vpack.c.bf16 %v1670, %v1669
      %v1686 = vpack.c.bf16 %v1672, %v1671
      %v1687 = vpack.c.bf16 %v1674, %v1673
      %v1688 = vpack.c.bf16 %v1676, %v1675
      %v1689 = vpack.c.bf16 %v1678, %v1677
      %v1690 = vpack.c.bf16 %v1680, %v1679
      %v1691 = vpack.c.bf16 %v1682, %v1681
      %v1692 = vpack.c.bf16 %v1684, %v1683
      %s1693 = scalar_lea.vmem %s3, 192
      %v1694 = vld [vmem:[%s1693] sm:$0xf]
      %v1695 = vld [vmem:[%s1693 + $0x4] sm:$0xf]
      %v1696 = vld [vmem:[%s1693 + $0x8] sm:$0xf]
      %v1697 = vld [vmem:[%s1693 + $0xc] sm:$0xf]
      %v1698 = vld [vmem:[%s1693 + $0x10] sm:$0xf]
      %v1699 = vld [vmem:[%s1693 + $0x14] sm:$0xf]
      %v1700 = vld [vmem:[%s1693 + $0x18] sm:$0xf]
      %v1701 = vld [vmem:[%s1693 + $0x1c] sm:$0xf]
      %v1702 = vld [vmem:[%s1693 + $0x20] sm:$0xf]
      %v1703 = vld [vmem:[%s1693 + $0x24] sm:$0xf]
      %v1704 = vld [vmem:[%s1693 + $0x28] sm:$0xf]
      %v1705 = vld [vmem:[%s1693 + $0x2c] sm:$0xf]
      %v1706 = vld [vmem:[%s1693 + $0x30] sm:$0xf]
      %v1707 = vld [vmem:[%s1693 + $0x34] sm:$0xf]
      %v1708 = vld [vmem:[%s1693 + $0x38] sm:$0xf]
      %v1709 = vld [vmem:[%s1693 + $0x3c] sm:$0xf]
      %v1710 = vld [vmem:[%s1693 + $0x40] sm:$0xf]
      %v1711 = vld [vmem:[%s1693 + $0x44] sm:$0xf]
      %v1712 = vld [vmem:[%s1693 + $0x48] sm:$0xf]
      %v1713 = vld [vmem:[%s1693 + $0x4c] sm:$0xf]
      %v1714 = vld [vmem:[%s1693 + $0x50] sm:$0xf]
      %v1715 = vld [vmem:[%s1693 + $0x54] sm:$0xf]
      %v1716 = vld [vmem:[%s1693 + $0x58] sm:$0xf]
      %v1717 = vld [vmem:[%s1693 + $0x5c] sm:$0xf]
      %v1718 = vld [vmem:[%s1693 + $0x60] sm:$0xf]
      %v1719 = vld [vmem:[%s1693 + $0x64] sm:$0xf]
      %v1720 = vld [vmem:[%s1693 + $0x68] sm:$0xf]
      %v1721 = vld [vmem:[%s1693 + $0x6c] sm:$0xf]
      %v1722 = vld [vmem:[%s1693 + $0x70] sm:$0xf]
      %v1723 = vld [vmem:[%s1693 + $0x74] sm:$0xf]
      %v1724 = vld [vmem:[%s1693 + $0x78] sm:$0xf]
      %v1725 = vld [vmem:[%s1693 + $0x7c] sm:$0xf]
      %v1726 = vld [vmem:[%s1693 + $0x80] sm:$0xf]
      %v1727 = vld [vmem:[%s1693 + $0x84] sm:$0xf]
      %v1728 = vld [vmem:[%s1693 + $0x88] sm:$0xf]
      %v1729 = vld [vmem:[%s1693 + $0x8c] sm:$0xf]
      %v1730 = vld [vmem:[%s1693 + $0x90] sm:$0xf]
      %v1731 = vld [vmem:[%s1693 + $0x94] sm:$0xf]
      %v1732 = vld [vmem:[%s1693 + $0x98] sm:$0xf]
      %v1733 = vld [vmem:[%s1693 + $0x9c] sm:$0xf]
      %v1734 = vld [vmem:[%s1693 + $0xa0] sm:$0xf]
      %v1735 = vld [vmem:[%s1693 + $0xa4] sm:$0xf]
      %v1736 = vld [vmem:[%s1693 + $0xa8] sm:$0xf]
      %v1737 = vld [vmem:[%s1693 + $0xac] sm:$0xf]
      %v1738 = vld [vmem:[%s1693 + $0xb0] sm:$0xf]
      %v1739 = vld [vmem:[%s1693 + $0xb4] sm:$0xf]
      %v1740 = vld [vmem:[%s1693 + $0xb8] sm:$0xf]
      %v1741 = vld [vmem:[%s1693 + $0xbc] sm:$0xf]
      %v1790 = vunpack.c.l.b16 %v1694
      %v1791 = vunpack.c.l.b16 %v1695
      %v1792 = vunpack.c.l.b16 %v1696
      %v1793 = vunpack.c.l.b16 %v1697
      %v1794 = vunpack.c.l.b16 %v1698
      %v1795 = vunpack.c.l.b16 %v1699
      %v1796 = vunpack.c.l.b16 %v1700
      %v1797 = vunpack.c.l.b16 %v1701
      %v1798 = vunpack.c.l.b16 %v1702
      %v1799 = vunpack.c.l.b16 %v1703
      %v1800 = vunpack.c.l.b16 %v1704
      %v1801 = vunpack.c.l.b16 %v1705
      %v1802 = vunpack.c.l.b16 %v1706
      %v1803 = vunpack.c.l.b16 %v1707
      %v1804 = vunpack.c.l.b16 %v1708
      %v1805 = vunpack.c.l.b16 %v1709
      %v1806 = vunpack.c.l.b16 %v1710
      %v1807 = vunpack.c.l.b16 %v1711
      %v1808 = vunpack.c.l.b16 %v1712
      %v1809 = vunpack.c.l.b16 %v1713
      %v1810 = vunpack.c.l.b16 %v1714
      %v1811 = vunpack.c.l.b16 %v1715
      %v1812 = vunpack.c.l.b16 %v1716
      %v1813 = vunpack.c.l.b16 %v1717
      %v1814 = vunpack.c.l.b16 %v1718
      %v1815 = vunpack.c.l.b16 %v1719
      %v1816 = vunpack.c.l.b16 %v1720
      %v1817 = vunpack.c.l.b16 %v1721
      %v1818 = vunpack.c.l.b16 %v1722
      %v1819 = vunpack.c.l.b16 %v1723
      %v1820 = vunpack.c.l.b16 %v1724
      %v1821 = vunpack.c.l.b16 %v1725
      %v1822 = vunpack.c.l.b16 %v1726
      %v1823 = vunpack.c.l.b16 %v1727
      %v1824 = vunpack.c.l.b16 %v1728
      %v1825 = vunpack.c.l.b16 %v1729
      %v1826 = vunpack.c.l.b16 %v1730
      %v1827 = vunpack.c.l.b16 %v1731
      %v1828 = vunpack.c.l.b16 %v1732
      %v1829 = vunpack.c.l.b16 %v1733
      %v1830 = vunpack.c.l.b16 %v1734
      %v1831 = vunpack.c.l.b16 %v1735
      %v1832 = vunpack.c.l.b16 %v1736
      %v1833 = vunpack.c.l.b16 %v1737
      %v1834 = vunpack.c.l.b16 %v1738
      %v1835 = vunpack.c.l.b16 %v1739
      %v1836 = vunpack.c.l.b16 %v1740
      %v1837 = vunpack.c.l.b16 %v1741
      %v1838 = vpack.c.b16 %v1791, %v1790
      %v1839 = vpack.c.b16 %v1793, %v1792
      %v1840 = vpack.c.b16 %v1795, %v1794
      %v1841 = vpack.c.b16 %v1797, %v1796
      %v1842 = vpack.c.b16 %v1799, %v1798
      %v1843 = vpack.c.b16 %v1801, %v1800
      %v1844 = vpack.c.b16 %v1803, %v1802
      %v1845 = vpack.c.b16 %v1805, %v1804
      %v1846 = vpack.c.b16 %v1807, %v1806
      %v1847 = vpack.c.b16 %v1809, %v1808
      %v1848 = vpack.c.b16 %v1811, %v1810
      %v1849 = vpack.c.b16 %v1813, %v1812
      %v1850 = vpack.c.b16 %v1815, %v1814
      %v1851 = vpack.c.b16 %v1817, %v1816
      %v1852 = vpack.c.b16 %v1819, %v1818
      %v1853 = vpack.c.b16 %v1821, %v1820
      %v1854 = vpack.c.b16 %v1823, %v1822
      %v1855 = vpack.c.b16 %v1825, %v1824
      %v1856 = vpack.c.b16 %v1827, %v1826
      %v1857 = vpack.c.b16 %v1829, %v1828
      %v1858 = vpack.c.b16 %v1831, %v1830
      %v1859 = vpack.c.b16 %v1833, %v1832
      %v1860 = vpack.c.b16 %v1835, %v1834
      %v1861 = vpack.c.b16 %v1837, %v1836
      %1886 = vmatprep.subr.bf16.mxu0 0
      %1887 = vmatpush1.bf16.msra.mxu0 %v1685
      %1888 = vmatprep.subr.bf16.mxu0 0
      %1889 = vmatpush1.bf16.msra.mxu0 %v1686
      %1890 = vmatprep.subr.bf16.mxu0 0
      %1891 = vmatpush1.bf16.msra.mxu0 %v1687
      %1892 = vmatprep.subr.bf16.mxu0 0
      %1893 = vmatpush1.bf16.msra.mxu0 %v1688
      %1894 = vmatprep.subr.bf16.mxu0 0
      %1895 = vmatpush1.bf16.msra.mxu0 %v1689
      %1896 = vmatprep.subr.bf16.mxu0 0
      %1897 = vmatpush1.bf16.msra.mxu0 %v1690
      %1898 = vmatprep.subr.bf16.mxu0 0
      %1899 = vmatpush1.bf16.msra.mxu0 %v1691
      %1900 = vmatprep.subr.bf16.mxu0 0
      %1901 = vmatpush1.bf16.msra.mxu0 %v1692
      %1902 = vmatprep.subr.bf16.mxu0 0
      %1903 = vmatpush1.bf16.msra.mxu0 0
      %1904 = vmatprep.subr.bf16.mxu0 0
      %1905 = vmatpush1.bf16.msra.mxu0 0
      %1906 = vmatprep.subr.bf16.mxu0 0
      %1907 = vmatpush1.bf16.msra.mxu0 0
      %1908 = vmatprep.subr.bf16.mxu0 0
      %1909 = vmatpush1.bf16.msra.mxu0 0
      %1910 = vmatprep.subr.bf16.mxu0 0
      %1911 = vmatpush1.bf16.msra.mxu0 0
      %1912 = vmatprep.subr.bf16.mxu0 0
      %1913 = vmatpush1.bf16.msra.mxu0 0
      %1914 = vmatprep.subr.bf16.mxu0 0
      %1915 = vmatpush1.bf16.msra.mxu0 0
      %1916 = vmatprep.subr.bf16.mxu0 0
      %1917 = vmatpush1.bf16.msra.mxu0 0
      %1918 = vmatprep.mubr.bf16.mxu0 0
      %1919 = vmatmul.mubr.bf16.gmra.mrb[0].mxu0 %v1838
      %v1920 = vpop.f32.mrb[0].mxu0
      %v1921 = vadd.f32 0.0, %v1920
      %v1922 = vpop.f32.mrb[0].mxu0
      %v1923 = vpop.f32.mrb[0].mxu0
      %v1924 = vadd.f32 0.0, %v1923
      %v1925 = vpop.f32.mrb[0].mxu0
      %1926 = vmatprep.mubr.bf16.mxu0 0
      %1927 = vmatmul.mubr.bf16.gmra.mrb[0].mxu0 %v1839
      %v1928 = vpop.f32.mrb[0].mxu0
      %v1929 = vadd.f32 0.0, %v1928
      %v1930 = vpop.f32.mrb[0].mxu0
      %v1931 = vpop.f32.mrb[0].mxu0
      %v1932 = vadd.f32 0.0, %v1931
      %v1933 = vpop.f32.mrb[0].mxu0
      %1934 = vmatprep.mubr.bf16.mxu0 0
      %1935 = vmatmul.mubr.bf16.gmra.mrb[0].mxu0 %v1840
      %v1936 = vpop.f32.mrb[0].mxu0
      %v1937 = vadd.f32 0.0, %v1936
      %v1938 = vpop.f32.mrb[0].mxu0
      %v1939 = vpop.f32.mrb[0].mxu0
      %v1940 = vadd.f32 0.0, %v1939
      %v1941 = vpop.f32.mrb[0].mxu0
      %1942 = vmatprep.mubr.bf16.mxu0 0
      %1943 = vmatmul.mubr.bf16.gmra.mrb[0].mxu0 %v1841
      %v1944 = vpop.f32.mrb[0].mxu0
      %v1945 = vadd.f32 0.0, %v1944
      %v1946 = vpop.f32.mrb[0].mxu0
      %v1947 = vpop.f32.mrb[0].mxu0
      %v1948 = vadd.f32 0.0, %v1947
      %v1949 = vpop.f32.mrb[0].mxu0
      %1950 = vmatprep.mubr.bf16.mxu0 0
      %1951 = vmatmul.mubr.bf16.gmra.mrb[0].mxu0 %v1842
      %v1952 = vpop.f32.mrb[0].mxu0
      %v1953 = vadd.f32 0.0, %v1952
      %v1954 = vpop.f32.mrb[0].mxu0
      %v1955 = vpop.f32.mrb[0].mxu0
      %v1956 = vadd.f32 0.0, %v1955
      %v1957 = vpop.f32.mrb[0].mxu0
      %1958 = vmatprep.mubr.bf16.mxu0 0
      %1959 = vmatmul.mubr.bf16.gmra.mrb[0].mxu0 %v1843
      %v1960 = vpop.f32.mrb[0].mxu0
      %v1961 = vadd.f32 0.0, %v1960
      %v1962 = vpop.f32.mrb[0].mxu0
      %v1963 = vpop.f32.mrb[0].mxu0
      %v1964 = vadd.f32 0.0, %v1963
      %v1965 = vpop.f32.mrb[0].mxu0
      %1966 = vmatprep.mubr.bf16.mxu0 0
      %1967 = vmatmul.mubr.bf16.gmra.mrb[0].mxu0 %v1844
      %v1968 = vpop.f32.mrb[0].mxu0
      %v1969 = vadd.f32 0.0, %v1968
      %v1970 = vpop.f32.mrb[0].mxu0
      %v1971 = vpop.f32.mrb[0].mxu0
      %v1972 = vadd.f32 0.0, %v1971
      %v1973 = vpop.f32.mrb[0].mxu0
      %1974 = vmatprep.mubr.bf16.mxu0 0
      %1975 = vmatmul.mubr.bf16.gmra.mrb[0].mxu0 %v1845
      %v1976 = vpop.f32.mrb[0].mxu0
      %v1977 = vadd.f32 0.0, %v1976
      %v1978 = vpop.f32.mrb[0].mxu0
      %v1979 = vpop.f32.mrb[0].mxu0
      %v1980 = vadd.f32 0.0, %v1979
      %v1981 = vpop.f32.mrb[0].mxu0
      %1982 = vmatprep.mubr.bf16.mxu0 0
      %1983 = vmatmul.mubr.bf16.gmra.mrb[0].mxu0 %v1846
      %v1984 = vpop.f32.mrb[0].mxu0
      %v1985 = vadd.f32 0.0, %v1984
      %v1986 = vpop.f32.mrb[0].mxu0
      %v1987 = vpop.f32.mrb[0].mxu0
      %v1988 = vadd.f32 0.0, %v1987
      %v1989 = vpop.f32.mrb[0].mxu0
      %1990 = vmatprep.mubr.bf16.mxu0 0
      %1991 = vmatmul.mubr.bf16.gmra.mrb[0].mxu0 %v1847
      %v1992 = vpop.f32.mrb[0].mxu0
      %v1993 = vadd.f32 0.0, %v1992
      %v1994 = vpop.f32.mrb[0].mxu0
      %v1995 = vpop.f32.mrb[0].mxu0
      %v1996 = vadd.f32 0.0, %v1995
      %v1997 = vpop.f32.mrb[0].mxu0
      %1998 = vmatprep.mubr.bf16.mxu0 0
      %1999 = vmatmul.mubr.bf16.gmra.mrb[0].mxu0 %v1848
      %v2000 = vpop.f32.mrb[0].mxu0
      %v2001 = vadd.f32 0.0, %v2000
      %v2002 = vpop.f32.mrb[0].mxu0
      %v2003 = vpop.f32.mrb[0].mxu0
      %v2004 = vadd.f32 0.0, %v2003
      %v2005 = vpop.f32.mrb[0].mxu0
      %2006 = vmatprep.mubr.bf16.mxu0 0
      %2007 = vmatmul.mubr.bf16.gmra.mrb[0].mxu0 %v1849
      %v2008 = vpop.f32.mrb[0].mxu0
      %v2009 = vadd.f32 0.0, %v2008
      %v2010 = vpop.f32.mrb[0].mxu0
      %v2011 = vpop.f32.mrb[0].mxu0
      %v2012 = vadd.f32 0.0, %v2011
      %v2013 = vpop.f32.mrb[0].mxu0
      %2014 = vmatprep.mubr.bf16.mxu0 0
      %2015 = vmatmul.mubr.bf16.gmra.mrb[0].mxu0 %v1850
      %v2016 = vpop.f32.mrb[0].mxu0
      %v2017 = vadd.f32 0.0, %v2016
      %v2018 = vpop.f32.mrb[0].mxu0
      %v2019 = vpop.f32.mrb[0].mxu0
      %v2020 = vadd.f32 0.0, %v2019
      %v2021 = vpop.f32.mrb[0].mxu0
      %2022 = vmatprep.mubr.bf16.mxu0 0
      %2023 = vmatmul.mubr.bf16.gmra.mrb[0].mxu0 %v1851
      %v2024 = vpop.f32.mrb[0].mxu0
      %v2025 = vadd.f32 0.0, %v2024
      %v2026 = vpop.f32.mrb[0].mxu0
      %v2027 = vpop.f32.mrb[0].mxu0
      %v2028 = vadd.f32 0.0, %v2027
      %v2029 = vpop.f32.mrb[0].mxu0
      %2030 = vmatprep.mubr.bf16.mxu0 0
      %2031 = vmatmul.mubr.bf16.gmra.mrb[0].mxu0 %v1852
      %v2032 = vpop.f32.mrb[0].mxu0
      %v2033 = vadd.f32 0.0, %v2032
      %v2034 = vpop.f32.mrb[0].mxu0
      %v2035 = vpop.f32.mrb[0].mxu0
      %v2036 = vadd.f32 0.0, %v2035
      %v2037 = vpop.f32.mrb[0].mxu0
      %2038 = vmatprep.mubr.bf16.mxu0 0
      %2039 = vmatmul.mubr.bf16.gmra.mrb[0].mxu0 %v1853
      %v2040 = vpop.f32.mrb[0].mxu0
      %v2041 = vadd.f32 0.0, %v2040
      %v2042 = vpop.f32.mrb[0].mxu0
      %v2043 = vpop.f32.mrb[0].mxu0
      %v2044 = vadd.f32 0.0, %v2043
      %v2045 = vpop.f32.mrb[0].mxu0
      %2046 = vmatprep.mubr.bf16.mxu0 0
      %2047 = vmatmul.mubr.bf16.gmra.mrb[0].mxu0 %v1854
      %v2048 = vpop.f32.mrb[0].mxu0
      %v2049 = vadd.f32 0.0, %v2048
      %v2050 = vpop.f32.mrb[0].mxu0
      %v2051 = vpop.f32.mrb[0].mxu0
      %v2052 = vadd.f32 0.0, %v2051
      %v2053 = vpop.f32.mrb[0].mxu0
      %2054 = vmatprep.mubr.bf16.mxu0 0
      %2055 = vmatmul.mubr.bf16.gmra.mrb[0].mxu0 %v1855
      %v2056 = vpop.f32.mrb[0].mxu0
      %v2057 = vadd.f32 0.0, %v2056
      %v2058 = vpop.f32.mrb[0].mxu0
      %v2059 = vpop.f32.mrb[0].mxu0
      %v2060 = vadd.f32 0.0, %v2059
      %v2061 = vpop.f32.mrb[0].mxu0
      %2062 = vmatprep.mubr.bf16.mxu0 0
      %2063 = vmatmul.mubr.bf16.gmra.mrb[0].mxu0 %v1856
      %v2064 = vpop.f32.mrb[0].mxu0
      %v2065 = vadd.f32 0.0, %v2064
      %v2066 = vpop.f32.mrb[0].mxu0
      %v2067 = vpop.f32.mrb[0].mxu0
      %v2068 = vadd.f32 0.0, %v2067
      %v2069 = vpop.f32.mrb[0].mxu0
      %2070 = vmatprep.mubr.bf16.mxu0 0
      %2071 = vmatmul.mubr.bf16.gmra.mrb[0].mxu0 %v1857
      %v2072 = vpop.f32.mrb[0].mxu0
      %v2073 = vadd.f32 0.0, %v2072
      %v2074 = vpop.f32.mrb[0].mxu0
      %v2075 = vpop.f32.mrb[0].mxu0
      %v2076 = vadd.f32 0.0, %v2075
      %v2077 = vpop.f32.mrb[0].mxu0
      %2078 = vmatprep.mubr.bf16.mxu0 0
      %2079 = vmatmul.mubr.bf16.gmra.mrb[0].mxu0 %v1858
      %v2080 = vpop.f32.mrb[0].mxu0
      %v2081 = vadd.f32 0.0, %v2080
      %v2082 = vpop.f32.mrb[0].mxu0
      %v2083 = vpop.f32.mrb[0].mxu0
      %v2084 = vadd.f32 0.0, %v2083
      %v2085 = vpop.f32.mrb[0].mxu0
      %2086 = vmatprep.mubr.bf16.mxu0 0
      %2087 = vmatmul.mubr.bf16.gmra.mrb[0].mxu0 %v1859
      %v2088 = vpop.f32.mrb[0].mxu0
      %v2089 = vadd.f32 0.0, %v2088
      %v2090 = vpop.f32.mrb[0].mxu0
      %v2091 = vpop.f32.mrb[0].mxu0
      %v2092 = vadd.f32 0.0, %v2091
      %v2093 = vpop.f32.mrb[0].mxu0
      %2094 = vmatprep.mubr.bf16.mxu0 0
      %2095 = vmatmul.mubr.bf16.gmra.mrb[0].mxu0 %v1860
      %v2096 = vpop.f32.mrb[0].mxu0
      %v2097 = vadd.f32 0.0, %v2096
      %v2098 = vpop.f32.mrb[0].mxu0
      %v2099 = vpop.f32.mrb[0].mxu0
      %v2100 = vadd.f32 0.0, %v2099
      %v2101 = vpop.f32.mrb[0].mxu0
      %2102 = vmatprep.mubr.bf16.mxu0 0
      %2103 = vmatmul.mubr.bf16.gmra.mrb[0].mxu0 %v1861
      %v2104 = vpop.f32.mrb[0].mxu0
      %v2105 = vadd.f32 0.0, %v2104
      %v2106 = vpop.f32.mrb[0].mxu0
      %v2107 = vpop.f32.mrb[0].mxu0
      %v2108 = vadd.f32 0.0, %v2107
      %v2109 = vpop.f32.mrb[0].mxu0
      %2110 = vdwg.mxu0
      %2111 = vrot.lane.b32.xlu0 %v1921, 2
      %v2112 = vpop.permute.xlu0 %2111
      %2113 = vrot.lane.b32.xlu0 %v1924, 2
      %v2114 = vpop.permute.xlu0 %2113
      %2115 = vrot.lane.b32.xlu0 %v1929, 2
      %v2116 = vpop.permute.xlu0 %2115
      %2117 = vrot.lane.b32.xlu0 %v1932, 2
      %v2118 = vpop.permute.xlu0 %2117
      %2119 = vrot.lane.b32.xlu0 %v1937, 2
      %v2120 = vpop.permute.xlu0 %2119
      %2121 = vrot.lane.b32.xlu0 %v1940, 2
      %v2122 = vpop.permute.xlu0 %2121
      %2123 = vrot.lane.b32.xlu0 %v1945, 2
      %v2124 = vpop.permute.xlu0 %2123
      %2125 = vrot.lane.b32.xlu0 %v1948, 2
      %v2126 = vpop.permute.xlu0 %2125
      %2127 = vrot.lane.b32.xlu0 %v1953, 2
      %v2128 = vpop.permute.xlu0 %2127
      %2129 = vrot.lane.b32.xlu0 %v1956, 2
      %v2130 = vpop.permute.xlu0 %2129
      %2131 = vrot.lane.b32.xlu0 %v1961, 2
      %v2132 = vpop.permute.xlu0 %2131
      %2133 = vrot.lane.b32.xlu0 %v1964, 2
      %v2134 = vpop.permute.xlu0 %2133
      %2135 = vrot.lane.b32.xlu0 %v1969, 2
      %v2136 = vpop.permute.xlu0 %2135
      %2137 = vrot.lane.b32.xlu0 %v1972, 2
      %v2138 = vpop.permute.xlu0 %2137
      %2139 = vrot.lane.b32.xlu0 %v1977, 2
      %v2140 = vpop.permute.xlu0 %2139
      %2141 = vrot.lane.b32.xlu0 %v1980, 2
      %v2142 = vpop.permute.xlu0 %2141
      %2143 = vrot.lane.b32.xlu0 %v2049, 126
      %v2144 = vpop.permute.xlu0 %2143
      %2145 = vrot.lane.b32.xlu0 %v2052, 126
      %v2146 = vpop.permute.xlu0 %2145
      %2147 = vrot.lane.b32.xlu0 %v2057, 126
      %v2148 = vpop.permute.xlu0 %2147
      %2149 = vrot.lane.b32.xlu0 %v2060, 126
      %v2150 = vpop.permute.xlu0 %2149
      %2151 = vrot.lane.b32.xlu0 %v2065, 126
      %v2152 = vpop.permute.xlu0 %2151
      %2153 = vrot.lane.b32.xlu0 %v2068, 126
      %v2154 = vpop.permute.xlu0 %2153
      %2155 = vrot.lane.b32.xlu0 %v2073, 126
      %v2156 = vpop.permute.xlu0 %2155
      %2157 = vrot.lane.b32.xlu0 %v2076, 126
      %v2158 = vpop.permute.xlu0 %2157
      %2159 = vrot.lane.b32.xlu0 %v2081, 126
      %v2160 = vpop.permute.xlu0 %2159
      %2161 = vrot.lane.b32.xlu0 %v2084, 126
      %v2162 = vpop.permute.xlu0 %2161
      %2163 = vrot.lane.b32.xlu0 %v2089, 126
      %v2164 = vpop.permute.xlu0 %2163
      %2165 = vrot.lane.b32.xlu0 %v2092, 126
      %v2166 = vpop.permute.xlu0 %2165
      %2167 = vrot.lane.b32.xlu0 %v2097, 126
      %v2168 = vpop.permute.xlu0 %2167
      %2169 = vrot.lane.b32.xlu0 %v2100, 126
      %v2170 = vpop.permute.xlu0 %2169
      %2171 = vrot.lane.b32.xlu0 %v2105, 126
      %v2172 = vpop.permute.xlu0 %2171
      %2173 = vrot.lane.b32.xlu0 %v2108, 126
      %v2174 = vpop.permute.xlu0 %2173
      %s2175 = scalar_lea.vmem %s4, 128
      %v2176 = vld [vmem:[%s2175] sm:$0xff]
      %v2177 = vld [vmem:[%s2175 + $0x8] sm:$0xff]
      %v2178 = vld [vmem:[%s2175 + $0x10] sm:$0xff]
      %v2179 = vld [vmem:[%s2175 + $0x18] sm:$0xff]
      %v2180 = vld [vmem:[%s2175 + $0x20] sm:$0xff]
      %v2181 = vld [vmem:[%s2175 + $0x28] sm:$0xff]
      %v2182 = vld [vmem:[%s2175 + $0x30] sm:$0xff]
      %v2183 = vld [vmem:[%s2175 + $0x38] sm:$0xff]
      %v2184 = vld [vmem:[%s2175 + $0x40] sm:$0xff]
      %v2185 = vld [vmem:[%s2175 + $0x48] sm:$0xff]
      %v2186 = vld [vmem:[%s2175 + $0x50] sm:$0xff]
      %v2187 = vld [vmem:[%s2175 + $0x58] sm:$0xff]
      %v2188 = vld [vmem:[%s2175 + $0x60] sm:$0xff]
      %v2189 = vld [vmem:[%s2175 + $0x68] sm:$0xff]
      %v2190 = vld [vmem:[%s2175 + $0x70] sm:$0xff]
      %v2191 = vld [vmem:[%s2175 + $0x78] sm:$0xff]
      %2193 = vset.pattern.permute.xlu0 0
      %2194 = vperm.xlu0 %2193, %v2176
      %v2195 = vpop.permute.xlu0 %2194
      %2198 = vset.pattern.permute.xlu0 0
      %2199 = vperm.xlu0 %2198, %v2177
      %v2200 = vpop.permute.xlu0 %2199
      %2203 = vset.pattern.permute.xlu0 0
      %2204 = vperm.xlu0 %2203, %v2178
      %v2205 = vpop.permute.xlu0 %2204
      %2208 = vset.pattern.permute.xlu0 0
      %2209 = vperm.xlu0 %2208, %v2179
      %v2210 = vpop.permute.xlu0 %2209
      %2213 = vset.pattern.permute.xlu0 0
      %2214 = vperm.xlu0 %2213, %v2180
      %v2215 = vpop.permute.xlu0 %2214
      %2218 = vset.pattern.permute.xlu0 0
      %2219 = vperm.xlu0 %2218, %v2181
      %v2220 = vpop.permute.xlu0 %2219
      %2223 = vset.pattern.permute.xlu0 0
      %2224 = vperm.xlu0 %2223, %v2182
      %v2225 = vpop.permute.xlu0 %2224
      %2228 = vset.pattern.permute.xlu0 0
      %2229 = vperm.xlu0 %2228, %v2183
      %v2230 = vpop.permute.xlu0 %2229
      %2233 = vset.pattern.permute.xlu0 0
      %2234 = vperm.xlu0 %2233, %v2184
      %v2235 = vpop.permute.xlu0 %2234
      %2238 = vset.pattern.permute.xlu0 0
      %2239 = vperm.xlu0 %2238, %v2185
      %v2240 = vpop.permute.xlu0 %2239
      %2243 = vset.pattern.permute.xlu0 0
      %2244 = vperm.xlu0 %2243, %v2186
      %v2245 = vpop.permute.xlu0 %2244
      %2248 = vset.pattern.permute.xlu0 0
      %2249 = vperm.xlu0 %2248, %v2187
      %v2250 = vpop.permute.xlu0 %2249
      %2253 = vset.pattern.permute.xlu0 0
      %2254 = vperm.xlu0 %2253, %v2188
      %v2255 = vpop.permute.xlu0 %2254
      %2258 = vset.pattern.permute.xlu0 0
      %2259 = vperm.xlu0 %2258, %v2189
      %v2260 = vpop.permute.xlu0 %2259
      %2263 = vset.pattern.permute.xlu0 0
      %2264 = vperm.xlu0 %2263, %v2190
      %v2265 = vpop.permute.xlu0 %2264
      %2268 = vset.pattern.permute.xlu0 0
      %2269 = vperm.xlu0 %2268, %v2191
      %v2270 = vpop.permute.xlu0 %2269
      %v2272 = vadd.f32 %v1985, %v2195
      %v2273 = vadd.f32 %v1988, %v2200
      %v2274 = vadd.f32 %v1993, %v2205
      %v2275 = vadd.f32 %v1996, %v2210
      %v2276 = vadd.f32 %v2001, %v2215
      %v2277 = vadd.f32 %v2004, %v2220
      %v2278 = vadd.f32 %v2009, %v2225
      %v2279 = vadd.f32 %v2012, %v2230
      %v2280 = vadd.f32 %v2017, %v2235
      %v2281 = vadd.f32 %v2020, %v2240
      %v2282 = vadd.f32 %v2025, %v2245
      %v2283 = vadd.f32 %v2028, %v2250
      %v2284 = vadd.f32 %v2033, %v2255
      %v2285 = vadd.f32 %v2036, %v2260
      %v2286 = vadd.f32 %v2041, %v2265
      %v2287 = vadd.f32 %v2044, %v2270
      %vm2288 = vcmp.ge.s32.totalorder %v672, 2
      %v2289 = vsel %vm2288, %v2112, 0.0
      %v2290 = vsel %vm2288, %v2114, 0.0
      %v2291 = vsel %vm2288, %v2116, 0.0
      %v2292 = vsel %vm2288, %v2118, 0.0
      %v2293 = vsel %vm2288, %v2120, 0.0
      %v2294 = vsel %vm2288, %v2122, 0.0
      %v2295 = vsel %vm2288, %v2124, 0.0
      %v2296 = vsel %vm2288, %v2126, 0.0
      %v2297 = vsel %vm2288, %v2128, 0.0
      %v2298 = vsel %vm2288, %v2130, 0.0
      %v2299 = vsel %vm2288, %v2132, 0.0
      %v2300 = vsel %vm2288, %v2134, 0.0
      %v2301 = vsel %vm2288, %v2136, 0.0
      %v2302 = vsel %vm2288, %v2138, 0.0
      %v2303 = vsel %vm2288, %v2140, 0.0
      %v2304 = vsel %vm2288, %v2142, 0.0
      %v2305 = vadd.f32 %v2272, %v2289
      %v2306 = vadd.f32 %v2273, %v2290
      %v2307 = vadd.f32 %v2274, %v2291
      %v2308 = vadd.f32 %v2275, %v2292
      %v2309 = vadd.f32 %v2276, %v2293
      %v2310 = vadd.f32 %v2277, %v2294
      %v2311 = vadd.f32 %v2278, %v2295
      %v2312 = vadd.f32 %v2279, %v2296
      %v2313 = vadd.f32 %v2280, %v2297
      %v2314 = vadd.f32 %v2281, %v2298
      %v2315 = vadd.f32 %v2282, %v2299
      %v2316 = vadd.f32 %v2283, %v2300
      %v2317 = vadd.f32 %v2284, %v2301
      %v2318 = vadd.f32 %v2285, %v2302
      %v2319 = vadd.f32 %v2286, %v2303
      %v2320 = vadd.f32 %v2287, %v2304
      %vm2321 = vcmp.lt.s32.totalorder %v672, 98
      %v2322 = vsel %vm2321, %v2144, 0.0
      %v2323 = vsel %vm2321, %v2146, 0.0
      %v2324 = vsel %vm2321, %v2148, 0.0
      %v2325 = vsel %vm2321, %v2150, 0.0
      %v2326 = vsel %vm2321, %v2152, 0.0
      %v2327 = vsel %vm2321, %v2154, 0.0
      %v2328 = vsel %vm2321, %v2156, 0.0
      %v2329 = vsel %vm2321, %v2158, 0.0
      %v2330 = vsel %vm2321, %v2160, 0.0
      %v2331 = vsel %vm2321, %v2162, 0.0
      %v2332 = vsel %vm2321, %v2164, 0.0
      %v2333 = vsel %vm2321, %v2166, 0.0
      %v2334 = vsel %vm2321, %v2168, 0.0
      %v2335 = vsel %vm2321, %v2170, 0.0
      %v2336 = vsel %vm2321, %v2172, 0.0
      %v2337 = vsel %vm2321, %v2174, 0.0
      %v2338 = vadd.f32 %v2305, %v2322
      %v2339 = vadd.f32 %v2306, %v2323
      %v2340 = vadd.f32 %v2307, %v2324
      %v2341 = vadd.f32 %v2308, %v2325
      %v2342 = vadd.f32 %v2309, %v2326
      %v2343 = vadd.f32 %v2310, %v2327
      %v2344 = vadd.f32 %v2311, %v2328
      %v2345 = vadd.f32 %v2312, %v2329
      %v2346 = vadd.f32 %v2313, %v2330
      %v2347 = vadd.f32 %v2314, %v2331
      %v2348 = vadd.f32 %v2315, %v2332
      %v2349 = vadd.f32 %v2316, %v2333
      %v2350 = vadd.f32 %v2317, %v2334
      %v2351 = vadd.f32 %v2318, %v2335
      %v2352 = vadd.f32 %v2319, %v2336
      %v2353 = vadd.f32 %v2320, %v2337
      %v2354 = vmax.f32 %v2338, 0.0
      %v2355 = vmax.f32 %v2339, 0.0
      %v2356 = vmax.f32 %v2340, 0.0
      %v2357 = vmax.f32 %v2341, 0.0
      %v2358 = vmax.f32 %v2342, 0.0
      %v2359 = vmax.f32 %v2343, 0.0
      %v2360 = vmax.f32 %v2344, 0.0
      %v2361 = vmax.f32 %v2345, 0.0
      %v2362 = vmax.f32 %v2346, 0.0
      %v2363 = vmax.f32 %v2347, 0.0
      %v2364 = vmax.f32 %v2348, 0.0
      %v2365 = vmax.f32 %v2349, 0.0
      %v2366 = vmax.f32 %v2350, 0.0
      %v2367 = vmax.f32 %v2351, 0.0
      %v2368 = vmax.f32 %v2352, 0.0
      %v2369 = vmax.f32 %v2353, 0.0
      %s2370 = scalar_lea.vmem %s5, 64
      %v2371 = vld [vmem:[%s2370] sm:$0xf]
      %v2372 = vld [vmem:[%s2370 + $0x4] sm:$0xf]
      %v2373 = vld [vmem:[%s2370 + $0x8] sm:$0xf]
      %v2374 = vld [vmem:[%s2370 + $0xc] sm:$0xf]
      %v2375 = vld [vmem:[%s2370 + $0x10] sm:$0xf]
      %v2376 = vld [vmem:[%s2370 + $0x14] sm:$0xf]
      %v2377 = vld [vmem:[%s2370 + $0x18] sm:$0xf]
      %v2378 = vld [vmem:[%s2370 + $0x1c] sm:$0xf]
      %v2379 = vld [vmem:[%s2370 + $0x20] sm:$0xf]
      %v2380 = vld [vmem:[%s2370 + $0x24] sm:$0xf]
      %v2381 = vld [vmem:[%s2370 + $0x28] sm:$0xf]
      %v2382 = vld [vmem:[%s2370 + $0x2c] sm:$0xf]
      %v2383 = vld [vmem:[%s2370 + $0x30] sm:$0xf]
      %v2384 = vld [vmem:[%s2370 + $0x34] sm:$0xf]
      %v2385 = vld [vmem:[%s2370 + $0x38] sm:$0xf]
      %v2386 = vld [vmem:[%s2370 + $0x3c] sm:$0xf]
      %v2387 = vpack.c.bf16 %v2355, %v2354
      %v2388 = vpack.c.bf16 %v2357, %v2356
      %v2389 = vpack.c.bf16 %v2359, %v2358
      %v2390 = vpack.c.bf16 %v2361, %v2360
      %v2391 = vpack.c.bf16 %v2363, %v2362
      %v2392 = vpack.c.bf16 %v2365, %v2364
      %v2393 = vpack.c.bf16 %v2367, %v2366
      %v2394 = vpack.c.bf16 %v2369, %v2368
      %s2395 = scalar_lea.vmem %s6, 128
      %v2396 = vld [vmem:[%s2395] sm:$0xff]
      %v2397 = vld [vmem:[%s2395 + $0x8] sm:$0xff]
      %v2398 = vld [vmem:[%s2395 + $0x10] sm:$0xff]
      %v2399 = vld [vmem:[%s2395 + $0x18] sm:$0xff]
      %v2400 = vld [vmem:[%s2395 + $0x20] sm:$0xff]
      %v2401 = vld [vmem:[%s2395 + $0x28] sm:$0xff]
      %v2402 = vld [vmem:[%s2395 + $0x30] sm:$0xff]
      %v2403 = vld [vmem:[%s2395 + $0x38] sm:$0xff]
      %v2404 = vld [vmem:[%s2395 + $0x40] sm:$0xff]
      %v2405 = vld [vmem:[%s2395 + $0x48] sm:$0xff]
      %v2406 = vld [vmem:[%s2395 + $0x50] sm:$0xff]
      %v2407 = vld [vmem:[%s2395 + $0x58] sm:$0xff]
      %v2408 = vld [vmem:[%s2395 + $0x60] sm:$0xff]
      %v2409 = vld [vmem:[%s2395 + $0x68] sm:$0xff]
      %v2410 = vld [vmem:[%s2395 + $0x70] sm:$0xff]
      %v2411 = vld [vmem:[%s2395 + $0x78] sm:$0xff]
      %2413 = vset.pattern.permute.xlu0 0
      %2414 = vperm.xlu0 %2413, %v2396
      %v2415 = vpop.permute.xlu0 %2414
      %2418 = vset.pattern.permute.xlu0 0
      %2419 = vperm.xlu0 %2418, %v2397
      %v2420 = vpop.permute.xlu0 %2419
      %2423 = vset.pattern.permute.xlu0 0
      %2424 = vperm.xlu0 %2423, %v2398
      %v2425 = vpop.permute.xlu0 %2424
      %2428 = vset.pattern.permute.xlu0 0
      %2429 = vperm.xlu0 %2428, %v2399
      %v2430 = vpop.permute.xlu0 %2429
      %2433 = vset.pattern.permute.xlu0 0
      %2434 = vperm.xlu0 %2433, %v2400
      %v2435 = vpop.permute.xlu0 %2434
      %2438 = vset.pattern.permute.xlu0 0
      %2439 = vperm.xlu0 %2438, %v2401
      %v2440 = vpop.permute.xlu0 %2439
      %2443 = vset.pattern.permute.xlu0 0
      %2444 = vperm.xlu0 %2443, %v2402
      %v2445 = vpop.permute.xlu0 %2444
      %2448 = vset.pattern.permute.xlu0 0
      %2449 = vperm.xlu0 %2448, %v2403
      %v2450 = vpop.permute.xlu0 %2449
      %2453 = vset.pattern.permute.xlu0 0
      %2454 = vperm.xlu0 %2453, %v2404
      %v2455 = vpop.permute.xlu0 %2454
      %2458 = vset.pattern.permute.xlu0 0
      %2459 = vperm.xlu0 %2458, %v2405
      %v2460 = vpop.permute.xlu0 %2459
      %2463 = vset.pattern.permute.xlu0 0
      %2464 = vperm.xlu0 %2463, %v2406
      %v2465 = vpop.permute.xlu0 %2464
      %2468 = vset.pattern.permute.xlu0 0
      %2469 = vperm.xlu0 %2468, %v2407
      %v2470 = vpop.permute.xlu0 %2469
      %2473 = vset.pattern.permute.xlu0 0
      %2474 = vperm.xlu0 %2473, %v2408
      %v2475 = vpop.permute.xlu0 %2474
      %2478 = vset.pattern.permute.xlu0 0
      %2479 = vperm.xlu0 %2478, %v2409
      %v2480 = vpop.permute.xlu0 %2479
      %2483 = vset.pattern.permute.xlu0 0
      %2484 = vperm.xlu0 %2483, %v2410
      %v2485 = vpop.permute.xlu0 %2484
      %2488 = vset.pattern.permute.xlu0 0
      %2489 = vperm.xlu0 %2488, %v2411
      %v2490 = vpop.permute.xlu0 %2489
      %v2508 = vunpack.c.l.b16 %v2371
      %v2509 = vunpack.c.l.b16 %v2372
      %v2510 = vunpack.c.l.b16 %v2373
      %v2511 = vunpack.c.l.b16 %v2374
      %v2512 = vunpack.c.l.b16 %v2375
      %v2513 = vunpack.c.l.b16 %v2376
      %v2514 = vunpack.c.l.b16 %v2377
      %v2515 = vunpack.c.l.b16 %v2378
      %v2516 = vunpack.c.l.b16 %v2379
      %v2517 = vunpack.c.l.b16 %v2380
      %v2518 = vunpack.c.l.b16 %v2381
      %v2519 = vunpack.c.l.b16 %v2382
      %v2520 = vunpack.c.l.b16 %v2383
      %v2521 = vunpack.c.l.b16 %v2384
      %v2522 = vunpack.c.l.b16 %v2385
      %v2523 = vunpack.c.l.b16 %v2386
      %v2524 = vpack.c.b16 %v2509, %v2508
      %v2525 = vpack.c.b16 %v2511, %v2510
      %v2526 = vpack.c.b16 %v2513, %v2512
      %v2527 = vpack.c.b16 %v2515, %v2514
      %v2528 = vpack.c.b16 %v2517, %v2516
      %v2529 = vpack.c.b16 %v2519, %v2518
      %v2530 = vpack.c.b16 %v2521, %v2520
      %v2531 = vpack.c.b16 %v2523, %v2522
      %2540 = vmatprep.subr.bf16.mxu0 0
      %2541 = vmatpush1.bf16.msra.mxu0 %v2387
      %2542 = vmatprep.subr.bf16.mxu0 0
      %2543 = vmatpush1.bf16.msra.mxu0 %v2388
      %2544 = vmatprep.subr.bf16.mxu0 0
      %2545 = vmatpush1.bf16.msra.mxu0 %v2389
      %2546 = vmatprep.subr.bf16.mxu0 0
      %2547 = vmatpush1.bf16.msra.mxu0 %v2390
      %2548 = vmatprep.subr.bf16.mxu0 0
      %2549 = vmatpush1.bf16.msra.mxu0 %v2391
      %2550 = vmatprep.subr.bf16.mxu0 0
      %2551 = vmatpush1.bf16.msra.mxu0 %v2392
      %2552 = vmatprep.subr.bf16.mxu0 0
      %2553 = vmatpush1.bf16.msra.mxu0 %v2393
      %2554 = vmatprep.subr.bf16.mxu0 0
      %2555 = vmatpush1.bf16.msra.mxu0 %v2394
      %2556 = vmatprep.subr.bf16.mxu0 0
      %2557 = vmatpush1.bf16.msra.mxu0 0
      %2558 = vmatprep.subr.bf16.mxu0 0
      %2559 = vmatpush1.bf16.msra.mxu0 0
      %2560 = vmatprep.subr.bf16.mxu0 0
      %2561 = vmatpush1.bf16.msra.mxu0 0
      %2562 = vmatprep.subr.bf16.mxu0 0
      %2563 = vmatpush1.bf16.msra.mxu0 0
      %2564 = vmatprep.subr.bf16.mxu0 0
      %2565 = vmatpush1.bf16.msra.mxu0 0
      %2566 = vmatprep.subr.bf16.mxu0 0
      %2567 = vmatpush1.bf16.msra.mxu0 0
      %2568 = vmatprep.subr.bf16.mxu0 0
      %2569 = vmatpush1.bf16.msra.mxu0 0
      %2570 = vmatprep.subr.bf16.mxu0 0
      %2571 = vmatpush1.bf16.msra.mxu0 0
      %2572 = vmatprep.mubr.bf16.mxu0 0
      %2573 = vmatmul.mubr.bf16.gmra.mrb[0].mxu0 %v2524
      %v2574 = vpop.f32.mrb[0].mxu0
      %v2575 = vadd.f32 %v2415, %v2574
      %v2576 = vpop.f32.mrb[0].mxu0
      %v2577 = vpop.f32.mrb[0].mxu0
      %v2578 = vadd.f32 %v2420, %v2577
      %v2579 = vpop.f32.mrb[0].mxu0
      %2580 = vmatprep.mubr.bf16.mxu0 0
      %2581 = vmatmul.mubr.bf16.gmra.mrb[0].mxu0 %v2525
      %v2582 = vpop.f32.mrb[0].mxu0
      %v2583 = vadd.f32 %v2425, %v2582
      %v2584 = vpop.f32.mrb[0].mxu0
      %v2585 = vpop.f32.mrb[0].mxu0
      %v2586 = vadd.f32 %v2430, %v2585
      %v2587 = vpop.f32.mrb[0].mxu0
      %2588 = vmatprep.mubr.bf16.mxu0 0
      %2589 = vmatmul.mubr.bf16.gmra.mrb[0].mxu0 %v2526
      %v2590 = vpop.f32.mrb[0].mxu0
      %v2591 = vadd.f32 %v2435, %v2590
      %v2592 = vpop.f32.mrb[0].mxu0
      %v2593 = vpop.f32.mrb[0].mxu0
      %v2594 = vadd.f32 %v2440, %v2593
      %v2595 = vpop.f32.mrb[0].mxu0
      %2596 = vmatprep.mubr.bf16.mxu0 0
      %2597 = vmatmul.mubr.bf16.gmra.mrb[0].mxu0 %v2527
      %v2598 = vpop.f32.mrb[0].mxu0
      %v2599 = vadd.f32 %v2445, %v2598
      %v2600 = vpop.f32.mrb[0].mxu0
      %v2601 = vpop.f32.mrb[0].mxu0
      %v2602 = vadd.f32 %v2450, %v2601
      %v2603 = vpop.f32.mrb[0].mxu0
      %2604 = vmatprep.mubr.bf16.mxu0 0
      %2605 = vmatmul.mubr.bf16.gmra.mrb[0].mxu0 %v2528
      %v2606 = vpop.f32.mrb[0].mxu0
      %v2607 = vadd.f32 %v2455, %v2606
      %v2608 = vpop.f32.mrb[0].mxu0
      %v2609 = vpop.f32.mrb[0].mxu0
      %v2610 = vadd.f32 %v2460, %v2609
      %v2611 = vpop.f32.mrb[0].mxu0
      %2612 = vmatprep.mubr.bf16.mxu0 0
      %2613 = vmatmul.mubr.bf16.gmra.mrb[0].mxu0 %v2529
      %v2614 = vpop.f32.mrb[0].mxu0
      %v2615 = vadd.f32 %v2465, %v2614
      %v2616 = vpop.f32.mrb[0].mxu0
      %v2617 = vpop.f32.mrb[0].mxu0
      %v2618 = vadd.f32 %v2470, %v2617
      %v2619 = vpop.f32.mrb[0].mxu0
      %2620 = vmatprep.mubr.bf16.mxu0 0
      %2621 = vmatmul.mubr.bf16.gmra.mrb[0].mxu0 %v2530
      %v2622 = vpop.f32.mrb[0].mxu0
      %v2623 = vadd.f32 %v2475, %v2622
      %v2624 = vpop.f32.mrb[0].mxu0
      %v2625 = vpop.f32.mrb[0].mxu0
      %v2626 = vadd.f32 %v2480, %v2625
      %v2627 = vpop.f32.mrb[0].mxu0
      %2628 = vmatprep.mubr.bf16.mxu0 0
      %2629 = vmatmul.mubr.bf16.gmra.mrb[0].mxu0 %v2531
      %v2630 = vpop.f32.mrb[0].mxu0
      %v2631 = vadd.f32 %v2485, %v2630
      %v2632 = vpop.f32.mrb[0].mxu0
      %v2633 = vpop.f32.mrb[0].mxu0
      %v2634 = vadd.f32 %v2490, %v2633
      %v2635 = vpop.f32.mrb[0].mxu0
      %2636 = vdwg.mxu0
      %v2637 = vadd.f32 %v1669, %v2575
      %v2638 = vadd.f32 %v1670, %v2578
      %v2639 = vadd.f32 %v1671, %v2583
      %v2640 = vadd.f32 %v1672, %v2586
      %v2641 = vadd.f32 %v1673, %v2591
      %v2642 = vadd.f32 %v1674, %v2594
      %v2643 = vadd.f32 %v1675, %v2599
      %v2644 = vadd.f32 %v1676, %v2602
      %v2645 = vadd.f32 %v1677, %v2607
      %v2646 = vadd.f32 %v1678, %v2610
      %v2647 = vadd.f32 %v1679, %v2615
      %v2648 = vadd.f32 %v1680, %v2618
      %v2649 = vadd.f32 %v1681, %v2623
      %v2650 = vadd.f32 %v1682, %v2626
      %v2651 = vadd.f32 %v1683, %v2631
      %v2652 = vadd.f32 %v1684, %v2634
      %2653 = vst [vmem:[#allocation2] sm:$0xff] %v2637
      %2654 = vst [vmem:[#allocation2 + $0x8] sm:$0xff] %v2638
      %2655 = vst [vmem:[#allocation2 + $0x10] sm:$0xff] %v2639
      %2656 = vst [vmem:[#allocation2 + $0x18] sm:$0xff] %v2640
      %2657 = vst [vmem:[#allocation2 + $0x20] sm:$0xff] %v2641
      %2658 = vst [vmem:[#allocation2 + $0x28] sm:$0xff] %v2642
      %2659 = vst [vmem:[#allocation2 + $0x30] sm:$0xff] %v2643
      %2660 = vst [vmem:[#allocation2 + $0x38] sm:$0xff] %v2644
      %2661 = vst [vmem:[#allocation2 + $0x40] sm:$0xff] %v2645
      %2662 = vst [vmem:[#allocation2 + $0x48] sm:$0xff] %v2646
      %2663 = vst [vmem:[#allocation2 + $0x50] sm:$0xff] %v2647
      %2664 = vst [vmem:[#allocation2 + $0x58] sm:$0xff] %v2648
      %2665 = vst [vmem:[#allocation2 + $0x60] sm:$0xff] %v2649
      %2666 = vst [vmem:[#allocation2 + $0x68] sm:$0xff] %v2650
      %2667 = vst [vmem:[#allocation2 + $0x70] sm:$0xff] %v2651
      %2668 = vst [vmem:[#allocation2 + $0x78] sm:$0xff] %v2652
      %v2669 = vld [vmem:[#allocation2] sm:$0xff]
      %v2670 = vld [vmem:[#allocation2 + $0x8] sm:$0xff]
      %v2671 = vld [vmem:[#allocation2 + $0x10] sm:$0xff]
      %v2672 = vld [vmem:[#allocation2 + $0x18] sm:$0xff]
      %v2673 = vld [vmem:[#allocation2 + $0x20] sm:$0xff]
      %v2674 = vld [vmem:[#allocation2 + $0x28] sm:$0xff]
      %v2675 = vld [vmem:[#allocation2 + $0x30] sm:$0xff]
      %v2676 = vld [vmem:[#allocation2 + $0x38] sm:$0xff]
      %v2677 = vld [vmem:[#allocation2 + $0x40] sm:$0xff]
      %v2678 = vld [vmem:[#allocation2 + $0x48] sm:$0xff]
      %v2679 = vld [vmem:[#allocation2 + $0x50] sm:$0xff]
      %v2680 = vld [vmem:[#allocation2 + $0x58] sm:$0xff]
      %v2681 = vld [vmem:[#allocation2 + $0x60] sm:$0xff]
      %v2682 = vld [vmem:[#allocation2 + $0x68] sm:$0xff]
      %v2683 = vld [vmem:[#allocation2 + $0x70] sm:$0xff]
      %v2684 = vld [vmem:[#allocation2 + $0x78] sm:$0xff]
      %v2685 = vpack.c.bf16 %v2670, %v2669
      %v2686 = vpack.c.bf16 %v2672, %v2671
      %v2687 = vpack.c.bf16 %v2674, %v2673
      %v2688 = vpack.c.bf16 %v2676, %v2675
      %v2689 = vpack.c.bf16 %v2678, %v2677
      %v2690 = vpack.c.bf16 %v2680, %v2679
      %v2691 = vpack.c.bf16 %v2682, %v2681
      %v2692 = vpack.c.bf16 %v2684, %v2683
      %s2693 = scalar_lea.vmem %s3, 384
      %v2694 = vld [vmem:[%s2693] sm:$0xf]
      %v2695 = vld [vmem:[%s2693 + $0x4] sm:$0xf]
      %v2696 = vld [vmem:[%s2693 + $0x8] sm:$0xf]
      %v2697 = vld [vmem:[%s2693 + $0xc] sm:$0xf]
      %v2698 = vld [vmem:[%s2693 + $0x10] sm:$0xf]
      %v2699 = vld [vmem:[%s2693 + $0x14] sm:$0xf]
      %v2700 = vld [vmem:[%s2693 + $0x18] sm:$0xf]
      %v2701 = vld [vmem:[%s2693 + $0x1c] sm:$0xf]
      %v2702 = vld [vmem:[%s2693 + $0x20] sm:$0xf]
      %v2703 = vld [vmem:[%s2693 + $0x24] sm:$0xf]
      %v2704 = vld [vmem:[%s2693 + $0x28] sm:$0xf]
      %v2705 = vld [vmem:[%s2693 + $0x2c] sm:$0xf]
      %v2706 = vld [vmem:[%s2693 + $0x30] sm:$0xf]
      %v2707 = vld [vmem:[%s2693 + $0x34] sm:$0xf]
      %v2708 = vld [vmem:[%s2693 + $0x38] sm:$0xf]
      %v2709 = vld [vmem:[%s2693 + $0x3c] sm:$0xf]
      %v2710 = vld [vmem:[%s2693 + $0x40] sm:$0xf]
      %v2711 = vld [vmem:[%s2693 + $0x44] sm:$0xf]
      %v2712 = vld [vmem:[%s2693 + $0x48] sm:$0xf]
      %v2713 = vld [vmem:[%s2693 + $0x4c] sm:$0xf]
      %v2714 = vld [vmem:[%s2693 + $0x50] sm:$0xf]
      %v2715 = vld [vmem:[%s2693 + $0x54] sm:$0xf]
      %v2716 = vld [vmem:[%s2693 + $0x58] sm:$0xf]
      %v2717 = vld [vmem:[%s2693 + $0x5c] sm:$0xf]
      %v2718 = vld [vmem:[%s2693 + $0x60] sm:$0xf]
      %v2719 = vld [vmem:[%s2693 + $0x64] sm:$0xf]
      %v2720 = vld [vmem:[%s2693 + $0x68] sm:$0xf]
      %v2721 = vld [vmem:[%s2693 + $0x6c] sm:$0xf]
      %v2722 = vld [vmem:[%s2693 + $0x70] sm:$0xf]
      %v2723 = vld [vmem:[%s2693 + $0x74] sm:$0xf]
      %v2724 = vld [vmem:[%s2693 + $0x78] sm:$0xf]
      %v2725 = vld [vmem:[%s2693 + $0x7c] sm:$0xf]
      %v2726 = vld [vmem:[%s2693 + $0x80] sm:$0xf]
      %v2727 = vld [vmem:[%s2693 + $0x84] sm:$0xf]
      %v2728 = vld [vmem:[%s2693 + $0x88] sm:$0xf]
      %v2729 = vld [vmem:[%s2693 + $0x8c] sm:$0xf]
      %v2730 = vld [vmem:[%s2693 + $0x90] sm:$0xf]
      %v2731 = vld [vmem:[%s2693 + $0x94] sm:$0xf]
      %v2732 = vld [vmem:[%s2693 + $0x98] sm:$0xf]
      %v2733 = vld [vmem:[%s2693 + $0x9c] sm:$0xf]
      %v2734 = vld [vmem:[%s2693 + $0xa0] sm:$0xf]
      %v2735 = vld [vmem:[%s2693 + $0xa4] sm:$0xf]
      %v2736 = vld [vmem:[%s2693 + $0xa8] sm:$0xf]
      %v2737 = vld [vmem:[%s2693 + $0xac] sm:$0xf]
      %v2738 = vld [vmem:[%s2693 + $0xb0] sm:$0xf]
      %v2739 = vld [vmem:[%s2693 + $0xb4] sm:$0xf]
      %v2740 = vld [vmem:[%s2693 + $0xb8] sm:$0xf]
      %v2741 = vld [vmem:[%s2693 + $0xbc] sm:$0xf]
      %v2790 = vunpack.c.l.b16 %v2694
      %v2791 = vunpack.c.l.b16 %v2695
      %v2792 = vunpack.c.l.b16 %v2696
      %v2793 = vunpack.c.l.b16 %v2697
      %v2794 = vunpack.c.l.b16 %v2698
      %v2795 = vunpack.c.l.b16 %v2699
      %v2796 = vunpack.c.l.b16 %v2700
      %v2797 = vunpack.c.l.b16 %v2701
      %v2798 = vunpack.c.l.b16 %v2702
      %v2799 = vunpack.c.l.b16 %v2703
      %v2800 = vunpack.c.l.b16 %v2704
      %v2801 = vunpack.c.l.b16 %v2705
      %v2802 = vunpack.c.l.b16 %v2706
      %v2803 = vunpack.c.l.b16 %v2707
      %v2804 = vunpack.c.l.b16 %v2708
      %v2805 = vunpack.c.l.b16 %v2709
      %v2806 = vunpack.c.l.b16 %v2710
      %v2807 = vunpack.c.l.b16 %v2711
      %v2808 = vunpack.c.l.b16 %v2712
      %v2809 = vunpack.c.l.b16 %v2713
      %v2810 = vunpack.c.l.b16 %v2714
      %v2811 = vunpack.c.l.b16 %v2715
      %v2812 = vunpack.c.l.b16 %v2716
      %v2813 = vunpack.c.l.b16 %v2717
      %v2814 = vunpack.c.l.b16 %v2718
      %v2815 = vunpack.c.l.b16 %v2719
      %v2816 = vunpack.c.l.b16 %v2720
      %v2817 = vunpack.c.l.b16 %v2721
      %v2818 = vunpack.c.l.b16 %v2722
      %v2819 = vunpack.c.l.b16 %v2723
      %v2820 = vunpack.c.l.b16 %v2724
      %v2821 = vunpack.c.l.b16 %v2725
      %v2822 = vunpack.c.l.b16 %v2726
      %v2823 = vunpack.c.l.b16 %v2727
      %v2824 = vunpack.c.l.b16 %v2728
      %v2825 = vunpack.c.l.b16 %v2729
      %v2826 = vunpack.c.l.b16 %v2730
      %v2827 = vunpack.c.l.b16 %v2731
      %v2828 = vunpack.c.l.b16 %v2732
      %v2829 = vunpack.c.l.b16 %v2733
      %v2830 = vunpack.c.l.b16 %v2734
      %v2831 = vunpack.c.l.b16 %v2735
      %v2832 = vunpack.c.l.b16 %v2736
      %v2833 = vunpack.c.l.b16 %v2737
      %v2834 = vunpack.c.l.b16 %v2738
      %v2835 = vunpack.c.l.b16 %v2739
      %v2836 = vunpack.c.l.b16 %v2740
      %v2837 = vunpack.c.l.b16 %v2741
      %v2838 = vpack.c.b16 %v2791, %v2790
      %v2839 = vpack.c.b16 %v2793, %v2792
      %v2840 = vpack.c.b16 %v2795, %v2794
      %v2841 = vpack.c.b16 %v2797, %v2796
      %v2842 = vpack.c.b16 %v2799, %v2798
      %v2843 = vpack.c.b16 %v2801, %v2800
      %v2844 = vpack.c.b16 %v2803, %v2802
      %v2845 = vpack.c.b16 %v2805, %v2804
      %v2846 = vpack.c.b16 %v2807, %v2806
      %v2847 = vpack.c.b16 %v2809, %v2808
      %v2848 = vpack.c.b16 %v2811, %v2810
      %v2849 = vpack.c.b16 %v2813, %v2812
      %v2850 = vpack.c.b16 %v2815, %v2814
      %v2851 = vpack.c.b16 %v2817, %v2816
      %v2852 = vpack.c.b16 %v2819, %v2818
      %v2853 = vpack.c.b16 %v2821, %v2820
      %v2854 = vpack.c.b16 %v2823, %v2822
      %v2855 = vpack.c.b16 %v2825, %v2824
      %v2856 = vpack.c.b16 %v2827, %v2826
      %v2857 = vpack.c.b16 %v2829, %v2828
      %v2858 = vpack.c.b16 %v2831, %v2830
      %v2859 = vpack.c.b16 %v2833, %v2832
      %v2860 = vpack.c.b16 %v2835, %v2834
      %v2861 = vpack.c.b16 %v2837, %v2836
      %2886 = vmatprep.subr.bf16.mxu0 0
      %2887 = vmatpush1.bf16.msra.mxu0 %v2685
      %2888 = vmatprep.subr.bf16.mxu0 0
      %2889 = vmatpush1.bf16.msra.mxu0 %v2686
      %2890 = vmatprep.subr.bf16.mxu0 0
      %2891 = vmatpush1.bf16.msra.mxu0 %v2687
      %2892 = vmatprep.subr.bf16.mxu0 0
      %2893 = vmatpush1.bf16.msra.mxu0 %v2688
      %2894 = vmatprep.subr.bf16.mxu0 0
      %2895 = vmatpush1.bf16.msra.mxu0 %v2689
      %2896 = vmatprep.subr.bf16.mxu0 0
      %2897 = vmatpush1.bf16.msra.mxu0 %v2690
      %2898 = vmatprep.subr.bf16.mxu0 0
      %2899 = vmatpush1.bf16.msra.mxu0 %v2691
      %2900 = vmatprep.subr.bf16.mxu0 0
      %2901 = vmatpush1.bf16.msra.mxu0 %v2692
      %2902 = vmatprep.subr.bf16.mxu0 0
      %2903 = vmatpush1.bf16.msra.mxu0 0
      %2904 = vmatprep.subr.bf16.mxu0 0
      %2905 = vmatpush1.bf16.msra.mxu0 0
      %2906 = vmatprep.subr.bf16.mxu0 0
      %2907 = vmatpush1.bf16.msra.mxu0 0
      %2908 = vmatprep.subr.bf16.mxu0 0
      %2909 = vmatpush1.bf16.msra.mxu0 0
      %2910 = vmatprep.subr.bf16.mxu0 0
      %2911 = vmatpush1.bf16.msra.mxu0 0
      %2912 = vmatprep.subr.bf16.mxu0 0
      %2913 = vmatpush1.bf16.msra.mxu0 0
      %2914 = vmatprep.subr.bf16.mxu0 0
      %2915 = vmatpush1.bf16.msra.mxu0 0
      %2916 = vmatprep.subr.bf16.mxu0 0
      %2917 = vmatpush1.bf16.msra.mxu0 0
      %2918 = vmatprep.mubr.bf16.mxu0 0
      %2919 = vmatmul.mubr.bf16.gmra.mrb[0].mxu0 %v2838
      %v2920 = vpop.f32.mrb[0].mxu0
      %v2921 = vadd.f32 0.0, %v2920
      %v2922 = vpop.f32.mrb[0].mxu0
      %v2923 = vpop.f32.mrb[0].mxu0
      %v2924 = vadd.f32 0.0, %v2923
      %v2925 = vpop.f32.mrb[0].mxu0
      %2926 = vmatprep.mubr.bf16.mxu0 0
      %2927 = vmatmul.mubr.bf16.gmra.mrb[0].mxu0 %v2839
      %v2928 = vpop.f32.mrb[0].mxu0
      %v2929 = vadd.f32 0.0, %v2928
      %v2930 = vpop.f32.mrb[0].mxu0
      %v2931 = vpop.f32.mrb[0].mxu0
      %v2932 = vadd.f32 0.0, %v2931
      %v2933 = vpop.f32.mrb[0].mxu0
      %2934 = vmatprep.mubr.bf16.mxu0 0
      %2935 = vmatmul.mubr.bf16.gmra.mrb[0].mxu0 %v2840
      %v2936 = vpop.f32.mrb[0].mxu0
      %v2937 = vadd.f32 0.0, %v2936
      %v2938 = vpop.f32.mrb[0].mxu0
      %v2939 = vpop.f32.mrb[0].mxu0
      %v2940 = vadd.f32 0.0, %v2939
      %v2941 = vpop.f32.mrb[0].mxu0
      %2942 = vmatprep.mubr.bf16.mxu0 0
      %2943 = vmatmul.mubr.bf16.gmra.mrb[0].mxu0 %v2841
      %v2944 = vpop.f32.mrb[0].mxu0
      %v2945 = vadd.f32 0.0, %v2944
      %v2946 = vpop.f32.mrb[0].mxu0
      %v2947 = vpop.f32.mrb[0].mxu0
      %v2948 = vadd.f32 0.0, %v2947
      %v2949 = vpop.f32.mrb[0].mxu0
      %2950 = vmatprep.mubr.bf16.mxu0 0
      %2951 = vmatmul.mubr.bf16.gmra.mrb[0].mxu0 %v2842
      %v2952 = vpop.f32.mrb[0].mxu0
      %v2953 = vadd.f32 0.0, %v2952
      %v2954 = vpop.f32.mrb[0].mxu0
      %v2955 = vpop.f32.mrb[0].mxu0
      %v2956 = vadd.f32 0.0, %v2955
      %v2957 = vpop.f32.mrb[0].mxu0
      %2958 = vmatprep.mubr.bf16.mxu0 0
      %2959 = vmatmul.mubr.bf16.gmra.mrb[0].mxu0 %v2843
      %v2960 = vpop.f32.mrb[0].mxu0
      %v2961 = vadd.f32 0.0, %v2960
      %v2962 = vpop.f32.mrb[0].mxu0
      %v2963 = vpop.f32.mrb[0].mxu0
      %v2964 = vadd.f32 0.0, %v2963
      %v2965 = vpop.f32.mrb[0].mxu0
      %2966 = vmatprep.mubr.bf16.mxu0 0
      %2967 = vmatmul.mubr.bf16.gmra.mrb[0].mxu0 %v2844
      %v2968 = vpop.f32.mrb[0].mxu0
      %v2969 = vadd.f32 0.0, %v2968
      %v2970 = vpop.f32.mrb[0].mxu0
      %v2971 = vpop.f32.mrb[0].mxu0
      %v2972 = vadd.f32 0.0, %v2971
      %v2973 = vpop.f32.mrb[0].mxu0
      %2974 = vmatprep.mubr.bf16.mxu0 0
      %2975 = vmatmul.mubr.bf16.gmra.mrb[0].mxu0 %v2845
      %v2976 = vpop.f32.mrb[0].mxu0
      %v2977 = vadd.f32 0.0, %v2976
      %v2978 = vpop.f32.mrb[0].mxu0
      %v2979 = vpop.f32.mrb[0].mxu0
      %v2980 = vadd.f32 0.0, %v2979
      %v2981 = vpop.f32.mrb[0].mxu0
      %2982 = vmatprep.mubr.bf16.mxu0 0
      %2983 = vmatmul.mubr.bf16.gmra.mrb[0].mxu0 %v2846
      %v2984 = vpop.f32.mrb[0].mxu0
      %v2985 = vadd.f32 0.0, %v2984
      %v2986 = vpop.f32.mrb[0].mxu0
      %v2987 = vpop.f32.mrb[0].mxu0
      %v2988 = vadd.f32 0.0, %v2987
      %v2989 = vpop.f32.mrb[0].mxu0
      %2990 = vmatprep.mubr.bf16.mxu0 0
      %2991 = vmatmul.mubr.bf16.gmra.mrb[0].mxu0 %v2847
      %v2992 = vpop.f32.mrb[0].mxu0
      %v2993 = vadd.f32 0.0, %v2992
      %v2994 = vpop.f32.mrb[0].mxu0
      %v2995 = vpop.f32.mrb[0].mxu0
      %v2996 = vadd.f32 0.0, %v2995
      %v2997 = vpop.f32.mrb[0].mxu0
      %2998 = vmatprep.mubr.bf16.mxu0 0
      %2999 = vmatmul.mubr.bf16.gmra.mrb[0].mxu0 %v2848
      %v3000 = vpop.f32.mrb[0].mxu0
      %v3001 = vadd.f32 0.0, %v3000
      %v3002 = vpop.f32.mrb[0].mxu0
      %v3003 = vpop.f32.mrb[0].mxu0
      %v3004 = vadd.f32 0.0, %v3003
      %v3005 = vpop.f32.mrb[0].mxu0
      %3006 = vmatprep.mubr.bf16.mxu0 0
      %3007 = vmatmul.mubr.bf16.gmra.mrb[0].mxu0 %v2849
      %v3008 = vpop.f32.mrb[0].mxu0
      %v3009 = vadd.f32 0.0, %v3008
      %v3010 = vpop.f32.mrb[0].mxu0
      %v3011 = vpop.f32.mrb[0].mxu0
      %v3012 = vadd.f32 0.0, %v3011
      %v3013 = vpop.f32.mrb[0].mxu0
      %3014 = vmatprep.mubr.bf16.mxu0 0
      %3015 = vmatmul.mubr.bf16.gmra.mrb[0].mxu0 %v2850
      %v3016 = vpop.f32.mrb[0].mxu0
      %v3017 = vadd.f32 0.0, %v3016
      %v3018 = vpop.f32.mrb[0].mxu0
      %v3019 = vpop.f32.mrb[0].mxu0
      %v3020 = vadd.f32 0.0, %v3019
      %v3021 = vpop.f32.mrb[0].mxu0
      %3022 = vmatprep.mubr.bf16.mxu0 0
      %3023 = vmatmul.mubr.bf16.gmra.mrb[0].mxu0 %v2851
      %v3024 = vpop.f32.mrb[0].mxu0
      %v3025 = vadd.f32 0.0, %v3024
      %v3026 = vpop.f32.mrb[0].mxu0
      %v3027 = vpop.f32.mrb[0].mxu0
      %v3028 = vadd.f32 0.0, %v3027
      %v3029 = vpop.f32.mrb[0].mxu0
      %3030 = vmatprep.mubr.bf16.mxu0 0
      %3031 = vmatmul.mubr.bf16.gmra.mrb[0].mxu0 %v2852
      %v3032 = vpop.f32.mrb[0].mxu0
      %v3033 = vadd.f32 0.0, %v3032
      %v3034 = vpop.f32.mrb[0].mxu0
      %v3035 = vpop.f32.mrb[0].mxu0
      %v3036 = vadd.f32 0.0, %v3035
      %v3037 = vpop.f32.mrb[0].mxu0
      %3038 = vmatprep.mubr.bf16.mxu0 0
      %3039 = vmatmul.mubr.bf16.gmra.mrb[0].mxu0 %v2853
      %v3040 = vpop.f32.mrb[0].mxu0
      %v3041 = vadd.f32 0.0, %v3040
      %v3042 = vpop.f32.mrb[0].mxu0
      %v3043 = vpop.f32.mrb[0].mxu0
      %v3044 = vadd.f32 0.0, %v3043
      %v3045 = vpop.f32.mrb[0].mxu0
      %3046 = vmatprep.mubr.bf16.mxu0 0
      %3047 = vmatmul.mubr.bf16.gmra.mrb[0].mxu0 %v2854
      %v3048 = vpop.f32.mrb[0].mxu0
      %v3049 = vadd.f32 0.0, %v3048
      %v3050 = vpop.f32.mrb[0].mxu0
      %v3051 = vpop.f32.mrb[0].mxu0
      %v3052 = vadd.f32 0.0, %v3051
      %v3053 = vpop.f32.mrb[0].mxu0
      %3054 = vmatprep.mubr.bf16.mxu0 0
      %3055 = vmatmul.mubr.bf16.gmra.mrb[0].mxu0 %v2855
      %v3056 = vpop.f32.mrb[0].mxu0
      %v3057 = vadd.f32 0.0, %v3056
      %v3058 = vpop.f32.mrb[0].mxu0
      %v3059 = vpop.f32.mrb[0].mxu0
      %v3060 = vadd.f32 0.0, %v3059
      %v3061 = vpop.f32.mrb[0].mxu0
      %3062 = vmatprep.mubr.bf16.mxu0 0
      %3063 = vmatmul.mubr.bf16.gmra.mrb[0].mxu0 %v2856
      %v3064 = vpop.f32.mrb[0].mxu0
      %v3065 = vadd.f32 0.0, %v3064
      %v3066 = vpop.f32.mrb[0].mxu0
      %v3067 = vpop.f32.mrb[0].mxu0
      %v3068 = vadd.f32 0.0, %v3067
      %v3069 = vpop.f32.mrb[0].mxu0
      %3070 = vmatprep.mubr.bf16.mxu0 0
      %3071 = vmatmul.mubr.bf16.gmra.mrb[0].mxu0 %v2857
      %v3072 = vpop.f32.mrb[0].mxu0
      %v3073 = vadd.f32 0.0, %v3072
      %v3074 = vpop.f32.mrb[0].mxu0
      %v3075 = vpop.f32.mrb[0].mxu0
      %v3076 = vadd.f32 0.0, %v3075
      %v3077 = vpop.f32.mrb[0].mxu0
      %3078 = vmatprep.mubr.bf16.mxu0 0
      %3079 = vmatmul.mubr.bf16.gmra.mrb[0].mxu0 %v2858
      %v3080 = vpop.f32.mrb[0].mxu0
      %v3081 = vadd.f32 0.0, %v3080
      %v3082 = vpop.f32.mrb[0].mxu0
      %v3083 = vpop.f32.mrb[0].mxu0
      %v3084 = vadd.f32 0.0, %v3083
      %v3085 = vpop.f32.mrb[0].mxu0
      %3086 = vmatprep.mubr.bf16.mxu0 0
      %3087 = vmatmul.mubr.bf16.gmra.mrb[0].mxu0 %v2859
      %v3088 = vpop.f32.mrb[0].mxu0
      %v3089 = vadd.f32 0.0, %v3088
      %v3090 = vpop.f32.mrb[0].mxu0
      %v3091 = vpop.f32.mrb[0].mxu0
      %v3092 = vadd.f32 0.0, %v3091
      %v3093 = vpop.f32.mrb[0].mxu0
      %3094 = vmatprep.mubr.bf16.mxu0 0
      %3095 = vmatmul.mubr.bf16.gmra.mrb[0].mxu0 %v2860
      %v3096 = vpop.f32.mrb[0].mxu0
      %v3097 = vadd.f32 0.0, %v3096
      %v3098 = vpop.f32.mrb[0].mxu0
      %v3099 = vpop.f32.mrb[0].mxu0
      %v3100 = vadd.f32 0.0, %v3099
      %v3101 = vpop.f32.mrb[0].mxu0
      %3102 = vmatprep.mubr.bf16.mxu0 0
      %3103 = vmatmul.mubr.bf16.gmra.mrb[0].mxu0 %v2861
      %v3104 = vpop.f32.mrb[0].mxu0
      %v3105 = vadd.f32 0.0, %v3104
      %v3106 = vpop.f32.mrb[0].mxu0
      %v3107 = vpop.f32.mrb[0].mxu0
      %v3108 = vadd.f32 0.0, %v3107
      %v3109 = vpop.f32.mrb[0].mxu0
      %3110 = vdwg.mxu0
      %3111 = vrot.lane.b32.xlu0 %v2921, 4
      %v3112 = vpop.permute.xlu0 %3111
      %3113 = vrot.lane.b32.xlu0 %v2924, 4
      %v3114 = vpop.permute.xlu0 %3113
      %3115 = vrot.lane.b32.xlu0 %v2929, 4
      %v3116 = vpop.permute.xlu0 %3115
      %3117 = vrot.lane.b32.xlu0 %v2932, 4
      %v3118 = vpop.permute.xlu0 %3117
      %3119 = vrot.lane.b32.xlu0 %v2937, 4
      %v3120 = vpop.permute.xlu0 %3119
      %3121 = vrot.lane.b32.xlu0 %v2940, 4
      %v3122 = vpop.permute.xlu0 %3121
      %3123 = vrot.lane.b32.xlu0 %v2945, 4
      %v3124 = vpop.permute.xlu0 %3123
      %3125 = vrot.lane.b32.xlu0 %v2948, 4
      %v3126 = vpop.permute.xlu0 %3125
      %3127 = vrot.lane.b32.xlu0 %v2953, 4
      %v3128 = vpop.permute.xlu0 %3127
      %3129 = vrot.lane.b32.xlu0 %v2956, 4
      %v3130 = vpop.permute.xlu0 %3129
      %3131 = vrot.lane.b32.xlu0 %v2961, 4
      %v3132 = vpop.permute.xlu0 %3131
      %3133 = vrot.lane.b32.xlu0 %v2964, 4
      %v3134 = vpop.permute.xlu0 %3133
      %3135 = vrot.lane.b32.xlu0 %v2969, 4
      %v3136 = vpop.permute.xlu0 %3135
      %3137 = vrot.lane.b32.xlu0 %v2972, 4
      %v3138 = vpop.permute.xlu0 %3137
      %3139 = vrot.lane.b32.xlu0 %v2977, 4
      %v3140 = vpop.permute.xlu0 %3139
      %3141 = vrot.lane.b32.xlu0 %v2980, 4
      %v3142 = vpop.permute.xlu0 %3141
      %3143 = vrot.lane.b32.xlu0 %v3049, 124
      %v3144 = vpop.permute.xlu0 %3143
      %3145 = vrot.lane.b32.xlu0 %v3052, 124
      %v3146 = vpop.permute.xlu0 %3145
      %3147 = vrot.lane.b32.xlu0 %v3057, 124
      %v3148 = vpop.permute.xlu0 %3147
      %3149 = vrot.lane.b32.xlu0 %v3060, 124
      %v3150 = vpop.permute.xlu0 %3149
      %3151 = vrot.lane.b32.xlu0 %v3065, 124
      %v3152 = vpop.permute.xlu0 %3151
      %3153 = vrot.lane.b32.xlu0 %v3068, 124
      %v3154 = vpop.permute.xlu0 %3153
      %3155 = vrot.lane.b32.xlu0 %v3073, 124
      %v3156 = vpop.permute.xlu0 %3155
      %3157 = vrot.lane.b32.xlu0 %v3076, 124
      %v3158 = vpop.permute.xlu0 %3157
      %3159 = vrot.lane.b32.xlu0 %v3081, 124
      %v3160 = vpop.permute.xlu0 %3159
      %3161 = vrot.lane.b32.xlu0 %v3084, 124
      %v3162 = vpop.permute.xlu0 %3161
      %3163 = vrot.lane.b32.xlu0 %v3089, 124
      %v3164 = vpop.permute.xlu0 %3163
      %3165 = vrot.lane.b32.xlu0 %v3092, 124
      %v3166 = vpop.permute.xlu0 %3165
      %3167 = vrot.lane.b32.xlu0 %v3097, 124
      %v3168 = vpop.permute.xlu0 %3167
      %3169 = vrot.lane.b32.xlu0 %v3100, 124
      %v3170 = vpop.permute.xlu0 %3169
      %3171 = vrot.lane.b32.xlu0 %v3105, 124
      %v3172 = vpop.permute.xlu0 %3171
      %3173 = vrot.lane.b32.xlu0 %v3108, 124
      %v3174 = vpop.permute.xlu0 %3173
      %s3175 = scalar_lea.vmem %s4, 256
      %v3176 = vld [vmem:[%s3175] sm:$0xff]
      %v3177 = vld [vmem:[%s3175 + $0x8] sm:$0xff]
      %v3178 = vld [vmem:[%s3175 + $0x10] sm:$0xff]
      %v3179 = vld [vmem:[%s3175 + $0x18] sm:$0xff]
      %v3180 = vld [vmem:[%s3175 + $0x20] sm:$0xff]
      %v3181 = vld [vmem:[%s3175 + $0x28] sm:$0xff]
      %v3182 = vld [vmem:[%s3175 + $0x30] sm:$0xff]
      %v3183 = vld [vmem:[%s3175 + $0x38] sm:$0xff]
      %v3184 = vld [vmem:[%s3175 + $0x40] sm:$0xff]
      %v3185 = vld [vmem:[%s3175 + $0x48] sm:$0xff]
      %v3186 = vld [vmem:[%s3175 + $0x50] sm:$0xff]
      %v3187 = vld [vmem:[%s3175 + $0x58] sm:$0xff]
      %v3188 = vld [vmem:[%s3175 + $0x60] sm:$0xff]
      %v3189 = vld [vmem:[%s3175 + $0x68] sm:$0xff]
      %v3190 = vld [vmem:[%s3175 + $0x70] sm:$0xff]
      %v3191 = vld [vmem:[%s3175 + $0x78] sm:$0xff]
      %3193 = vset.pattern.permute.xlu0 0
      %3194 = vperm.xlu0 %3193, %v3176
      %v3195 = vpop.permute.xlu0 %3194
      %3198 = vset.pattern.permute.xlu0 0
      %3199 = vperm.xlu0 %3198, %v3177
      %v3200 = vpop.permute.xlu0 %3199
      %3203 = vset.pattern.permute.xlu0 0
      %3204 = vperm.xlu0 %3203, %v3178
      %v3205 = vpop.permute.xlu0 %3204
      %3208 = vset.pattern.permute.xlu0 0
      %3209 = vperm.xlu0 %3208, %v3179
      %v3210 = vpop.permute.xlu0 %3209
      %3213 = vset.pattern.permute.xlu0 0
      %3214 = vperm.xlu0 %3213, %v3180
      %v3215 = vpop.permute.xlu0 %3214
      %3218 = vset.pattern.permute.xlu0 0
      %3219 = vperm.xlu0 %3218, %v3181
      %v3220 = vpop.permute.xlu0 %3219
      %3223 = vset.pattern.permute.xlu0 0
      %3224 = vperm.xlu0 %3223, %v3182
      %v3225 = vpop.permute.xlu0 %3224
      %3228 = vset.pattern.permute.xlu0 0
      %3229 = vperm.xlu0 %3228, %v3183
      %v3230 = vpop.permute.xlu0 %3229
      %3233 = vset.pattern.permute.xlu0 0
      %3234 = vperm.xlu0 %3233, %v3184
      %v3235 = vpop.permute.xlu0 %3234
      %3238 = vset.pattern.permute.xlu0 0
      %3239 = vperm.xlu0 %3238, %v3185
      %v3240 = vpop.permute.xlu0 %3239
      %3243 = vset.pattern.permute.xlu0 0
      %3244 = vperm.xlu0 %3243, %v3186
      %v3245 = vpop.permute.xlu0 %3244
      %3248 = vset.pattern.permute.xlu0 0
      %3249 = vperm.xlu0 %3248, %v3187
      %v3250 = vpop.permute.xlu0 %3249
      %3253 = vset.pattern.permute.xlu0 0
      %3254 = vperm.xlu0 %3253, %v3188
      %v3255 = vpop.permute.xlu0 %3254
      %3258 = vset.pattern.permute.xlu0 0
      %3259 = vperm.xlu0 %3258, %v3189
      %v3260 = vpop.permute.xlu0 %3259
      %3263 = vset.pattern.permute.xlu0 0
      %3264 = vperm.xlu0 %3263, %v3190
      %v3265 = vpop.permute.xlu0 %3264
      %3268 = vset.pattern.permute.xlu0 0
      %3269 = vperm.xlu0 %3268, %v3191
      %v3270 = vpop.permute.xlu0 %3269
      %v3272 = vadd.f32 %v2985, %v3195
      %v3273 = vadd.f32 %v2988, %v3200
      %v3274 = vadd.f32 %v2993, %v3205
      %v3275 = vadd.f32 %v2996, %v3210
      %v3276 = vadd.f32 %v3001, %v3215
      %v3277 = vadd.f32 %v3004, %v3220
      %v3278 = vadd.f32 %v3009, %v3225
      %v3279 = vadd.f32 %v3012, %v3230
      %v3280 = vadd.f32 %v3017, %v3235
      %v3281 = vadd.f32 %v3020, %v3240
      %v3282 = vadd.f32 %v3025, %v3245
      %v3283 = vadd.f32 %v3028, %v3250
      %v3284 = vadd.f32 %v3033, %v3255
      %v3285 = vadd.f32 %v3036, %v3260
      %v3286 = vadd.f32 %v3041, %v3265
      %v3287 = vadd.f32 %v3044, %v3270
      %vm3288 = vcmp.ge.s32.totalorder %v672, 4
      %v3289 = vsel %vm3288, %v3112, 0.0
      %v3290 = vsel %vm3288, %v3114, 0.0
      %v3291 = vsel %vm3288, %v3116, 0.0
      %v3292 = vsel %vm3288, %v3118, 0.0
      %v3293 = vsel %vm3288, %v3120, 0.0
      %v3294 = vsel %vm3288, %v3122, 0.0
      %v3295 = vsel %vm3288, %v3124, 0.0
      %v3296 = vsel %vm3288, %v3126, 0.0
      %v3297 = vsel %vm3288, %v3128, 0.0
      %v3298 = vsel %vm3288, %v3130, 0.0
      %v3299 = vsel %vm3288, %v3132, 0.0
      %v3300 = vsel %vm3288, %v3134, 0.0
      %v3301 = vsel %vm3288, %v3136, 0.0
      %v3302 = vsel %vm3288, %v3138, 0.0
      %v3303 = vsel %vm3288, %v3140, 0.0
      %v3304 = vsel %vm3288, %v3142, 0.0
      %v3305 = vadd.f32 %v3272, %v3289
      %v3306 = vadd.f32 %v3273, %v3290
      %v3307 = vadd.f32 %v3274, %v3291
      %v3308 = vadd.f32 %v3275, %v3292
      %v3309 = vadd.f32 %v3276, %v3293
      %v3310 = vadd.f32 %v3277, %v3294
      %v3311 = vadd.f32 %v3278, %v3295
      %v3312 = vadd.f32 %v3279, %v3296
      %v3313 = vadd.f32 %v3280, %v3297
      %v3314 = vadd.f32 %v3281, %v3298
      %v3315 = vadd.f32 %v3282, %v3299
      %v3316 = vadd.f32 %v3283, %v3300
      %v3317 = vadd.f32 %v3284, %v3301
      %v3318 = vadd.f32 %v3285, %v3302
      %v3319 = vadd.f32 %v3286, %v3303
      %v3320 = vadd.f32 %v3287, %v3304
      %vm3321 = vcmp.lt.s32.totalorder %v672, 96
      %v3322 = vsel %vm3321, %v3144, 0.0
      %v3323 = vsel %vm3321, %v3146, 0.0
      %v3324 = vsel %vm3321, %v3148, 0.0
      %v3325 = vsel %vm3321, %v3150, 0.0
      %v3326 = vsel %vm3321, %v3152, 0.0
      %v3327 = vsel %vm3321, %v3154, 0.0
      %v3328 = vsel %vm3321, %v3156, 0.0
      %v3329 = vsel %vm3321, %v3158, 0.0
      %v3330 = vsel %vm3321, %v3160, 0.0
      %v3331 = vsel %vm3321, %v3162, 0.0
      %v3332 = vsel %vm3321, %v3164, 0.0
      %v3333 = vsel %vm3321, %v3166, 0.0
      %v3334 = vsel %vm3321, %v3168, 0.0
      %v3335 = vsel %vm3321, %v3170, 0.0
      %v3336 = vsel %vm3321, %v3172, 0.0
      %v3337 = vsel %vm3321, %v3174, 0.0
      %v3338 = vadd.f32 %v3305, %v3322
      %v3339 = vadd.f32 %v3306, %v3323
      %v3340 = vadd.f32 %v3307, %v3324
      %v3341 = vadd.f32 %v3308, %v3325
      %v3342 = vadd.f32 %v3309, %v3326
      %v3343 = vadd.f32 %v3310, %v3327
      %v3344 = vadd.f32 %v3311, %v3328
      %v3345 = vadd.f32 %v3312, %v3329
      %v3346 = vadd.f32 %v3313, %v3330
      %v3347 = vadd.f32 %v3314, %v3331
      %v3348 = vadd.f32 %v3315, %v3332
      %v3349 = vadd.f32 %v3316, %v3333
      %v3350 = vadd.f32 %v3317, %v3334
      %v3351 = vadd.f32 %v3318, %v3335
      %v3352 = vadd.f32 %v3319, %v3336
      %v3353 = vadd.f32 %v3320, %v3337
      %v3354 = vmax.f32 %v3338, 0.0
      %v3355 = vmax.f32 %v3339, 0.0
      %v3356 = vmax.f32 %v3340, 0.0
      %v3357 = vmax.f32 %v3341, 0.0
      %v3358 = vmax.f32 %v3342, 0.0
      %v3359 = vmax.f32 %v3343, 0.0
      %v3360 = vmax.f32 %v3344, 0.0
      %v3361 = vmax.f32 %v3345, 0.0
      %v3362 = vmax.f32 %v3346, 0.0
      %v3363 = vmax.f32 %v3347, 0.0
      %v3364 = vmax.f32 %v3348, 0.0
      %v3365 = vmax.f32 %v3349, 0.0
      %v3366 = vmax.f32 %v3350, 0.0
      %v3367 = vmax.f32 %v3351, 0.0
      %v3368 = vmax.f32 %v3352, 0.0
      %v3369 = vmax.f32 %v3353, 0.0
      %s3370 = scalar_lea.vmem %s5, 128
      %v3371 = vld [vmem:[%s3370] sm:$0xf]
      %v3372 = vld [vmem:[%s3370 + $0x4] sm:$0xf]
      %v3373 = vld [vmem:[%s3370 + $0x8] sm:$0xf]
      %v3374 = vld [vmem:[%s3370 + $0xc] sm:$0xf]
      %v3375 = vld [vmem:[%s3370 + $0x10] sm:$0xf]
      %v3376 = vld [vmem:[%s3370 + $0x14] sm:$0xf]
      %v3377 = vld [vmem:[%s3370 + $0x18] sm:$0xf]
      %v3378 = vld [vmem:[%s3370 + $0x1c] sm:$0xf]
      %v3379 = vld [vmem:[%s3370 + $0x20] sm:$0xf]
      %v3380 = vld [vmem:[%s3370 + $0x24] sm:$0xf]
      %v3381 = vld [vmem:[%s3370 + $0x28] sm:$0xf]
      %v3382 = vld [vmem:[%s3370 + $0x2c] sm:$0xf]
      %v3383 = vld [vmem:[%s3370 + $0x30] sm:$0xf]
      %v3384 = vld [vmem:[%s3370 + $0x34] sm:$0xf]
      %v3385 = vld [vmem:[%s3370 + $0x38] sm:$0xf]
      %v3386 = vld [vmem:[%s3370 + $0x3c] sm:$0xf]
      %v3387 = vpack.c.bf16 %v3355, %v3354
      %v3388 = vpack.c.bf16 %v3357, %v3356
      %v3389 = vpack.c.bf16 %v3359, %v3358
      %v3390 = vpack.c.bf16 %v3361, %v3360
      %v3391 = vpack.c.bf16 %v3363, %v3362
      %v3392 = vpack.c.bf16 %v3365, %v3364
      %v3393 = vpack.c.bf16 %v3367, %v3366
      %v3394 = vpack.c.bf16 %v3369, %v3368
      %s3395 = scalar_lea.vmem %s6, 256
      %v3396 = vld [vmem:[%s3395] sm:$0xff]
      %v3397 = vld [vmem:[%s3395 + $0x8] sm:$0xff]
      %v3398 = vld [vmem:[%s3395 + $0x10] sm:$0xff]
      %v3399 = vld [vmem:[%s3395 + $0x18] sm:$0xff]
      %v3400 = vld [vmem:[%s3395 + $0x20] sm:$0xff]
      %v3401 = vld [vmem:[%s3395 + $0x28] sm:$0xff]
      %v3402 = vld [vmem:[%s3395 + $0x30] sm:$0xff]
      %v3403 = vld [vmem:[%s3395 + $0x38] sm:$0xff]
      %v3404 = vld [vmem:[%s3395 + $0x40] sm:$0xff]
      %v3405 = vld [vmem:[%s3395 + $0x48] sm:$0xff]
      %v3406 = vld [vmem:[%s3395 + $0x50] sm:$0xff]
      %v3407 = vld [vmem:[%s3395 + $0x58] sm:$0xff]
      %v3408 = vld [vmem:[%s3395 + $0x60] sm:$0xff]
      %v3409 = vld [vmem:[%s3395 + $0x68] sm:$0xff]
      %v3410 = vld [vmem:[%s3395 + $0x70] sm:$0xff]
      %v3411 = vld [vmem:[%s3395 + $0x78] sm:$0xff]
      %3413 = vset.pattern.permute.xlu0 0
      %3414 = vperm.xlu0 %3413, %v3396
      %v3415 = vpop.permute.xlu0 %3414
      %3418 = vset.pattern.permute.xlu0 0
      %3419 = vperm.xlu0 %3418, %v3397
      %v3420 = vpop.permute.xlu0 %3419
      %3423 = vset.pattern.permute.xlu0 0
      %3424 = vperm.xlu0 %3423, %v3398
      %v3425 = vpop.permute.xlu0 %3424
      %3428 = vset.pattern.permute.xlu0 0
      %3429 = vperm.xlu0 %3428, %v3399
      %v3430 = vpop.permute.xlu0 %3429
      %3433 = vset.pattern.permute.xlu0 0
      %3434 = vperm.xlu0 %3433, %v3400
      %v3435 = vpop.permute.xlu0 %3434
      %3438 = vset.pattern.permute.xlu0 0
      %3439 = vperm.xlu0 %3438, %v3401
      %v3440 = vpop.permute.xlu0 %3439
      %3443 = vset.pattern.permute.xlu0 0
      %3444 = vperm.xlu0 %3443, %v3402
      %v3445 = vpop.permute.xlu0 %3444
      %3448 = vset.pattern.permute.xlu0 0
      %3449 = vperm.xlu0 %3448, %v3403
      %v3450 = vpop.permute.xlu0 %3449
      %3453 = vset.pattern.permute.xlu0 0
      %3454 = vperm.xlu0 %3453, %v3404
      %v3455 = vpop.permute.xlu0 %3454
      %3458 = vset.pattern.permute.xlu0 0
      %3459 = vperm.xlu0 %3458, %v3405
      %v3460 = vpop.permute.xlu0 %3459
      %3463 = vset.pattern.permute.xlu0 0
      %3464 = vperm.xlu0 %3463, %v3406
      %v3465 = vpop.permute.xlu0 %3464
      %3468 = vset.pattern.permute.xlu0 0
      %3469 = vperm.xlu0 %3468, %v3407
      %v3470 = vpop.permute.xlu0 %3469
      %3473 = vset.pattern.permute.xlu0 0
      %3474 = vperm.xlu0 %3473, %v3408
      %v3475 = vpop.permute.xlu0 %3474
      %3478 = vset.pattern.permute.xlu0 0
      %3479 = vperm.xlu0 %3478, %v3409
      %v3480 = vpop.permute.xlu0 %3479
      %3483 = vset.pattern.permute.xlu0 0
      %3484 = vperm.xlu0 %3483, %v3410
      %v3485 = vpop.permute.xlu0 %3484
      %3488 = vset.pattern.permute.xlu0 0
      %3489 = vperm.xlu0 %3488, %v3411
      %v3490 = vpop.permute.xlu0 %3489
      %v3508 = vunpack.c.l.b16 %v3371
      %v3509 = vunpack.c.l.b16 %v3372
      %v3510 = vunpack.c.l.b16 %v3373
      %v3511 = vunpack.c.l.b16 %v3374
      %v3512 = vunpack.c.l.b16 %v3375
      %v3513 = vunpack.c.l.b16 %v3376
      %v3514 = vunpack.c.l.b16 %v3377
      %v3515 = vunpack.c.l.b16 %v3378
      %v3516 = vunpack.c.l.b16 %v3379
      %v3517 = vunpack.c.l.b16 %v3380
      %v3518 = vunpack.c.l.b16 %v3381
      %v3519 = vunpack.c.l.b16 %v3382
      %v3520 = vunpack.c.l.b16 %v3383
      %v3521 = vunpack.c.l.b16 %v3384
      %v3522 = vunpack.c.l.b16 %v3385
      %v3523 = vunpack.c.l.b16 %v3386
      %v3524 = vpack.c.b16 %v3509, %v3508
      %v3525 = vpack.c.b16 %v3511, %v3510
      %v3526 = vpack.c.b16 %v3513, %v3512
      %v3527 = vpack.c.b16 %v3515, %v3514
      %v3528 = vpack.c.b16 %v3517, %v3516
      %v3529 = vpack.c.b16 %v3519, %v3518
      %v3530 = vpack.c.b16 %v3521, %v3520
      %v3531 = vpack.c.b16 %v3523, %v3522
      %3540 = vmatprep.subr.bf16.mxu0 0
      %3541 = vmatpush1.bf16.msra.mxu0 %v3387
      %3542 = vmatprep.subr.bf16.mxu0 0
      %3543 = vmatpush1.bf16.msra.mxu0 %v3388
      %3544 = vmatprep.subr.bf16.mxu0 0
      %3545 = vmatpush1.bf16.msra.mxu0 %v3389
      %3546 = vmatprep.subr.bf16.mxu0 0
      %3547 = vmatpush1.bf16.msra.mxu0 %v3390
      %3548 = vmatprep.subr.bf16.mxu0 0
      %3549 = vmatpush1.bf16.msra.mxu0 %v3391
      %3550 = vmatprep.subr.bf16.mxu0 0
      %3551 = vmatpush1.bf16.msra.mxu0 %v3392
      %3552 = vmatprep.subr.bf16.mxu0 0
      %3553 = vmatpush1.bf16.msra.mxu0 %v3393
      %3554 = vmatprep.subr.bf16.mxu0 0
      %3555 = vmatpush1.bf16.msra.mxu0 %v3394
      %3556 = vmatprep.subr.bf16.mxu0 0
      %3557 = vmatpush1.bf16.msra.mxu0 0
      %3558 = vmatprep.subr.bf16.mxu0 0
      %3559 = vmatpush1.bf16.msra.mxu0 0
      %3560 = vmatprep.subr.bf16.mxu0 0
      %3561 = vmatpush1.bf16.msra.mxu0 0
      %3562 = vmatprep.subr.bf16.mxu0 0
      %3563 = vmatpush1.bf16.msra.mxu0 0
      %3564 = vmatprep.subr.bf16.mxu0 0
      %3565 = vmatpush1.bf16.msra.mxu0 0
      %3566 = vmatprep.subr.bf16.mxu0 0
      %3567 = vmatpush1.bf16.msra.mxu0 0
      %3568 = vmatprep.subr.bf16.mxu0 0
      %3569 = vmatpush1.bf16.msra.mxu0 0
      %3570 = vmatprep.subr.bf16.mxu0 0
      %3571 = vmatpush1.bf16.msra.mxu0 0
      %3572 = vmatprep.mubr.bf16.mxu0 0
      %3573 = vmatmul.mubr.bf16.gmra.mrb[0].mxu0 %v3524
      %v3574 = vpop.f32.mrb[0].mxu0
      %v3575 = vadd.f32 %v3415, %v3574
      %v3576 = vpop.f32.mrb[0].mxu0
      %v3577 = vpop.f32.mrb[0].mxu0
      %v3578 = vadd.f32 %v3420, %v3577
      %v3579 = vpop.f32.mrb[0].mxu0
      %3580 = vmatprep.mubr.bf16.mxu0 0
      %3581 = vmatmul.mubr.bf16.gmra.mrb[0].mxu0 %v3525
      %v3582 = vpop.f32.mrb[0].mxu0
      %v3583 = vadd.f32 %v3425, %v3582
      %v3584 = vpop.f32.mrb[0].mxu0
      %v3585 = vpop.f32.mrb[0].mxu0
      %v3586 = vadd.f32 %v3430, %v3585
      %v3587 = vpop.f32.mrb[0].mxu0
      %3588 = vmatprep.mubr.bf16.mxu0 0
      %3589 = vmatmul.mubr.bf16.gmra.mrb[0].mxu0 %v3526
      %v3590 = vpop.f32.mrb[0].mxu0
      %v3591 = vadd.f32 %v3435, %v3590
      %v3592 = vpop.f32.mrb[0].mxu0
      %v3593 = vpop.f32.mrb[0].mxu0
      %v3594 = vadd.f32 %v3440, %v3593
      %v3595 = vpop.f32.mrb[0].mxu0
      %3596 = vmatprep.mubr.bf16.mxu0 0
      %3597 = vmatmul.mubr.bf16.gmra.mrb[0].mxu0 %v3527
      %v3598 = vpop.f32.mrb[0].mxu0
      %v3599 = vadd.f32 %v3445, %v3598
      %v3600 = vpop.f32.mrb[0].mxu0
      %v3601 = vpop.f32.mrb[0].mxu0
      %v3602 = vadd.f32 %v3450, %v3601
      %v3603 = vpop.f32.mrb[0].mxu0
      %3604 = vmatprep.mubr.bf16.mxu0 0
      %3605 = vmatmul.mubr.bf16.gmra.mrb[0].mxu0 %v3528
      %v3606 = vpop.f32.mrb[0].mxu0
      %v3607 = vadd.f32 %v3455, %v3606
      %v3608 = vpop.f32.mrb[0].mxu0
      %v3609 = vpop.f32.mrb[0].mxu0
      %v3610 = vadd.f32 %v3460, %v3609
      %v3611 = vpop.f32.mrb[0].mxu0
      %3612 = vmatprep.mubr.bf16.mxu0 0
      %3613 = vmatmul.mubr.bf16.gmra.mrb[0].mxu0 %v3529
      %v3614 = vpop.f32.mrb[0].mxu0
      %v3615 = vadd.f32 %v3465, %v3614
      %v3616 = vpop.f32.mrb[0].mxu0
      %v3617 = vpop.f32.mrb[0].mxu0
      %v3618 = vadd.f32 %v3470, %v3617
      %v3619 = vpop.f32.mrb[0].mxu0
      %3620 = vmatprep.mubr.bf16.mxu0 0
      %3621 = vmatmul.mubr.bf16.gmra.mrb[0].mxu0 %v3530
      %v3622 = vpop.f32.mrb[0].mxu0
      %v3623 = vadd.f32 %v3475, %v3622
      %v3624 = vpop.f32.mrb[0].mxu0
      %v3625 = vpop.f32.mrb[0].mxu0
      %v3626 = vadd.f32 %v3480, %v3625
      %v3627 = vpop.f32.mrb[0].mxu0
      %3628 = vmatprep.mubr.bf16.mxu0 0
      %3629 = vmatmul.mubr.bf16.gmra.mrb[0].mxu0 %v3531
      %v3630 = vpop.f32.mrb[0].mxu0
      %v3631 = vadd.f32 %v3485, %v3630
      %v3632 = vpop.f32.mrb[0].mxu0
      %v3633 = vpop.f32.mrb[0].mxu0
      %v3634 = vadd.f32 %v3490, %v3633
      %v3635 = vpop.f32.mrb[0].mxu0
      %3636 = vdwg.mxu0
      %v3637 = vadd.f32 %v2669, %v3575
      %v3638 = vadd.f32 %v2670, %v3578
      %v3639 = vadd.f32 %v2671, %v3583
      %v3640 = vadd.f32 %v2672, %v3586
      %v3641 = vadd.f32 %v2673, %v3591
      %v3642 = vadd.f32 %v2674, %v3594
      %v3643 = vadd.f32 %v2675, %v3599
      %v3644 = vadd.f32 %v2676, %v3602
      %v3645 = vadd.f32 %v2677, %v3607
      %v3646 = vadd.f32 %v2678, %v3610
      %v3647 = vadd.f32 %v2679, %v3615
      %v3648 = vadd.f32 %v2680, %v3618
      %v3649 = vadd.f32 %v2681, %v3623
      %v3650 = vadd.f32 %v2682, %v3626
      %v3651 = vadd.f32 %v2683, %v3631
      %v3652 = vadd.f32 %v2684, %v3634
      %3653 = vst [vmem:[#allocation2] sm:$0xff] %v3637
      %3654 = vst [vmem:[#allocation2 + $0x8] sm:$0xff] %v3638
      %3655 = vst [vmem:[#allocation2 + $0x10] sm:$0xff] %v3639
      %3656 = vst [vmem:[#allocation2 + $0x18] sm:$0xff] %v3640
      %3657 = vst [vmem:[#allocation2 + $0x20] sm:$0xff] %v3641
      %3658 = vst [vmem:[#allocation2 + $0x28] sm:$0xff] %v3642
      %3659 = vst [vmem:[#allocation2 + $0x30] sm:$0xff] %v3643
      %3660 = vst [vmem:[#allocation2 + $0x38] sm:$0xff] %v3644
      %3661 = vst [vmem:[#allocation2 + $0x40] sm:$0xff] %v3645
      %3662 = vst [vmem:[#allocation2 + $0x48] sm:$0xff] %v3646
      %3663 = vst [vmem:[#allocation2 + $0x50] sm:$0xff] %v3647
      %3664 = vst [vmem:[#allocation2 + $0x58] sm:$0xff] %v3648
      %3665 = vst [vmem:[#allocation2 + $0x60] sm:$0xff] %v3649
      %3666 = vst [vmem:[#allocation2 + $0x68] sm:$0xff] %v3650
      %3667 = vst [vmem:[#allocation2 + $0x70] sm:$0xff] %v3651
      %3668 = vst [vmem:[#allocation2 + $0x78] sm:$0xff] %v3652
      %v3669 = vld [vmem:[#allocation2] sm:$0xff]
      %v3670 = vld [vmem:[#allocation2 + $0x8] sm:$0xff]
      %v3671 = vld [vmem:[#allocation2 + $0x10] sm:$0xff]
      %v3672 = vld [vmem:[#allocation2 + $0x18] sm:$0xff]
      %v3673 = vld [vmem:[#allocation2 + $0x20] sm:$0xff]
      %v3674 = vld [vmem:[#allocation2 + $0x28] sm:$0xff]
      %v3675 = vld [vmem:[#allocation2 + $0x30] sm:$0xff]
      %v3676 = vld [vmem:[#allocation2 + $0x38] sm:$0xff]
      %v3677 = vld [vmem:[#allocation2 + $0x40] sm:$0xff]
      %v3678 = vld [vmem:[#allocation2 + $0x48] sm:$0xff]
      %v3679 = vld [vmem:[#allocation2 + $0x50] sm:$0xff]
      %v3680 = vld [vmem:[#allocation2 + $0x58] sm:$0xff]
      %v3681 = vld [vmem:[#allocation2 + $0x60] sm:$0xff]
      %v3682 = vld [vmem:[#allocation2 + $0x68] sm:$0xff]
      %v3683 = vld [vmem:[#allocation2 + $0x70] sm:$0xff]
      %v3684 = vld [vmem:[#allocation2 + $0x78] sm:$0xff]
      %v3685 = vpack.c.bf16 %v3670, %v3669
      %v3686 = vpack.c.bf16 %v3672, %v3671
      %v3687 = vpack.c.bf16 %v3674, %v3673
      %v3688 = vpack.c.bf16 %v3676, %v3675
      %v3689 = vpack.c.bf16 %v3678, %v3677
      %v3690 = vpack.c.bf16 %v3680, %v3679
      %v3691 = vpack.c.bf16 %v3682, %v3681
      %v3692 = vpack.c.bf16 %v3684, %v3683
      %s3693 = scalar_lea.vmem %s3, 576
      %v3694 = vld [vmem:[%s3693] sm:$0xf]
      %v3695 = vld [vmem:[%s3693 + $0x4] sm:$0xf]
      %v3696 = vld [vmem:[%s3693 + $0x8] sm:$0xf]
      %v3697 = vld [vmem:[%s3693 + $0xc] sm:$0xf]
      %v3698 = vld [vmem:[%s3693 + $0x10] sm:$0xf]
      %v3699 = vld [vmem:[%s3693 + $0x14] sm:$0xf]
      %v3700 = vld [vmem:[%s3693 + $0x18] sm:$0xf]
      %v3701 = vld [vmem:[%s3693 + $0x1c] sm:$0xf]
      %v3702 = vld [vmem:[%s3693 + $0x20] sm:$0xf]
      %v3703 = vld [vmem:[%s3693 + $0x24] sm:$0xf]
      %v3704 = vld [vmem:[%s3693 + $0x28] sm:$0xf]
      %v3705 = vld [vmem:[%s3693 + $0x2c] sm:$0xf]
      %v3706 = vld [vmem:[%s3693 + $0x30] sm:$0xf]
      %v3707 = vld [vmem:[%s3693 + $0x34] sm:$0xf]
      %v3708 = vld [vmem:[%s3693 + $0x38] sm:$0xf]
      %v3709 = vld [vmem:[%s3693 + $0x3c] sm:$0xf]
      %v3710 = vld [vmem:[%s3693 + $0x40] sm:$0xf]
      %v3711 = vld [vmem:[%s3693 + $0x44] sm:$0xf]
      %v3712 = vld [vmem:[%s3693 + $0x48] sm:$0xf]
      %v3713 = vld [vmem:[%s3693 + $0x4c] sm:$0xf]
      %v3714 = vld [vmem:[%s3693 + $0x50] sm:$0xf]
      %v3715 = vld [vmem:[%s3693 + $0x54] sm:$0xf]
      %v3716 = vld [vmem:[%s3693 + $0x58] sm:$0xf]
      %v3717 = vld [vmem:[%s3693 + $0x5c] sm:$0xf]
      %v3718 = vld [vmem:[%s3693 + $0x60] sm:$0xf]
      %v3719 = vld [vmem:[%s3693 + $0x64] sm:$0xf]
      %v3720 = vld [vmem:[%s3693 + $0x68] sm:$0xf]
      %v3721 = vld [vmem:[%s3693 + $0x6c] sm:$0xf]
      %v3722 = vld [vmem:[%s3693 + $0x70] sm:$0xf]
      %v3723 = vld [vmem:[%s3693 + $0x74] sm:$0xf]
      %v3724 = vld [vmem:[%s3693 + $0x78] sm:$0xf]
      %v3725 = vld [vmem:[%s3693 + $0x7c] sm:$0xf]
      %v3726 = vld [vmem:[%s3693 + $0x80] sm:$0xf]
      %v3727 = vld [vmem:[%s3693 + $0x84] sm:$0xf]
      %v3728 = vld [vmem:[%s3693 + $0x88] sm:$0xf]
      %v3729 = vld [vmem:[%s3693 + $0x8c] sm:$0xf]
      %v3730 = vld [vmem:[%s3693 + $0x90] sm:$0xf]
      %v3731 = vld [vmem:[%s3693 + $0x94] sm:$0xf]
      %v3732 = vld [vmem:[%s3693 + $0x98] sm:$0xf]
      %v3733 = vld [vmem:[%s3693 + $0x9c] sm:$0xf]
      %v3734 = vld [vmem:[%s3693 + $0xa0] sm:$0xf]
      %v3735 = vld [vmem:[%s3693 + $0xa4] sm:$0xf]
      %v3736 = vld [vmem:[%s3693 + $0xa8] sm:$0xf]
      %v3737 = vld [vmem:[%s3693 + $0xac] sm:$0xf]
      %v3738 = vld [vmem:[%s3693 + $0xb0] sm:$0xf]
      %v3739 = vld [vmem:[%s3693 + $0xb4] sm:$0xf]
      %v3740 = vld [vmem:[%s3693 + $0xb8] sm:$0xf]
      %v3741 = vld [vmem:[%s3693 + $0xbc] sm:$0xf]
      %v3790 = vunpack.c.l.b16 %v3694
      %v3791 = vunpack.c.l.b16 %v3695
      %v3792 = vunpack.c.l.b16 %v3696
      %v3793 = vunpack.c.l.b16 %v3697
      %v3794 = vunpack.c.l.b16 %v3698
      %v3795 = vunpack.c.l.b16 %v3699
      %v3796 = vunpack.c.l.b16 %v3700
      %v3797 = vunpack.c.l.b16 %v3701
      %v3798 = vunpack.c.l.b16 %v3702
      %v3799 = vunpack.c.l.b16 %v3703
      %v3800 = vunpack.c.l.b16 %v3704
      %v3801 = vunpack.c.l.b16 %v3705
      %v3802 = vunpack.c.l.b16 %v3706
      %v3803 = vunpack.c.l.b16 %v3707
      %v3804 = vunpack.c.l.b16 %v3708
      %v3805 = vunpack.c.l.b16 %v3709
      %v3806 = vunpack.c.l.b16 %v3710
      %v3807 = vunpack.c.l.b16 %v3711
      %v3808 = vunpack.c.l.b16 %v3712
      %v3809 = vunpack.c.l.b16 %v3713
      %v3810 = vunpack.c.l.b16 %v3714
      %v3811 = vunpack.c.l.b16 %v3715
      %v3812 = vunpack.c.l.b16 %v3716
      %v3813 = vunpack.c.l.b16 %v3717
      %v3814 = vunpack.c.l.b16 %v3718
      %v3815 = vunpack.c.l.b16 %v3719
      %v3816 = vunpack.c.l.b16 %v3720
      %v3817 = vunpack.c.l.b16 %v3721
      %v3818 = vunpack.c.l.b16 %v3722
      %v3819 = vunpack.c.l.b16 %v3723
      %v3820 = vunpack.c.l.b16 %v3724
      %v3821 = vunpack.c.l.b16 %v3725
      %v3822 = vunpack.c.l.b16 %v3726
      %v3823 = vunpack.c.l.b16 %v3727
      %v3824 = vunpack.c.l.b16 %v3728
      %v3825 = vunpack.c.l.b16 %v3729
      %v3826 = vunpack.c.l.b16 %v3730
      %v3827 = vunpack.c.l.b16 %v3731
      %v3828 = vunpack.c.l.b16 %v3732
      %v3829 = vunpack.c.l.b16 %v3733
      %v3830 = vunpack.c.l.b16 %v3734
      %v3831 = vunpack.c.l.b16 %v3735
      %v3832 = vunpack.c.l.b16 %v3736
      %v3833 = vunpack.c.l.b16 %v3737
      %v3834 = vunpack.c.l.b16 %v3738
      %v3835 = vunpack.c.l.b16 %v3739
      %v3836 = vunpack.c.l.b16 %v3740
      %v3837 = vunpack.c.l.b16 %v3741
      %v3838 = vpack.c.b16 %v3791, %v3790
      %v3839 = vpack.c.b16 %v3793, %v3792
      %v3840 = vpack.c.b16 %v3795, %v3794
      %v3841 = vpack.c.b16 %v3797, %v3796
      %v3842 = vpack.c.b16 %v3799, %v3798
      %v3843 = vpack.c.b16 %v3801, %v3800
      %v3844 = vpack.c.b16 %v3803, %v3802
      %v3845 = vpack.c.b16 %v3805, %v3804
      %v3846 = vpack.c.b16 %v3807, %v3806
      %v3847 = vpack.c.b16 %v3809, %v3808
      %v3848 = vpack.c.b16 %v3811, %v3810
      %v3849 = vpack.c.b16 %v3813, %v3812
      %v3850 = vpack.c.b16 %v3815, %v3814
      %v3851 = vpack.c.b16 %v3817, %v3816
      %v3852 = vpack.c.b16 %v3819, %v3818
      %v3853 = vpack.c.b16 %v3821, %v3820
      %v3854 = vpack.c.b16 %v3823, %v3822
      %v3855 = vpack.c.b16 %v3825, %v3824
      %v3856 = vpack.c.b16 %v3827, %v3826
      %v3857 = vpack.c.b16 %v3829, %v3828
      %v3858 = vpack.c.b16 %v3831, %v3830
      %v3859 = vpack.c.b16 %v3833, %v3832
      %v3860 = vpack.c.b16 %v3835, %v3834
      %v3861 = vpack.c.b16 %v3837, %v3836
      %3886 = vmatprep.subr.bf16.mxu0 0
      %3887 = vmatpush1.bf16.msra.mxu0 %v3685
      %3888 = vmatprep.subr.bf16.mxu0 0
      %3889 = vmatpush1.bf16.msra.mxu0 %v3686
      %3890 = vmatprep.subr.bf16.mxu0 0
      %3891 = vmatpush1.bf16.msra.mxu0 %v3687
      %3892 = vmatprep.subr.bf16.mxu0 0
      %3893 = vmatpush1.bf16.msra.mxu0 %v3688
      %3894 = vmatprep.subr.bf16.mxu0 0
      %3895 = vmatpush1.bf16.msra.mxu0 %v3689
      %3896 = vmatprep.subr.bf16.mxu0 0
      %3897 = vmatpush1.bf16.msra.mxu0 %v3690
      %3898 = vmatprep.subr.bf16.mxu0 0
      %3899 = vmatpush1.bf16.msra.mxu0 %v3691
      %3900 = vmatprep.subr.bf16.mxu0 0
      %3901 = vmatpush1.bf16.msra.mxu0 %v3692
      %3902 = vmatprep.subr.bf16.mxu0 0
      %3903 = vmatpush1.bf16.msra.mxu0 0
      %3904 = vmatprep.subr.bf16.mxu0 0
      %3905 = vmatpush1.bf16.msra.mxu0 0
      %3906 = vmatprep.subr.bf16.mxu0 0
      %3907 = vmatpush1.bf16.msra.mxu0 0
      %3908 = vmatprep.subr.bf16.mxu0 0
      %3909 = vmatpush1.bf16.msra.mxu0 0
      %3910 = vmatprep.subr.bf16.mxu0 0
      %3911 = vmatpush1.bf16.msra.mxu0 0
      %3912 = vmatprep.subr.bf16.mxu0 0
      %3913 = vmatpush1.bf16.msra.mxu0 0
      %3914 = vmatprep.subr.bf16.mxu0 0
      %3915 = vmatpush1.bf16.msra.mxu0 0
      %3916 = vmatprep.subr.bf16.mxu0 0
      %3917 = vmatpush1.bf16.msra.mxu0 0
      %3918 = vmatprep.mubr.bf16.mxu0 0
      %3919 = vmatmul.mubr.bf16.gmra.mrb[0].mxu0 %v3838
      %v3920 = vpop.f32.mrb[0].mxu0
      %v3921 = vadd.f32 0.0, %v3920
      %v3922 = vpop.f32.mrb[0].mxu0
      %v3923 = vpop.f32.mrb[0].mxu0
      %v3924 = vadd.f32 0.0, %v3923
      %v3925 = vpop.f32.mrb[0].mxu0
      %3926 = vmatprep.mubr.bf16.mxu0 0
      %3927 = vmatmul.mubr.bf16.gmra.mrb[0].mxu0 %v3839
      %v3928 = vpop.f32.mrb[0].mxu0
      %v3929 = vadd.f32 0.0, %v3928
      %v3930 = vpop.f32.mrb[0].mxu0
      %v3931 = vpop.f32.mrb[0].mxu0
      %v3932 = vadd.f32 0.0, %v3931
      %v3933 = vpop.f32.mrb[0].mxu0
      %3934 = vmatprep.mubr.bf16.mxu0 0
      %3935 = vmatmul.mubr.bf16.gmra.mrb[0].mxu0 %v3840
      %v3936 = vpop.f32.mrb[0].mxu0
      %v3937 = vadd.f32 0.0, %v3936
      %v3938 = vpop.f32.mrb[0].mxu0
      %v3939 = vpop.f32.mrb[0].mxu0
      %v3940 = vadd.f32 0.0, %v3939
      %v3941 = vpop.f32.mrb[0].mxu0
      %3942 = vmatprep.mubr.bf16.mxu0 0
      %3943 = vmatmul.mubr.bf16.gmra.mrb[0].mxu0 %v3841
      %v3944 = vpop.f32.mrb[0].mxu0
      %v3945 = vadd.f32 0.0, %v3944
      %v3946 = vpop.f32.mrb[0].mxu0
      %v3947 = vpop.f32.mrb[0].mxu0
      %v3948 = vadd.f32 0.0, %v3947
      %v3949 = vpop.f32.mrb[0].mxu0
      %3950 = vmatprep.mubr.bf16.mxu0 0
      %3951 = vmatmul.mubr.bf16.gmra.mrb[0].mxu0 %v3842
      %v3952 = vpop.f32.mrb[0].mxu0
      %v3953 = vadd.f32 0.0, %v3952
      %v3954 = vpop.f32.mrb[0].mxu0
      %v3955 = vpop.f32.mrb[0].mxu0
      %v3956 = vadd.f32 0.0, %v3955
      %v3957 = vpop.f32.mrb[0].mxu0
      %3958 = vmatprep.mubr.bf16.mxu0 0
      %3959 = vmatmul.mubr.bf16.gmra.mrb[0].mxu0 %v3843
      %v3960 = vpop.f32.mrb[0].mxu0
      %v3961 = vadd.f32 0.0, %v3960
      %v3962 = vpop.f32.mrb[0].mxu0
      %v3963 = vpop.f32.mrb[0].mxu0
      %v3964 = vadd.f32 0.0, %v3963
      %v3965 = vpop.f32.mrb[0].mxu0
      %3966 = vmatprep.mubr.bf16.mxu0 0
      %3967 = vmatmul.mubr.bf16.gmra.mrb[0].mxu0 %v3844
      %v3968 = vpop.f32.mrb[0].mxu0
      %v3969 = vadd.f32 0.0, %v3968
      %v3970 = vpop.f32.mrb[0].mxu0
      %v3971 = vpop.f32.mrb[0].mxu0
      %v3972 = vadd.f32 0.0, %v3971
      %v3973 = vpop.f32.mrb[0].mxu0
      %3974 = vmatprep.mubr.bf16.mxu0 0
      %3975 = vmatmul.mubr.bf16.gmra.mrb[0].mxu0 %v3845
      %v3976 = vpop.f32.mrb[0].mxu0
      %v3977 = vadd.f32 0.0, %v3976
      %v3978 = vpop.f32.mrb[0].mxu0
      %v3979 = vpop.f32.mrb[0].mxu0
      %v3980 = vadd.f32 0.0, %v3979
      %v3981 = vpop.f32.mrb[0].mxu0
      %3982 = vmatprep.mubr.bf16.mxu0 0
      %3983 = vmatmul.mubr.bf16.gmra.mrb[0].mxu0 %v3846
      %v3984 = vpop.f32.mrb[0].mxu0
      %v3985 = vadd.f32 0.0, %v3984
      %v3986 = vpop.f32.mrb[0].mxu0
      %v3987 = vpop.f32.mrb[0].mxu0
      %v3988 = vadd.f32 0.0, %v3987
      %v3989 = vpop.f32.mrb[0].mxu0
      %3990 = vmatprep.mubr.bf16.mxu0 0
      %3991 = vmatmul.mubr.bf16.gmra.mrb[0].mxu0 %v3847
      %v3992 = vpop.f32.mrb[0].mxu0
      %v3993 = vadd.f32 0.0, %v3992
      %v3994 = vpop.f32.mrb[0].mxu0
      %v3995 = vpop.f32.mrb[0].mxu0
      %v3996 = vadd.f32 0.0, %v3995
      %v3997 = vpop.f32.mrb[0].mxu0
      %3998 = vmatprep.mubr.bf16.mxu0 0
      %3999 = vmatmul.mubr.bf16.gmra.mrb[0].mxu0 %v3848
      %v4000 = vpop.f32.mrb[0].mxu0
      %v4001 = vadd.f32 0.0, %v4000
      %v4002 = vpop.f32.mrb[0].mxu0
      %v4003 = vpop.f32.mrb[0].mxu0
      %v4004 = vadd.f32 0.0, %v4003
      %v4005 = vpop.f32.mrb[0].mxu0
      %4006 = vmatprep.mubr.bf16.mxu0 0
      %4007 = vmatmul.mubr.bf16.gmra.mrb[0].mxu0 %v3849
      %v4008 = vpop.f32.mrb[0].mxu0
      %v4009 = vadd.f32 0.0, %v4008
      %v4010 = vpop.f32.mrb[0].mxu0
      %v4011 = vpop.f32.mrb[0].mxu0
      %v4012 = vadd.f32 0.0, %v4011
      %v4013 = vpop.f32.mrb[0].mxu0
      %4014 = vmatprep.mubr.bf16.mxu0 0
      %4015 = vmatmul.mubr.bf16.gmra.mrb[0].mxu0 %v3850
      %v4016 = vpop.f32.mrb[0].mxu0
      %v4017 = vadd.f32 0.0, %v4016
      %v4018 = vpop.f32.mrb[0].mxu0
      %v4019 = vpop.f32.mrb[0].mxu0
      %v4020 = vadd.f32 0.0, %v4019
      %v4021 = vpop.f32.mrb[0].mxu0
      %4022 = vmatprep.mubr.bf16.mxu0 0
      %4023 = vmatmul.mubr.bf16.gmra.mrb[0].mxu0 %v3851
      %v4024 = vpop.f32.mrb[0].mxu0
      %v4025 = vadd.f32 0.0, %v4024
      %v4026 = vpop.f32.mrb[0].mxu0
      %v4027 = vpop.f32.mrb[0].mxu0
      %v4028 = vadd.f32 0.0, %v4027
      %v4029 = vpop.f32.mrb[0].mxu0
      %4030 = vmatprep.mubr.bf16.mxu0 0
      %4031 = vmatmul.mubr.bf16.gmra.mrb[0].mxu0 %v3852
      %v4032 = vpop.f32.mrb[0].mxu0
      %v4033 = vadd.f32 0.0, %v4032
      %v4034 = vpop.f32.mrb[0].mxu0
      %v4035 = vpop.f32.mrb[0].mxu0
      %v4036 = vadd.f32 0.0, %v4035
      %v4037 = vpop.f32.mrb[0].mxu0
      %4038 = vmatprep.mubr.bf16.mxu0 0
      %4039 = vmatmul.mubr.bf16.gmra.mrb[0].mxu0 %v3853
      %v4040 = vpop.f32.mrb[0].mxu0
      %v4041 = vadd.f32 0.0, %v4040
      %v4042 = vpop.f32.mrb[0].mxu0
      %v4043 = vpop.f32.mrb[0].mxu0
      %v4044 = vadd.f32 0.0, %v4043
      %v4045 = vpop.f32.mrb[0].mxu0
      %4046 = vmatprep.mubr.bf16.mxu0 0
      %4047 = vmatmul.mubr.bf16.gmra.mrb[0].mxu0 %v3854
      %v4048 = vpop.f32.mrb[0].mxu0
      %v4049 = vadd.f32 0.0, %v4048
      %v4050 = vpop.f32.mrb[0].mxu0
      %v4051 = vpop.f32.mrb[0].mxu0
      %v4052 = vadd.f32 0.0, %v4051
      %v4053 = vpop.f32.mrb[0].mxu0
      %4054 = vmatprep.mubr.bf16.mxu0 0
      %4055 = vmatmul.mubr.bf16.gmra.mrb[0].mxu0 %v3855
      %v4056 = vpop.f32.mrb[0].mxu0
      %v4057 = vadd.f32 0.0, %v4056
      %v4058 = vpop.f32.mrb[0].mxu0
      %v4059 = vpop.f32.mrb[0].mxu0
      %v4060 = vadd.f32 0.0, %v4059
      %v4061 = vpop.f32.mrb[0].mxu0
      %4062 = vmatprep.mubr.bf16.mxu0 0
      %4063 = vmatmul.mubr.bf16.gmra.mrb[0].mxu0 %v3856
      %v4064 = vpop.f32.mrb[0].mxu0
      %v4065 = vadd.f32 0.0, %v4064
      %v4066 = vpop.f32.mrb[0].mxu0
      %v4067 = vpop.f32.mrb[0].mxu0
      %v4068 = vadd.f32 0.0, %v4067
      %v4069 = vpop.f32.mrb[0].mxu0
      %4070 = vmatprep.mubr.bf16.mxu0 0
      %4071 = vmatmul.mubr.bf16.gmra.mrb[0].mxu0 %v3857
      %v4072 = vpop.f32.mrb[0].mxu0
      %v4073 = vadd.f32 0.0, %v4072
      %v4074 = vpop.f32.mrb[0].mxu0
      %v4075 = vpop.f32.mrb[0].mxu0
      %v4076 = vadd.f32 0.0, %v4075
      %v4077 = vpop.f32.mrb[0].mxu0
      %4078 = vmatprep.mubr.bf16.mxu0 0
      %4079 = vmatmul.mubr.bf16.gmra.mrb[0].mxu0 %v3858
      %v4080 = vpop.f32.mrb[0].mxu0
      %v4081 = vadd.f32 0.0, %v4080
      %v4082 = vpop.f32.mrb[0].mxu0
      %v4083 = vpop.f32.mrb[0].mxu0
      %v4084 = vadd.f32 0.0, %v4083
      %v4085 = vpop.f32.mrb[0].mxu0
      %4086 = vmatprep.mubr.bf16.mxu0 0
      %4087 = vmatmul.mubr.bf16.gmra.mrb[0].mxu0 %v3859
      %v4088 = vpop.f32.mrb[0].mxu0
      %v4089 = vadd.f32 0.0, %v4088
      %v4090 = vpop.f32.mrb[0].mxu0
      %v4091 = vpop.f32.mrb[0].mxu0
      %v4092 = vadd.f32 0.0, %v4091
      %v4093 = vpop.f32.mrb[0].mxu0
      %4094 = vmatprep.mubr.bf16.mxu0 0
      %4095 = vmatmul.mubr.bf16.gmra.mrb[0].mxu0 %v3860
      %v4096 = vpop.f32.mrb[0].mxu0
      %v4097 = vadd.f32 0.0, %v4096
      %v4098 = vpop.f32.mrb[0].mxu0
      %v4099 = vpop.f32.mrb[0].mxu0
      %v4100 = vadd.f32 0.0, %v4099
      %v4101 = vpop.f32.mrb[0].mxu0
      %4102 = vmatprep.mubr.bf16.mxu0 0
      %4103 = vmatmul.mubr.bf16.gmra.mrb[0].mxu0 %v3861
      %v4104 = vpop.f32.mrb[0].mxu0
      %v4105 = vadd.f32 0.0, %v4104
      %v4106 = vpop.f32.mrb[0].mxu0
      %v4107 = vpop.f32.mrb[0].mxu0
      %v4108 = vadd.f32 0.0, %v4107
      %v4109 = vpop.f32.mrb[0].mxu0
      %4110 = vdwg.mxu0
      %4111 = vrot.lane.b32.xlu0 %v3921, 8
      %v4112 = vpop.permute.xlu0 %4111
      %4113 = vrot.lane.b32.xlu0 %v3924, 8
      %v4114 = vpop.permute.xlu0 %4113
      %4115 = vrot.lane.b32.xlu0 %v3929, 8
      %v4116 = vpop.permute.xlu0 %4115
      %4117 = vrot.lane.b32.xlu0 %v3932, 8
      %v4118 = vpop.permute.xlu0 %4117
      %4119 = vrot.lane.b32.xlu0 %v3937, 8
      %v4120 = vpop.permute.xlu0 %4119
      %4121 = vrot.lane.b32.xlu0 %v3940, 8
      %v4122 = vpop.permute.xlu0 %4121
      %4123 = vrot.lane.b32.xlu0 %v3945, 8
      %v4124 = vpop.permute.xlu0 %4123
      %4125 = vrot.lane.b32.xlu0 %v3948, 8
      %v4126 = vpop.permute.xlu0 %4125
      %4127 = vrot.lane.b32.xlu0 %v3953, 8
      %v4128 = vpop.permute.xlu0 %4127
      %4129 = vrot.lane.b32.xlu0 %v3956, 8
      %v4130 = vpop.permute.xlu0 %4129
      %4131 = vrot.lane.b32.xlu0 %v3961, 8
      %v4132 = vpop.permute.xlu0 %4131
      %4133 = vrot.lane.b32.xlu0 %v3964, 8
      %v4134 = vpop.permute.xlu0 %4133
      %4135 = vrot.lane.b32.xlu0 %v3969, 8
      %v4136 = vpop.permute.xlu0 %4135
      %4137 = vrot.lane.b32.xlu0 %v3972, 8
      %v4138 = vpop.permute.xlu0 %4137
      %4139 = vrot.lane.b32.xlu0 %v3977, 8
      %v4140 = vpop.permute.xlu0 %4139
      %4141 = vrot.lane.b32.xlu0 %v3980, 8
      %v4142 = vpop.permute.xlu0 %4141
      %4143 = vrot.lane.b32.xlu0 %v4049, 120
      %v4144 = vpop.permute.xlu0 %4143
      %4145 = vrot.lane.b32.xlu0 %v4052, 120
      %v4146 = vpop.permute.xlu0 %4145
      %4147 = vrot.lane.b32.xlu0 %v4057, 120
      %v4148 = vpop.permute.xlu0 %4147
      %4149 = vrot.lane.b32.xlu0 %v4060, 120
      %v4150 = vpop.permute.xlu0 %4149
      %4151 = vrot.lane.b32.xlu0 %v4065, 120
      %v4152 = vpop.permute.xlu0 %4151
      %4153 = vrot.lane.b32.xlu0 %v4068, 120
      %v4154 = vpop.permute.xlu0 %4153
      %4155 = vrot.lane.b32.xlu0 %v4073, 120
      %v4156 = vpop.permute.xlu0 %4155
      %4157 = vrot.lane.b32.xlu0 %v4076, 120
      %v4158 = vpop.permute.xlu0 %4157
      %4159 = vrot.lane.b32.xlu0 %v4081, 120
      %v4160 = vpop.permute.xlu0 %4159
      %4161 = vrot.lane.b32.xlu0 %v4084, 120
      %v4162 = vpop.permute.xlu0 %4161
      %4163 = vrot.lane.b32.xlu0 %v4089, 120
      %v4164 = vpop.permute.xlu0 %4163
      %4165 = vrot.lane.b32.xlu0 %v4092, 120
      %v4166 = vpop.permute.xlu0 %4165
      %4167 = vrot.lane.b32.xlu0 %v4097, 120
      %v4168 = vpop.permute.xlu0 %4167
      %4169 = vrot.lane.b32.xlu0 %v4100, 120
      %v4170 = vpop.permute.xlu0 %4169
      %4171 = vrot.lane.b32.xlu0 %v4105, 120
      %v4172 = vpop.permute.xlu0 %4171
      %4173 = vrot.lane.b32.xlu0 %v4108, 120
      %v4174 = vpop.permute.xlu0 %4173
      %s4175 = scalar_lea.vmem %s4, 384
      %v4176 = vld [vmem:[%s4175] sm:$0xff]
      %v4177 = vld [vmem:[%s4175 + $0x8] sm:$0xff]
      %v4178 = vld [vmem:[%s4175 + $0x10] sm:$0xff]
      %v4179 = vld [vmem:[%s4175 + $0x18] sm:$0xff]
      %v4180 = vld [vmem:[%s4175 + $0x20] sm:$0xff]
      %v4181 = vld [vmem:[%s4175 + $0x28] sm:$0xff]
      %v4182 = vld [vmem:[%s4175 + $0x30] sm:$0xff]
      %v4183 = vld [vmem:[%s4175 + $0x38] sm:$0xff]
      %v4184 = vld [vmem:[%s4175 + $0x40] sm:$0xff]
      %v4185 = vld [vmem:[%s4175 + $0x48] sm:$0xff]
      %v4186 = vld [vmem:[%s4175 + $0x50] sm:$0xff]
      %v4187 = vld [vmem:[%s4175 + $0x58] sm:$0xff]
      %v4188 = vld [vmem:[%s4175 + $0x60] sm:$0xff]
      %v4189 = vld [vmem:[%s4175 + $0x68] sm:$0xff]
      %v4190 = vld [vmem:[%s4175 + $0x70] sm:$0xff]
      %v4191 = vld [vmem:[%s4175 + $0x78] sm:$0xff]
      %4193 = vset.pattern.permute.xlu0 0
      %4194 = vperm.xlu0 %4193, %v4176
      %v4195 = vpop.permute.xlu0 %4194
      %4198 = vset.pattern.permute.xlu0 0
      %4199 = vperm.xlu0 %4198, %v4177
      %v4200 = vpop.permute.xlu0 %4199
      %4203 = vset.pattern.permute.xlu0 0
      %4204 = vperm.xlu0 %4203, %v4178
      %v4205 = vpop.permute.xlu0 %4204
      %4208 = vset.pattern.permute.xlu0 0
      %4209 = vperm.xlu0 %4208, %v4179
      %v4210 = vpop.permute.xlu0 %4209
      %4213 = vset.pattern.permute.xlu0 0
      %4214 = vperm.xlu0 %4213, %v4180
      %v4215 = vpop.permute.xlu0 %4214
      %4218 = vset.pattern.permute.xlu0 0
      %4219 = vperm.xlu0 %4218, %v4181
      %v4220 = vpop.permute.xlu0 %4219
      %4223 = vset.pattern.permute.xlu0 0
      %4224 = vperm.xlu0 %4223, %v4182
      %v4225 = vpop.permute.xlu0 %4224
      %4228 = vset.pattern.permute.xlu0 0
      %4229 = vperm.xlu0 %4228, %v4183
      %v4230 = vpop.permute.xlu0 %4229
      %4233 = vset.pattern.permute.xlu0 0
      %4234 = vperm.xlu0 %4233, %v4184
      %v4235 = vpop.permute.xlu0 %4234
      %4238 = vset.pattern.permute.xlu0 0
      %4239 = vperm.xlu0 %4238, %v4185
      %v4240 = vpop.permute.xlu0 %4239
      %4243 = vset.pattern.permute.xlu0 0
      %4244 = vperm.xlu0 %4243, %v4186
      %v4245 = vpop.permute.xlu0 %4244
      %4248 = vset.pattern.permute.xlu0 0
      %4249 = vperm.xlu0 %4248, %v4187
      %v4250 = vpop.permute.xlu0 %4249
      %4253 = vset.pattern.permute.xlu0 0
      %4254 = vperm.xlu0 %4253, %v4188
      %v4255 = vpop.permute.xlu0 %4254
      %4258 = vset.pattern.permute.xlu0 0
      %4259 = vperm.xlu0 %4258, %v4189
      %v4260 = vpop.permute.xlu0 %4259
      %4263 = vset.pattern.permute.xlu0 0
      %4264 = vperm.xlu0 %4263, %v4190
      %v4265 = vpop.permute.xlu0 %4264
      %4268 = vset.pattern.permute.xlu0 0
      %4269 = vperm.xlu0 %4268, %v4191
      %v4270 = vpop.permute.xlu0 %4269
      %v4272 = vadd.f32 %v3985, %v4195
      %v4273 = vadd.f32 %v3988, %v4200
      %v4274 = vadd.f32 %v3993, %v4205
      %v4275 = vadd.f32 %v3996, %v4210
      %v4276 = vadd.f32 %v4001, %v4215
      %v4277 = vadd.f32 %v4004, %v4220
      %v4278 = vadd.f32 %v4009, %v4225
      %v4279 = vadd.f32 %v4012, %v4230
      %v4280 = vadd.f32 %v4017, %v4235
      %v4281 = vadd.f32 %v4020, %v4240
      %v4282 = vadd.f32 %v4025, %v4245
      %v4283 = vadd.f32 %v4028, %v4250
      %v4284 = vadd.f32 %v4033, %v4255
      %v4285 = vadd.f32 %v4036, %v4260
      %v4286 = vadd.f32 %v4041, %v4265
      %v4287 = vadd.f32 %v4044, %v4270
      %vm4288 = vcmp.ge.s32.totalorder %v672, 8
      %v4289 = vsel %vm4288, %v4112, 0.0
      %v4290 = vsel %vm4288, %v4114, 0.0
      %v4291 = vsel %vm4288, %v4116, 0.0
      %v4292 = vsel %vm4288, %v4118, 0.0
      %v4293 = vsel %vm4288, %v4120, 0.0
      %v4294 = vsel %vm4288, %v4122, 0.0
      %v4295 = vsel %vm4288, %v4124, 0.0
      %v4296 = vsel %vm4288, %v4126, 0.0
      %v4297 = vsel %vm4288, %v4128, 0.0
      %v4298 = vsel %vm4288, %v4130, 0.0
      %v4299 = vsel %vm4288, %v4132, 0.0
      %v4300 = vsel %vm4288, %v4134, 0.0
      %v4301 = vsel %vm4288, %v4136, 0.0
      %v4302 = vsel %vm4288, %v4138, 0.0
      %v4303 = vsel %vm4288, %v4140, 0.0
      %v4304 = vsel %vm4288, %v4142, 0.0
      %v4305 = vadd.f32 %v4272, %v4289
      %v4306 = vadd.f32 %v4273, %v4290
      %v4307 = vadd.f32 %v4274, %v4291
      %v4308 = vadd.f32 %v4275, %v4292
      %v4309 = vadd.f32 %v4276, %v4293
      %v4310 = vadd.f32 %v4277, %v4294
      %v4311 = vadd.f32 %v4278, %v4295
      %v4312 = vadd.f32 %v4279, %v4296
      %v4313 = vadd.f32 %v4280, %v4297
      %v4314 = vadd.f32 %v4281, %v4298
      %v4315 = vadd.f32 %v4282, %v4299
      %v4316 = vadd.f32 %v4283, %v4300
      %v4317 = vadd.f32 %v4284, %v4301
      %v4318 = vadd.f32 %v4285, %v4302
      %v4319 = vadd.f32 %v4286, %v4303
      %v4320 = vadd.f32 %v4287, %v4304
      %vm4321 = vcmp.lt.s32.totalorder %v672, 92
      %v4322 = vsel %vm4321, %v4144, 0.0
      %v4323 = vsel %vm4321, %v4146, 0.0
      %v4324 = vsel %vm4321, %v4148, 0.0
      %v4325 = vsel %vm4321, %v4150, 0.0
      %v4326 = vsel %vm4321, %v4152, 0.0
      %v4327 = vsel %vm4321, %v4154, 0.0
      %v4328 = vsel %vm4321, %v4156, 0.0
      %v4329 = vsel %vm4321, %v4158, 0.0
      %v4330 = vsel %vm4321, %v4160, 0.0
      %v4331 = vsel %vm4321, %v4162, 0.0
      %v4332 = vsel %vm4321, %v4164, 0.0
      %v4333 = vsel %vm4321, %v4166, 0.0
      %v4334 = vsel %vm4321, %v4168, 0.0
      %v4335 = vsel %vm4321, %v4170, 0.0
      %v4336 = vsel %vm4321, %v4172, 0.0
      %v4337 = vsel %vm4321, %v4174, 0.0
      %v4338 = vadd.f32 %v4305, %v4322
      %v4339 = vadd.f32 %v4306, %v4323
      %v4340 = vadd.f32 %v4307, %v4324
      %v4341 = vadd.f32 %v4308, %v4325
      %v4342 = vadd.f32 %v4309, %v4326
      %v4343 = vadd.f32 %v4310, %v4327
      %v4344 = vadd.f32 %v4311, %v4328
      %v4345 = vadd.f32 %v4312, %v4329
      %v4346 = vadd.f32 %v4313, %v4330
      %v4347 = vadd.f32 %v4314, %v4331
      %v4348 = vadd.f32 %v4315, %v4332
      %v4349 = vadd.f32 %v4316, %v4333
      %v4350 = vadd.f32 %v4317, %v4334
      %v4351 = vadd.f32 %v4318, %v4335
      %v4352 = vadd.f32 %v4319, %v4336
      %v4353 = vadd.f32 %v4320, %v4337
      %v4354 = vmax.f32 %v4338, 0.0
      %v4355 = vmax.f32 %v4339, 0.0
      %v4356 = vmax.f32 %v4340, 0.0
      %v4357 = vmax.f32 %v4341, 0.0
      %v4358 = vmax.f32 %v4342, 0.0
      %v4359 = vmax.f32 %v4343, 0.0
      %v4360 = vmax.f32 %v4344, 0.0
      %v4361 = vmax.f32 %v4345, 0.0
      %v4362 = vmax.f32 %v4346, 0.0
      %v4363 = vmax.f32 %v4347, 0.0
      %v4364 = vmax.f32 %v4348, 0.0
      %v4365 = vmax.f32 %v4349, 0.0
      %v4366 = vmax.f32 %v4350, 0.0
      %v4367 = vmax.f32 %v4351, 0.0
      %v4368 = vmax.f32 %v4352, 0.0
      %v4369 = vmax.f32 %v4353, 0.0
      %s4370 = scalar_lea.vmem %s5, 192
      %v4371 = vld [vmem:[%s4370] sm:$0xf]
      %v4372 = vld [vmem:[%s4370 + $0x4] sm:$0xf]
      %v4373 = vld [vmem:[%s4370 + $0x8] sm:$0xf]
      %v4374 = vld [vmem:[%s4370 + $0xc] sm:$0xf]
      %v4375 = vld [vmem:[%s4370 + $0x10] sm:$0xf]
      %v4376 = vld [vmem:[%s4370 + $0x14] sm:$0xf]
      %v4377 = vld [vmem:[%s4370 + $0x18] sm:$0xf]
      %v4378 = vld [vmem:[%s4370 + $0x1c] sm:$0xf]
      %v4379 = vld [vmem:[%s4370 + $0x20] sm:$0xf]
      %v4380 = vld [vmem:[%s4370 + $0x24] sm:$0xf]
      %v4381 = vld [vmem:[%s4370 + $0x28] sm:$0xf]
      %v4382 = vld [vmem:[%s4370 + $0x2c] sm:$0xf]
      %v4383 = vld [vmem:[%s4370 + $0x30] sm:$0xf]
      %v4384 = vld [vmem:[%s4370 + $0x34] sm:$0xf]
      %v4385 = vld [vmem:[%s4370 + $0x38] sm:$0xf]
      %v4386 = vld [vmem:[%s4370 + $0x3c] sm:$0xf]
      %v4387 = vpack.c.bf16 %v4355, %v4354
      %v4388 = vpack.c.bf16 %v4357, %v4356
      %v4389 = vpack.c.bf16 %v4359, %v4358
      %v4390 = vpack.c.bf16 %v4361, %v4360
      %v4391 = vpack.c.bf16 %v4363, %v4362
      %v4392 = vpack.c.bf16 %v4365, %v4364
      %v4393 = vpack.c.bf16 %v4367, %v4366
      %v4394 = vpack.c.bf16 %v4369, %v4368
      %s4395 = scalar_lea.vmem %s6, 384
      %v4396 = vld [vmem:[%s4395] sm:$0xff]
      %v4397 = vld [vmem:[%s4395 + $0x8] sm:$0xff]
      %v4398 = vld [vmem:[%s4395 + $0x10] sm:$0xff]
      %v4399 = vld [vmem:[%s4395 + $0x18] sm:$0xff]
      %v4400 = vld [vmem:[%s4395 + $0x20] sm:$0xff]
      %v4401 = vld [vmem:[%s4395 + $0x28] sm:$0xff]
      %v4402 = vld [vmem:[%s4395 + $0x30] sm:$0xff]
      %v4403 = vld [vmem:[%s4395 + $0x38] sm:$0xff]
      %v4404 = vld [vmem:[%s4395 + $0x40] sm:$0xff]
      %v4405 = vld [vmem:[%s4395 + $0x48] sm:$0xff]
      %v4406 = vld [vmem:[%s4395 + $0x50] sm:$0xff]
      %v4407 = vld [vmem:[%s4395 + $0x58] sm:$0xff]
      %v4408 = vld [vmem:[%s4395 + $0x60] sm:$0xff]
      %v4409 = vld [vmem:[%s4395 + $0x68] sm:$0xff]
      %v4410 = vld [vmem:[%s4395 + $0x70] sm:$0xff]
      %v4411 = vld [vmem:[%s4395 + $0x78] sm:$0xff]
      %4413 = vset.pattern.permute.xlu0 0
      %4414 = vperm.xlu0 %4413, %v4396
      %v4415 = vpop.permute.xlu0 %4414
      %4418 = vset.pattern.permute.xlu0 0
      %4419 = vperm.xlu0 %4418, %v4397
      %v4420 = vpop.permute.xlu0 %4419
      %4423 = vset.pattern.permute.xlu0 0
      %4424 = vperm.xlu0 %4423, %v4398
      %v4425 = vpop.permute.xlu0 %4424
      %4428 = vset.pattern.permute.xlu0 0
      %4429 = vperm.xlu0 %4428, %v4399
      %v4430 = vpop.permute.xlu0 %4429
      %4433 = vset.pattern.permute.xlu0 0
      %4434 = vperm.xlu0 %4433, %v4400
      %v4435 = vpop.permute.xlu0 %4434
      %4438 = vset.pattern.permute.xlu0 0
      %4439 = vperm.xlu0 %4438, %v4401
      %v4440 = vpop.permute.xlu0 %4439
      %4443 = vset.pattern.permute.xlu0 0
      %4444 = vperm.xlu0 %4443, %v4402
      %v4445 = vpop.permute.xlu0 %4444
      %4448 = vset.pattern.permute.xlu0 0
      %4449 = vperm.xlu0 %4448, %v4403
      %v4450 = vpop.permute.xlu0 %4449
      %4453 = vset.pattern.permute.xlu0 0
      %4454 = vperm.xlu0 %4453, %v4404
      %v4455 = vpop.permute.xlu0 %4454
      %4458 = vset.pattern.permute.xlu0 0
      %4459 = vperm.xlu0 %4458, %v4405
      %v4460 = vpop.permute.xlu0 %4459
      %4463 = vset.pattern.permute.xlu0 0
      %4464 = vperm.xlu0 %4463, %v4406
      %v4465 = vpop.permute.xlu0 %4464
      %4468 = vset.pattern.permute.xlu0 0
      %4469 = vperm.xlu0 %4468, %v4407
      %v4470 = vpop.permute.xlu0 %4469
      %4473 = vset.pattern.permute.xlu0 0
      %4474 = vperm.xlu0 %4473, %v4408
      %v4475 = vpop.permute.xlu0 %4474
      %4478 = vset.pattern.permute.xlu0 0
      %4479 = vperm.xlu0 %4478, %v4409
      %v4480 = vpop.permute.xlu0 %4479
      %4483 = vset.pattern.permute.xlu0 0
      %4484 = vperm.xlu0 %4483, %v4410
      %v4485 = vpop.permute.xlu0 %4484
      %4488 = vset.pattern.permute.xlu0 0
      %4489 = vperm.xlu0 %4488, %v4411
      %v4490 = vpop.permute.xlu0 %4489
      %v4508 = vunpack.c.l.b16 %v4371
      %v4509 = vunpack.c.l.b16 %v4372
      %v4510 = vunpack.c.l.b16 %v4373
      %v4511 = vunpack.c.l.b16 %v4374
      %v4512 = vunpack.c.l.b16 %v4375
      %v4513 = vunpack.c.l.b16 %v4376
      %v4514 = vunpack.c.l.b16 %v4377
      %v4515 = vunpack.c.l.b16 %v4378
      %v4516 = vunpack.c.l.b16 %v4379
      %v4517 = vunpack.c.l.b16 %v4380
      %v4518 = vunpack.c.l.b16 %v4381
      %v4519 = vunpack.c.l.b16 %v4382
      %v4520 = vunpack.c.l.b16 %v4383
      %v4521 = vunpack.c.l.b16 %v4384
      %v4522 = vunpack.c.l.b16 %v4385
      %v4523 = vunpack.c.l.b16 %v4386
      %v4524 = vpack.c.b16 %v4509, %v4508
      %v4525 = vpack.c.b16 %v4511, %v4510
      %v4526 = vpack.c.b16 %v4513, %v4512
      %v4527 = vpack.c.b16 %v4515, %v4514
      %v4528 = vpack.c.b16 %v4517, %v4516
      %v4529 = vpack.c.b16 %v4519, %v4518
      %v4530 = vpack.c.b16 %v4521, %v4520
      %v4531 = vpack.c.b16 %v4523, %v4522
      %4540 = vmatprep.subr.bf16.mxu0 0
      %4541 = vmatpush1.bf16.msra.mxu0 %v4387
      %4542 = vmatprep.subr.bf16.mxu0 0
      %4543 = vmatpush1.bf16.msra.mxu0 %v4388
      %4544 = vmatprep.subr.bf16.mxu0 0
      %4545 = vmatpush1.bf16.msra.mxu0 %v4389
      %4546 = vmatprep.subr.bf16.mxu0 0
      %4547 = vmatpush1.bf16.msra.mxu0 %v4390
      %4548 = vmatprep.subr.bf16.mxu0 0
      %4549 = vmatpush1.bf16.msra.mxu0 %v4391
      %4550 = vmatprep.subr.bf16.mxu0 0
      %4551 = vmatpush1.bf16.msra.mxu0 %v4392
      %4552 = vmatprep.subr.bf16.mxu0 0
      %4553 = vmatpush1.bf16.msra.mxu0 %v4393
      %4554 = vmatprep.subr.bf16.mxu0 0
      %4555 = vmatpush1.bf16.msra.mxu0 %v4394
      %4556 = vmatprep.subr.bf16.mxu0 0
      %4557 = vmatpush1.bf16.msra.mxu0 0
      %4558 = vmatprep.subr.bf16.mxu0 0
      %4559 = vmatpush1.bf16.msra.mxu0 0
      %4560 = vmatprep.subr.bf16.mxu0 0
      %4561 = vmatpush1.bf16.msra.mxu0 0
      %4562 = vmatprep.subr.bf16.mxu0 0
      %4563 = vmatpush1.bf16.msra.mxu0 0
      %4564 = vmatprep.subr.bf16.mxu0 0
      %4565 = vmatpush1.bf16.msra.mxu0 0
      %4566 = vmatprep.subr.bf16.mxu0 0
      %4567 = vmatpush1.bf16.msra.mxu0 0
      %4568 = vmatprep.subr.bf16.mxu0 0
      %4569 = vmatpush1.bf16.msra.mxu0 0
      %4570 = vmatprep.subr.bf16.mxu0 0
      %4571 = vmatpush1.bf16.msra.mxu0 0
      %4572 = vmatprep.mubr.bf16.mxu0 0
      %4573 = vmatmul.mubr.bf16.gmra.mrb[0].mxu0 %v4524
      %v4574 = vpop.f32.mrb[0].mxu0
      %v4575 = vadd.f32 %v4415, %v4574
      %v4576 = vpop.f32.mrb[0].mxu0
      %v4577 = vpop.f32.mrb[0].mxu0
      %v4578 = vadd.f32 %v4420, %v4577
      %v4579 = vpop.f32.mrb[0].mxu0
      %4580 = vmatprep.mubr.bf16.mxu0 0
      %4581 = vmatmul.mubr.bf16.gmra.mrb[0].mxu0 %v4525
      %v4582 = vpop.f32.mrb[0].mxu0
      %v4583 = vadd.f32 %v4425, %v4582
      %v4584 = vpop.f32.mrb[0].mxu0
      %v4585 = vpop.f32.mrb[0].mxu0
      %v4586 = vadd.f32 %v4430, %v4585
      %v4587 = vpop.f32.mrb[0].mxu0
      %4588 = vmatprep.mubr.bf16.mxu0 0
      %4589 = vmatmul.mubr.bf16.gmra.mrb[0].mxu0 %v4526
      %v4590 = vpop.f32.mrb[0].mxu0
      %v4591 = vadd.f32 %v4435, %v4590
      %v4592 = vpop.f32.mrb[0].mxu0
      %v4593 = vpop.f32.mrb[0].mxu0
      %v4594 = vadd.f32 %v4440, %v4593
      %v4595 = vpop.f32.mrb[0].mxu0
      %4596 = vmatprep.mubr.bf16.mxu0 0
      %4597 = vmatmul.mubr.bf16.gmra.mrb[0].mxu0 %v4527
      %v4598 = vpop.f32.mrb[0].mxu0
      %v4599 = vadd.f32 %v4445, %v4598
      %v4600 = vpop.f32.mrb[0].mxu0
      %v4601 = vpop.f32.mrb[0].mxu0
      %v4602 = vadd.f32 %v4450, %v4601
      %v4603 = vpop.f32.mrb[0].mxu0
      %4604 = vmatprep.mubr.bf16.mxu0 0
      %4605 = vmatmul.mubr.bf16.gmra.mrb[0].mxu0 %v4528
      %v4606 = vpop.f32.mrb[0].mxu0
      %v4607 = vadd.f32 %v4455, %v4606
      %v4608 = vpop.f32.mrb[0].mxu0
      %v4609 = vpop.f32.mrb[0].mxu0
      %v4610 = vadd.f32 %v4460, %v4609
      %v4611 = vpop.f32.mrb[0].mxu0
      %4612 = vmatprep.mubr.bf16.mxu0 0
      %4613 = vmatmul.mubr.bf16.gmra.mrb[0].mxu0 %v4529
      %v4614 = vpop.f32.mrb[0].mxu0
      %v4615 = vadd.f32 %v4465, %v4614
      %v4616 = vpop.f32.mrb[0].mxu0
      %v4617 = vpop.f32.mrb[0].mxu0
      %v4618 = vadd.f32 %v4470, %v4617
      %v4619 = vpop.f32.mrb[0].mxu0
      %4620 = vmatprep.mubr.bf16.mxu0 0
      %4621 = vmatmul.mubr.bf16.gmra.mrb[0].mxu0 %v4530
      %v4622 = vpop.f32.mrb[0].mxu0
      %v4623 = vadd.f32 %v4475, %v4622
      %v4624 = vpop.f32.mrb[0].mxu0
      %v4625 = vpop.f32.mrb[0].mxu0
      %v4626 = vadd.f32 %v4480, %v4625
      %v4627 = vpop.f32.mrb[0].mxu0
      %4628 = vmatprep.mubr.bf16.mxu0 0
      %4629 = vmatmul.mubr.bf16.gmra.mrb[0].mxu0 %v4531
      %v4630 = vpop.f32.mrb[0].mxu0
      %v4631 = vadd.f32 %v4485, %v4630
      %v4632 = vpop.f32.mrb[0].mxu0
      %v4633 = vpop.f32.mrb[0].mxu0
      %v4634 = vadd.f32 %v4490, %v4633
      %v4635 = vpop.f32.mrb[0].mxu0
      %4636 = vdwg.mxu0
      %v4637 = vadd.f32 %v3669, %v4575
      %v4638 = vadd.f32 %v3670, %v4578
      %v4639 = vadd.f32 %v3671, %v4583
      %v4640 = vadd.f32 %v3672, %v4586
      %v4641 = vadd.f32 %v3673, %v4591
      %v4642 = vadd.f32 %v3674, %v4594
      %v4643 = vadd.f32 %v3675, %v4599
      %v4644 = vadd.f32 %v3676, %v4602
      %v4645 = vadd.f32 %v3677, %v4607
      %v4646 = vadd.f32 %v3678, %v4610
      %v4647 = vadd.f32 %v3679, %v4615
      %v4648 = vadd.f32 %v3680, %v4618
      %v4649 = vadd.f32 %v3681, %v4623
      %v4650 = vadd.f32 %v3682, %v4626
      %v4651 = vadd.f32 %v3683, %v4631
      %v4652 = vadd.f32 %v3684, %v4634
      %4653 = vst [vmem:[#allocation2] sm:$0xff] %v4637
      %4654 = vst [vmem:[#allocation2 + $0x8] sm:$0xff] %v4638
      %4655 = vst [vmem:[#allocation2 + $0x10] sm:$0xff] %v4639
      %4656 = vst [vmem:[#allocation2 + $0x18] sm:$0xff] %v4640
      %4657 = vst [vmem:[#allocation2 + $0x20] sm:$0xff] %v4641
      %4658 = vst [vmem:[#allocation2 + $0x28] sm:$0xff] %v4642
      %4659 = vst [vmem:[#allocation2 + $0x30] sm:$0xff] %v4643
      %4660 = vst [vmem:[#allocation2 + $0x38] sm:$0xff] %v4644
      %4661 = vst [vmem:[#allocation2 + $0x40] sm:$0xff] %v4645
      %4662 = vst [vmem:[#allocation2 + $0x48] sm:$0xff] %v4646
      %4663 = vst [vmem:[#allocation2 + $0x50] sm:$0xff] %v4647
      %4664 = vst [vmem:[#allocation2 + $0x58] sm:$0xff] %v4648
      %4665 = vst [vmem:[#allocation2 + $0x60] sm:$0xff] %v4649
      %4666 = vst [vmem:[#allocation2 + $0x68] sm:$0xff] %v4650
      %4667 = vst [vmem:[#allocation2 + $0x70] sm:$0xff] %v4651
      %4668 = vst [vmem:[#allocation2 + $0x78] sm:$0xff] %v4652
      %v4669 = vld [vmem:[%s7] sm:$0xf]
      %v4670 = vld [vmem:[%s7 + $0x4] sm:$0xf]
      %v4671 = vld [vmem:[%s7 + $0x8] sm:$0xf]
      %v4672 = vld [vmem:[%s7 + $0xc] sm:$0xf]
      %v4673 = vld [vmem:[%s7 + $0x10] sm:$0xf]
      %v4674 = vld [vmem:[%s7 + $0x14] sm:$0xf]
      %v4675 = vld [vmem:[%s7 + $0x18] sm:$0xf]
      %v4676 = vld [vmem:[%s7 + $0x1c] sm:$0xf]
      %v4677 = vld [vmem:[%s7 + $0x20] sm:$0xf]
      %v4678 = vld [vmem:[%s7 + $0x24] sm:$0xf]
      %v4679 = vld [vmem:[%s7 + $0x28] sm:$0xf]
      %v4680 = vld [vmem:[%s7 + $0x2c] sm:$0xf]
      %v4681 = vld [vmem:[%s7 + $0x30] sm:$0xf]
      %v4682 = vld [vmem:[%s7 + $0x34] sm:$0xf]
      %v4683 = vld [vmem:[%s7 + $0x38] sm:$0xf]
      %v4684 = vld [vmem:[%s7 + $0x3c] sm:$0xf]
      %v4685 = vld [vmem:[#allocation2] sm:$0xff]
      %v4686 = vld [vmem:[#allocation2 + $0x8] sm:$0xff]
      %v4687 = vld [vmem:[#allocation2 + $0x10] sm:$0xff]
      %v4688 = vld [vmem:[#allocation2 + $0x18] sm:$0xff]
      %v4689 = vld [vmem:[#allocation2 + $0x20] sm:$0xff]
      %v4690 = vld [vmem:[#allocation2 + $0x28] sm:$0xff]
      %v4691 = vld [vmem:[#allocation2 + $0x30] sm:$0xff]
      %v4692 = vld [vmem:[#allocation2 + $0x38] sm:$0xff]
      %v4693 = vld [vmem:[#allocation2 + $0x40] sm:$0xff]
      %v4694 = vld [vmem:[#allocation2 + $0x48] sm:$0xff]
      %v4695 = vld [vmem:[#allocation2 + $0x50] sm:$0xff]
      %v4696 = vld [vmem:[#allocation2 + $0x58] sm:$0xff]
      %v4697 = vld [vmem:[#allocation2 + $0x60] sm:$0xff]
      %v4698 = vld [vmem:[#allocation2 + $0x68] sm:$0xff]
      %v4699 = vld [vmem:[#allocation2 + $0x70] sm:$0xff]
      %v4700 = vld [vmem:[#allocation2 + $0x78] sm:$0xff]
      %v4701 = vpack.c.bf16 %v4686, %v4685
      %v4702 = vpack.c.bf16 %v4688, %v4687
      %v4703 = vpack.c.bf16 %v4690, %v4689
      %v4704 = vpack.c.bf16 %v4692, %v4691
      %v4705 = vpack.c.bf16 %v4694, %v4693
      %v4706 = vpack.c.bf16 %v4696, %v4695
      %v4707 = vpack.c.bf16 %v4698, %v4697
      %v4708 = vpack.c.bf16 %v4700, %v4699
      %v4709 = vld [vmem:[%s8] sm:$0xff]
      %v4710 = vld [vmem:[%s8 + $0x8] sm:$0xff]
      %v4711 = vld [vmem:[%s8 + $0x10] sm:$0xff]
      %v4712 = vld [vmem:[%s8 + $0x18] sm:$0xff]
      %v4713 = vld [vmem:[%s8 + $0x20] sm:$0xff]
      %v4714 = vld [vmem:[%s8 + $0x28] sm:$0xff]
      %v4715 = vld [vmem:[%s8 + $0x30] sm:$0xff]
      %v4716 = vld [vmem:[%s8 + $0x38] sm:$0xff]
      %v4717 = vld [vmem:[%s8 + $0x40] sm:$0xff]
      %v4718 = vld [vmem:[%s8 + $0x48] sm:$0xff]
      %v4719 = vld [vmem:[%s8 + $0x50] sm:$0xff]
      %v4720 = vld [vmem:[%s8 + $0x58] sm:$0xff]
      %v4721 = vld [vmem:[%s8 + $0x60] sm:$0xff]
      %v4722 = vld [vmem:[%s8 + $0x68] sm:$0xff]
      %v4723 = vld [vmem:[%s8 + $0x70] sm:$0xff]
      %v4724 = vld [vmem:[%s8 + $0x78] sm:$0xff]
      %4726 = vset.pattern.permute.xlu0 0
      %4727 = vperm.xlu0 %4726, %v4709
      %v4728 = vpop.permute.xlu0 %4727
      %4731 = vset.pattern.permute.xlu0 0
      %4732 = vperm.xlu0 %4731, %v4710
      %v4733 = vpop.permute.xlu0 %4732
      %4736 = vset.pattern.permute.xlu0 0
      %4737 = vperm.xlu0 %4736, %v4711
      %v4738 = vpop.permute.xlu0 %4737
      %4741 = vset.pattern.permute.xlu0 0
      %4742 = vperm.xlu0 %4741, %v4712
      %v4743 = vpop.permute.xlu0 %4742
      %4746 = vset.pattern.permute.xlu0 0
      %4747 = vperm.xlu0 %4746, %v4713
      %v4748 = vpop.permute.xlu0 %4747
      %4751 = vset.pattern.permute.xlu0 0
      %4752 = vperm.xlu0 %4751, %v4714
      %v4753 = vpop.permute.xlu0 %4752
      %4756 = vset.pattern.permute.xlu0 0
      %4757 = vperm.xlu0 %4756, %v4715
      %v4758 = vpop.permute.xlu0 %4757
      %4761 = vset.pattern.permute.xlu0 0
      %4762 = vperm.xlu0 %4761, %v4716
      %v4763 = vpop.permute.xlu0 %4762
      %4766 = vset.pattern.permute.xlu0 0
      %4767 = vperm.xlu0 %4766, %v4717
      %v4768 = vpop.permute.xlu0 %4767
      %4771 = vset.pattern.permute.xlu0 0
      %4772 = vperm.xlu0 %4771, %v4718
      %v4773 = vpop.permute.xlu0 %4772
      %4776 = vset.pattern.permute.xlu0 0
      %4777 = vperm.xlu0 %4776, %v4719
      %v4778 = vpop.permute.xlu0 %4777
      %4781 = vset.pattern.permute.xlu0 0
      %4782 = vperm.xlu0 %4781, %v4720
      %v4783 = vpop.permute.xlu0 %4782
      %4786 = vset.pattern.permute.xlu0 0
      %4787 = vperm.xlu0 %4786, %v4721
      %v4788 = vpop.permute.xlu0 %4787
      %4791 = vset.pattern.permute.xlu0 0
      %4792 = vperm.xlu0 %4791, %v4722
      %v4793 = vpop.permute.xlu0 %4792
      %4796 = vset.pattern.permute.xlu0 0
      %4797 = vperm.xlu0 %4796, %v4723
      %v4798 = vpop.permute.xlu0 %4797
      %4801 = vset.pattern.permute.xlu0 0
      %4802 = vperm.xlu0 %4801, %v4724
      %v4803 = vpop.permute.xlu0 %4802
      %v4821 = vunpack.c.l.b16 %v4669
      %v4822 = vunpack.c.l.b16 %v4670
      %v4823 = vunpack.c.l.b16 %v4671
      %v4824 = vunpack.c.l.b16 %v4672
      %v4825 = vunpack.c.l.b16 %v4673
      %v4826 = vunpack.c.l.b16 %v4674
      %v4827 = vunpack.c.l.b16 %v4675
      %v4828 = vunpack.c.l.b16 %v4676
      %v4829 = vunpack.c.l.b16 %v4677
      %v4830 = vunpack.c.l.b16 %v4678
      %v4831 = vunpack.c.l.b16 %v4679
      %v4832 = vunpack.c.l.b16 %v4680
      %v4833 = vunpack.c.l.b16 %v4681
      %v4834 = vunpack.c.l.b16 %v4682
      %v4835 = vunpack.c.l.b16 %v4683
      %v4836 = vunpack.c.l.b16 %v4684
      %v4837 = vpack.c.b16 %v4822, %v4821
      %v4838 = vpack.c.b16 %v4824, %v4823
      %v4839 = vpack.c.b16 %v4826, %v4825
      %v4840 = vpack.c.b16 %v4828, %v4827
      %v4841 = vpack.c.b16 %v4830, %v4829
      %v4842 = vpack.c.b16 %v4832, %v4831
      %v4843 = vpack.c.b16 %v4834, %v4833
      %v4844 = vpack.c.b16 %v4836, %v4835
      %4853 = vmatprep.subr.bf16.mxu0 0
      %4854 = vmatpush1.bf16.msra.mxu0 %v4701
      %4855 = vmatprep.subr.bf16.mxu0 0
      %4856 = vmatpush1.bf16.msra.mxu0 %v4702
      %4857 = vmatprep.subr.bf16.mxu0 0
      %4858 = vmatpush1.bf16.msra.mxu0 %v4703
      %4859 = vmatprep.subr.bf16.mxu0 0
      %4860 = vmatpush1.bf16.msra.mxu0 %v4704
      %4861 = vmatprep.subr.bf16.mxu0 0
      %4862 = vmatpush1.bf16.msra.mxu0 %v4705
      %4863 = vmatprep.subr.bf16.mxu0 0
      %4864 = vmatpush1.bf16.msra.mxu0 %v4706
      %4865 = vmatprep.subr.bf16.mxu0 0
      %4866 = vmatpush1.bf16.msra.mxu0 %v4707
      %4867 = vmatprep.subr.bf16.mxu0 0
      %4868 = vmatpush1.bf16.msra.mxu0 %v4708
      %4869 = vmatprep.subr.bf16.mxu0 0
      %4870 = vmatpush1.bf16.msra.mxu0 0
      %4871 = vmatprep.subr.bf16.mxu0 0
      %4872 = vmatpush1.bf16.msra.mxu0 0
      %4873 = vmatprep.subr.bf16.mxu0 0
      %4874 = vmatpush1.bf16.msra.mxu0 0
      %4875 = vmatprep.subr.bf16.mxu0 0
      %4876 = vmatpush1.bf16.msra.mxu0 0
      %4877 = vmatprep.subr.bf16.mxu0 0
      %4878 = vmatpush1.bf16.msra.mxu0 0
      %4879 = vmatprep.subr.bf16.mxu0 0
      %4880 = vmatpush1.bf16.msra.mxu0 0
      %4881 = vmatprep.subr.bf16.mxu0 0
      %4882 = vmatpush1.bf16.msra.mxu0 0
      %4883 = vmatprep.subr.bf16.mxu0 0
      %4884 = vmatpush1.bf16.msra.mxu0 0
      %4885 = vmatprep.mubr.bf16.mxu0 0
      %4886 = vmatmul.mubr.bf16.gmra.mrb[0].mxu0 %v4837
      %v4887 = vpop.f32.mrb[0].mxu0
      %v4888 = vadd.f32 %v4728, %v4887
      %v4889 = vpop.f32.mrb[0].mxu0
      %v4890 = vpop.f32.mrb[0].mxu0
      %v4891 = vadd.f32 %v4733, %v4890
      %v4892 = vpop.f32.mrb[0].mxu0
      %4893 = vmatprep.mubr.bf16.mxu0 0
      %4894 = vmatmul.mubr.bf16.gmra.mrb[0].mxu0 %v4838
      %v4895 = vpop.f32.mrb[0].mxu0
      %v4896 = vadd.f32 %v4738, %v4895
      %v4897 = vpop.f32.mrb[0].mxu0
      %v4898 = vpop.f32.mrb[0].mxu0
      %v4899 = vadd.f32 %v4743, %v4898
      %v4900 = vpop.f32.mrb[0].mxu0
      %4901 = vmatprep.mubr.bf16.mxu0 0
      %4902 = vmatmul.mubr.bf16.gmra.mrb[0].mxu0 %v4839
      %v4903 = vpop.f32.mrb[0].mxu0
      %v4904 = vadd.f32 %v4748, %v4903
      %v4905 = vpop.f32.mrb[0].mxu0
      %v4906 = vpop.f32.mrb[0].mxu0
      %v4907 = vadd.f32 %v4753, %v4906
      %v4908 = vpop.f32.mrb[0].mxu0
      %4909 = vmatprep.mubr.bf16.mxu0 0
      %4910 = vmatmul.mubr.bf16.gmra.mrb[0].mxu0 %v4840
      %v4911 = vpop.f32.mrb[0].mxu0
      %v4912 = vadd.f32 %v4758, %v4911
      %v4913 = vpop.f32.mrb[0].mxu0
      %v4914 = vpop.f32.mrb[0].mxu0
      %v4915 = vadd.f32 %v4763, %v4914
      %v4916 = vpop.f32.mrb[0].mxu0
      %4917 = vmatprep.mubr.bf16.mxu0 0
      %4918 = vmatmul.mubr.bf16.gmra.mrb[0].mxu0 %v4841
      %v4919 = vpop.f32.mrb[0].mxu0
      %v4920 = vadd.f32 %v4768, %v4919
      %v4921 = vpop.f32.mrb[0].mxu0
      %v4922 = vpop.f32.mrb[0].mxu0
      %v4923 = vadd.f32 %v4773, %v4922
      %v4924 = vpop.f32.mrb[0].mxu0
      %4925 = vmatprep.mubr.bf16.mxu0 0
      %4926 = vmatmul.mubr.bf16.gmra.mrb[0].mxu0 %v4842
      %v4927 = vpop.f32.mrb[0].mxu0
      %v4928 = vadd.f32 %v4778, %v4927
      %v4929 = vpop.f32.mrb[0].mxu0
      %v4930 = vpop.f32.mrb[0].mxu0
      %v4931 = vadd.f32 %v4783, %v4930
      %v4932 = vpop.f32.mrb[0].mxu0
      %4933 = vmatprep.mubr.bf16.mxu0 0
      %4934 = vmatmul.mubr.bf16.gmra.mrb[0].mxu0 %v4843
      %v4935 = vpop.f32.mrb[0].mxu0
      %v4936 = vadd.f32 %v4788, %v4935
      %v4937 = vpop.f32.mrb[0].mxu0
      %v4938 = vpop.f32.mrb[0].mxu0
      %v4939 = vadd.f32 %v4793, %v4938
      %v4940 = vpop.f32.mrb[0].mxu0
      %4941 = vmatprep.mubr.bf16.mxu0 0
      %4942 = vmatmul.mubr.bf16.gmra.mrb[0].mxu0 %v4844
      %v4943 = vpop.f32.mrb[0].mxu0
      %v4944 = vadd.f32 %v4798, %v4943
      %v4945 = vpop.f32.mrb[0].mxu0
      %v4946 = vpop.f32.mrb[0].mxu0
      %v4947 = vadd.f32 %v4803, %v4946
      %v4948 = vpop.f32.mrb[0].mxu0
      %4949 = vdwg.mxu0
      %4950 = vst [vmem:[%s332] sm:$0xff] %v4888
      %4951 = vst [vmem:[%s332 + $0x8] sm:$0xff] %v4891
      %4952 = vst [vmem:[%s332 + $0x10] sm:$0xff] %v4896
      %4953 = vst [vmem:[%s332 + $0x18] sm:$0xff] %v4899
      %4954 = vst [vmem:[%s332 + $0x20] sm:$0xff] %v4904
      %4955 = vst [vmem:[%s332 + $0x28] sm:$0xff] %v4907
      %4956 = vst [vmem:[%s332 + $0x30] sm:$0xff] %v4912
      %4957 = vst [vmem:[%s332 + $0x38] sm:$0xff] %v4915
      %4958 = vst [vmem:[%s332 + $0x40] sm:$0xff] %v4920
      %4959 = vst [vmem:[%s332 + $0x48] sm:$0xff] %v4923
      %4960 = vst [vmem:[%s332 + $0x50] sm:$0xff] %v4928
      %4961 = vst [vmem:[%s332 + $0x58] sm:$0xff] %v4931
      %4962 = vst [vmem:[%s332 + $0x60] sm:$0xff] %v4936
      %4963 = vst [vmem:[%s332 + $0x68] sm:$0xff] %v4939
      %4964 = vst [vmem:[%s332 + $0x70] sm:$0xff] %v4944
      %4965 = vst [vmem:[%s332 + $0x78] sm:$0xff] %v4947
      %p4966 = scmp.lt.s32.totalorder %s20, 1
      %s4967 = scalar_select %p4966, %s20, 1
      %s4968 = smul.addr %s4967, 16
      %s4969 = smul.addr %s4968, 8
      %s4970 = scalar_lea.vmem %s9, %s4969
      // Predicated region
      $region57: #{single_stage_forward.1} parent=55 // pred_check
        %p4971 = pneg %p232
      $region58: #{single_stage_forward.1} parent=55 // pred_check_branch
        %4973 = sbr.rel (%p4971) target = $region60
      $region59: #{single_stage_forward.1} parent=55 // pred_region
        _
      $region60: #{single_stage_forward.1} parent=55 // pred_fallthru
        _
    $region56: #{single_stage_forward.1} parent=5 // pred_fallthru
      _
    %p4974 = scmp.le.s32.totalorder 2, %s15
    // Predicated region
    $region61: #{single_stage_forward.1} parent=5 // pred_check
      %p4975 = pneg %p4974
    $region62: #{single_stage_forward.1} parent=5 // pred_check_branch
      %4977 = sbr.rel (%p4975) target = $region64
    $region63: #{single_stage_forward.1} parent=5 // pred_region
      %s4978 = ssub.s32 %s15, 2
      // Predicated region
      $region65: #{single_stage_forward.1} parent=63 // pred_check
        %p4979 = pneg %p238
      $region66: #{single_stage_forward.1} parent=63 // pred_check_branch
        %4981 = sbr.rel (%p4979) target = $region68
      $region67: #{single_stage_forward.1} parent=63 // pred_region
        %p4982 = scmp.lt.s32.totalorder %s21, 1
        %s4983 = scalar_select %p4982, %s21, 1
        %s4984 = smul.addr %s4983, 16
        %s4985 = smul.addr %s4984, 8
        %s4986 = scalar_lea.vmem %s9, %s4985
      $region68: #{single_stage_forward.1} parent=63 // pred_fallthru
        _
    $region64: #{single_stage_forward.1} parent=5 // pred_fallthru
      _
  $region6: #{single_stage_forward.1} parent=0 // loop_footer
    %s19 = sadd.s32 1, %s15
  $region7: #{single_stage_forward.1} parent=0 // loop_footer_branch
    %14 = sbr.rel target = $region3
  $region8: #{single_stage_forward.1} parent=0 // loop_exit
    _

</llo_original>
